<compile_context>
chip_gen: v6e
topology: v6e:2x2x1
jax: 0.10.0
libtpu: 0.0.40
codegen_flags: <defaults>
</compile_context>

<pallas_src>
import functools

import jax
import jax.numpy as jnp
import numpy as np
from jax import lax
from jax.experimental import pallas as pl
from jax.experimental.pallas import tpu as pltpu

START_TAG = '<START>'
STOP_TAG = '<STOP>'
tag_to_ix = {'O': 0, 'B-LOC': 1, 'I-LOC': 2, 'B-ORG': 3, 'I-ORG': 4,
             'B-PER': 5, 'I-PER': 6, START_TAG: 7, STOP_TAG: 8, '<PAD>': 9}


# ---------------------------------------------------------------------------
# Slab layout (8-row aligned sections so in-kernel slices never straddle tiles)
# ---------------------------------------------------------------------------
def _slab_layout(E, H, NT):
    up8 = lambda x: ((x + 7) // 8) * 8
    r_wih = 0                       # (E, 8H)   gate-interleaved input weights (fwd|bwd per gate)
    r_whh = up8(r_wih + E)          # (2H, 8H)  block-diagonal recurrent weights
    r_b = up8(r_whh + 2 * H)        # (1, 8H)   folded gate biases
    r_wt = up8(r_b + 1)             # (2H, NT)  hidden2tag weight (w_tag.T), lane-padded
    r_bt = up8(r_wt + 2 * H)        # (1, NT)   hidden2tag bias, lane-padded
    r_tr = up8(r_bt + 1)            # (NT, NT)  transitions[next, prev], lane-padded
    rows = up8(r_tr + NT)
    return r_wih, r_whh, r_b, r_wt, r_bt, r_tr, rows


def pack_params(params, hidden_dim, tagset_size):
    """One-time host-side packing of all weights into a single lane-dense f32 slab."""
    H = hidden_dim // 2
    E = params['w_ih_f'].shape[1]
    NT = tagset_size
    G = 8 * H
    W = max(G, 128)
    r_wih, r_whh, r_b, r_wt, r_bt, r_tr, rows = _slab_layout(E, H, NT)

    def interleave(f_t, b_t):   # (X,4H),(X,4H) -> (X,8H), per-gate [fwd | bwd] blocks
        parts = []
        for g in range(4):      # PyTorch gate order i, f, g, o
            parts += [f_t[:, g * H:(g + 1) * H], b_t[:, g * H:(g + 1) * H]]
        return jnp.concatenate(parts, axis=1)

    wih_cat = interleave(params['w_ih_f'].T, params['w_ih_b'].T)                 # (E, G)
    b_cat = interleave((params['b_ih_f'] + params['b_hh_f'])[None, :],
                       (params['b_ih_b'] + params['b_hh_b'])[None, :])            # (1, G)

    whh_f_t, whh_b_t = params['w_hh_f'].T, params['w_hh_b'].T                     # (H, 4H)
    whh_bd = jnp.zeros((2 * H, G), jnp.float32)
    for g in range(4):
        whh_bd = whh_bd.at[0:H, (2 * g) * H:(2 * g + 1) * H].set(
            whh_f_t[:, g * H:(g + 1) * H])
        whh_bd = whh_bd.at[H:2 * H, (2 * g + 1) * H:(2 * g + 2) * H].set(
            whh_b_t[:, g * H:(g + 1) * H])

    slab = jnp.zeros((rows, W), jnp.float32)
    slab = slab.at[r_wih:r_wih + E, 0:G].set(wih_cat)
    slab = slab.at[r_whh:r_whh + 2 * H, 0:G].set(whh_bd)
    slab = slab.at[r_b:r_b + 1, 0:G].set(b_cat)
    slab = slab.at[r_wt:r_wt + 2 * H, 0:NT].set(params['w_tag'].T)
    slab = slab.at[r_bt:r_bt + 1, 0:NT].set(params['b_tag'][None, :])
    slab = slab.at[r_tr:r_tr + NT, 0:NT].set(params['transitions'])
    return slab


# ---------------------------------------------------------------------------
# Fused kernel: embedding gather + BiLSTM + hidden2tag + Viterbi decode
# ---------------------------------------------------------------------------
def _bilstm_crf_kernel(slab_ref,               # (R, W)    packed weights
                       emb_ref,                # (V, E)    embedding table
                       sent_ref,               # (T, 1)    int32 token ids
                       hc0_ref,                # (2, 2H)   row0=[h0_f|h0_b], row1=[c0_f|c0_b]
                       out_ref,                # (T+1, W)  rows 0..T-1 feats; row T = [score|path|0..]
                       *, hidden_half, tagset_size, start_idx, stop_idx):
    H = hidden_half
    NT = tagset_size
    T = sent_ref.shape[0]
    V, E = emb_ref.shape
    G = 8 * H
    W = out_ref.shape[1]
    r_wih, r_whh, r_b, r_wt, r_bt, r_tr, _ = _slab_layout(E, H, NT)

    # ---------------- embedding gather (one-hot matmul, no dynamic indexing) ----------------
    sent = sent_ref[...]                                                     # (T, 1) int32
    onehot = (lax.broadcasted_iota(jnp.int32, (T, V), 1) == sent).astype(jnp.float32)
    embeds = jnp.dot(onehot, emb_ref[...], preferred_element_type=jnp.float32)   # (T, E)

    # ---------------- hoisted input projection for both directions ----------------
    # lane layout per gate block of 2H: [fwd | bwd]; gate order i, f, g, o.
    xproj = (jnp.dot(embeds, slab_ref[r_wih:r_wih + E, 0:G],
                     preferred_element_type=jnp.float32)
             + slab_ref[r_b:r_b + 1, 0:G])                                   # (T, G)

    whh_bd = slab_ref[r_whh:r_whh + 2 * H, 0:G]                              # (2H, G)

    lane_g = lax.broadcasted_iota(jnp.int32, (1, G), 1)
    fwd_mask = (lane_g % (2 * H)) < H                                        # fwd half of each gate block

    h_cat = hc0_ref[0:1, :]                                                  # (1, 2H) = [h_f | h_b]
    c_cat = hc0_ref[1:2, :]                                                  # (1, 2H) = [c_f | c_b]

    # Fully unrolled fused fwd/bwd recurrence: one block-diag MXU push + 2 EUP pushes / step.
    hf_rows = []
    hb_rows = [None] * T
    for s in range(T):
        sb = T - 1 - s
        pre = jnp.where(fwd_mask, xproj[s:s + 1, :], xproj[sb:sb + 1, :])    # (1, G)
        gates = pre + jnp.dot(h_cat, whh_bd, preferred_element_type=jnp.float32)
        sig = jax.nn.sigmoid(gates)                                          # full 128-lane vreg
        tg = jnp.tanh(gates)                                                 # full 128-lane vreg
        i_cat = sig[:, 0:2 * H]
        f_cat = sig[:, 2 * H:4 * H]
        g_cat = tg[:, 4 * H:6 * H]
        o_cat = sig[:, 6 * H:8 * H]
        c_cat = f_cat * c_cat + i_cat * g_cat                                # (1, 2H)
        h_cat = o_cat * jnp.tanh(c_cat)                                      # (1, 2H)
        hf_rows.append(h_cat[:, 0:H])                                        # h_f(time s)
        hb_rows[sb] = h_cat[:, H:2 * H]                                      # h_b(time sb)

    # ---------------- hidden2tag (in-vreg assembly, lane-dense result) ----------------
    hf_mat = jnp.concatenate(hf_rows, axis=0)                                # (T, H)
    hb_mat = jnp.concatenate(hb_rows, axis=0)                                # (T, H)
    wt = slab_ref[r_wt:r_wt + 2 * H, :]                                      # (2H, W) lane-padded
    bt = slab_ref[r_bt:r_bt + 1, :]                                          # (1, W)  lane-padded
    feats_w = (jnp.dot(hf_mat, wt[0:H, :], preferred_element_type=jnp.float32)
               + jnp.dot(hb_mat, wt[H:2 * H, :], preferred_element_type=jnp.float32)
               + bt)                                                         # (T, W); lanes >= NT are 0
    out_ref[0:T, :] = feats_w                                                # unmasked lane-dense store

    # ---------------- Viterbi decode (fully unrolled, backpointers stay in vregs) ----------------
    # TODO(synk): fine for T=8; for T beyond ~32 store bptrs to a lane-dense VMEM scratch
    # and chunk the unroll to avoid exhausting the 64-vreg file.
    feats = feats_w[:, 0:NT]
    trans = slab_ref[r_tr:r_tr + NT, 0:NT]                                   # trans[next, prev]
    row_iota = lax.broadcasted_iota(jnp.int32, (1, NT), 1)
    col_iota = lax.broadcasted_iota(jnp.int32, (NT, NT), 1)

    prev = jnp.where(row_iota == start_idx, jnp.float32(0.0), jnp.float32(-10000.0))
    bptrs = []
    for t in range(T):
        M = prev + trans                                                     # (NT, NT)
        mx = jnp.max(M, axis=1)                                              # one XLU reduce, reused
        bptr = jnp.min(jnp.where(M == mx[:, None], col_iota, NT), axis=1)    # first-argmax
        bptrs.append(bptr[None, :].astype(jnp.int32))                        # (1, NT)
        prev = mx[None, :] + feats[t:t + 1, :]

    terminal = prev + trans[stop_idx:stop_idx + 1, :]                        # (1, NT)
    tmax = jnp.max(terminal, axis=1, keepdims=True)                          # (1, 1) path score
    best = jnp.min(jnp.where(terminal == tmax, row_iota, NT),
                   axis=1, keepdims=True).astype(jnp.int32)                  # (1, 1)

    # Pack score + decoded path into one lane-dense (1, W) row: lane 0 = score, lane t+1 = path[t].
    lane_w = lax.broadcasted_iota(jnp.int32, (1, W), 1)
    tail = jnp.where(lane_w == 0, tmax, jnp.zeros((1, W), jnp.float32))
    tail = jnp.where(lane_w == T, best.astype(jnp.float32), tail)            # path[T-1]
    cur = best
    for t in range(T - 1, 0, -1):
        cur = jnp.sum(jnp.where(row_iota == cur, bptrs[t], 0),
                      axis=1, keepdims=True)                                 # path[t-1], (1, 1) int32
        tail = jnp.where(lane_w == t, cur.astype(jnp.float32), tail)
    out_ref[T:T + 1, :] = tail
    # TODO(synk): the PyTorch `assert start == tag_to_ix[START_TAG]` is not emitted in-kernel;
    # it is verified by the host-side reference in __main__.


# ---------------------------------------------------------------------------
# Wrapper
# ---------------------------------------------------------------------------
def _full_spec(shape):
    return pl.BlockSpec(shape, lambda i: (0,) * len(shape))


def bilstm_crf_forward(slab, emb_table, sentence, h0, c0, *, hidden_dim, tagset_size):
    # TODO(synk): for v7x dual-TensorCore utilisation, add a leading batch-of-sentences grid
    # axis marked pltpu.PARALLEL; kept single-sentence here to match the module's forward().
    sentence = sentence.reshape(-1).astype(jnp.int32)
    T = sentence.shape[0]
    H = hidden_dim // 2
    V, E = emb_table.shape
    R, W = slab.shape
    assert 8 * H <= W and T + 1 <= W

    sent_col = sentence.reshape(T, 1)
    hc0 = jnp.concatenate([h0.reshape(1, 2 * H), c0.reshape(1, 2 * H)], axis=0)   # (2, 2H)

    kernel = functools.partial(_bilstm_crf_kernel, hidden_half=H, tagset_size=tagset_size,
                               start_idx=tag_to_ix[START_TAG], stop_idx=tag_to_ix[STOP_TAG])

    out = pl.pallas_call(
        kernel,
        out_shape=jax.ShapeDtypeStruct((T + 1, W), jnp.float32),
        grid=(1,),
        in_specs=[_full_spec((R, W)),
                  _full_spec((V, E)),
                  _full_spec((T, 1)),
                  _full_spec((2, 2 * H))],
        out_specs=_full_spec((T + 1, W)),
        compiler_params=pltpu.CompilerParams(dimension_semantics=("arbitrary",)),
    )(slab, emb_table, sent_col, hc0)

    feats = out[0:T, 0:tagset_size]
    score = out[T, 0]
    path = out[T, 1:T + 1].astype(jnp.int32)
    return score, path, feats


# ---------------------------------------------------------------------------
# Deterministic parameter init (shapes from BiLSTM_CRF.__init__)
# ---------------------------------------------------------------------------
def init_params(key, vocab_size, embedding_dim, hidden_dim, tagset_size):
    H = hidden_dim // 2
    ks = jax.random.split(key, 12)

    def n(k, shape, scale=0.1):
        return jax.random.normal(k, shape, jnp.float32) * scale

    params = dict(
        emb=n(ks[0], (vocab_size, embedding_dim), 1.0),
        w_ih_f=n(ks[1], (4 * H, embedding_dim)),
        w_hh_f=n(ks[2], (4 * H, H)),
        b_ih_f=n(ks[3], (4 * H,)),
        b_hh_f=n(ks[4], (4 * H,)),
        w_ih_b=n(ks[5], (4 * H, embedding_dim)),
        w_hh_b=n(ks[6], (4 * H, H)),
        b_ih_b=n(ks[7], (4 * H,)),
        b_hh_b=n(ks[8], (4 * H,)),
        w_tag=n(ks[9], (tagset_size, hidden_dim)),
        b_tag=n(ks[10], (tagset_size,)),
    )
    trans = jax.random.normal(ks[11], (tagset_size, tagset_size), jnp.float32)
    trans = trans.at[tag_to_ix[START_TAG], :].set(-10000.0)
    trans = trans.at[:, tag_to_ix[STOP_TAG]].set(-10000.0)
    params['transitions'] = trans
    return params


# ---------------------------------------------------------------------------
# Pure-numpy reference (mirrors the PyTorch forward) for verification
# ---------------------------------------------------------------------------
def _sigmoid(z):
    return 1.0 / (1.0 + np.exp(-z))


def reference_forward(params, sentence, hidden_dim, tagset_size, h0, c0):
    p = {k: np.asarray(v, np.float64) for k, v in params.items()}
    sentence = np.asarray(sentence).reshape(-1)
    T = sentence.shape[0]
    H = hidden_dim // 2
    x = p['emb'][sentence]
    h0 = np.asarray(h0, np.float64)
    c0 = np.asarray(c0, np.float64)

    def run_dir(wih, whh, b, h, c, order):
        out = np.zeros((T, H))
        for t in order:
            g = wih @ x[t] + whh @ h + b
            i = _sigmoid(g[:H])
            f = _sigmoid(g[H:2 * H])
            gg = np.tanh(g[2 * H:3 * H])
            o = _sigmoid(g[3 * H:4 * H])
            c = f * c + i * gg
            h = o * np.tanh(c)
            out[t] = h
        return out

    hf = run_dir(p['w_ih_f'], p['w_hh_f'], p['b_ih_f'] + p['b_hh_f'],
                 h0[0], c0[0], range(T))
    hb = run_dir(p['w_ih_b'], p['w_hh_b'], p['b_ih_b'] + p['b_hh_b'],
                 h0[1], c0[1], range(T - 1, -1, -1))
    lstm_out = np.concatenate([hf, hb], axis=1)
    feats = lstm_out @ p['w_tag'].T + p['b_tag']

    trans = p['transitions']
    start, stop = tag_to_ix[START_TAG], tag_to_ix[STOP_TAG]
    prev = np.full((tagset_size,), -10000.0)
    prev[start] = 0.0
    bps = []
    for t in range(T):
        M = prev[None, :] + trans
        bps.append(M.argmax(axis=1))
        prev = M.max(axis=1) + feats[t]
    terminal = prev + trans[stop]
    best = int(terminal.argmax())
    score = terminal[best]
    path = [best]
    for bp in reversed(bps):
        best = int(bp[best])
        path.append(best)
    assert path.pop() == start
    path.reverse()
    return feats, float(score), path


# ---------------------------------------------------------------------------
if __name__ == "__main__":
    vocab_size, embedding_dim, hidden_dim = 50, 16, 32
    tagset_size = len(tag_to_ix)
    T = 8

    key = jax.random.PRNGKey(0)
    k_param, k_sent, k_h, k_c = jax.random.split(key, 4)
    params = init_params(k_param, vocab_size, embedding_dim, hidden_dim, tagset_size)

    # One-time weight packing (amortized over all forward calls).
    slab = pack_params(params, hidden_dim, tagset_size)

    sentence = jax.random.randint(k_sent, (T,), 0, vocab_size, dtype=jnp.int32)
    H = hidden_dim // 2
    # self.init_hidden(): random (2, 1, H) h0/c0 — made deterministic here (batch dim squeezed).
    h0 = jax.random.normal(k_h, (2, H), jnp.float32)
    c0 = jax.random.normal(k_c, (2, H), jnp.float32)

    fwd = jax.jit(bilstm_crf_forward, static_argnames=("hidden_dim", "tagset_size"))
    score, path, feats = fwd(slab, params['emb'], sentence, h0, c0,
                             hidden_dim=hidden_dim, tagset_size=tagset_size)
    jax.block_until_ready((score, path, feats))

    ref_feats, ref_score, ref_path = reference_forward(
        params, sentence, hidden_dim, tagset_size, h0, c0)

    assert np.allclose(np.asarray(feats), ref_feats, atol=2e-3, rtol=2e-3), "feats mismatch"
    assert abs(float(score) - ref_score) < 2e-3, "path score mismatch"
    assert list(np.asarray(path)) == ref_path, "viterbi path mismatch"

    print("KERNEL_OK")
</pallas_src>

<mosaic_0001>
module attributes {stable_mosaic.version = 11 : i64} {
  func.func @_bilstm_crf_kernel(%arg0: i32, %arg1: memref<112x128xf32, #tpu.memory_space<vmem>>, %arg2: memref<50x16xf32, #tpu.memory_space<vmem>>, %arg3: memref<8x1xi32, #tpu.memory_space<vmem>>, %arg4: memref<2x32xf32, #tpu.memory_space<vmem>>, %arg5: memref<9x128xf32, #tpu.memory_space<vmem>>) attributes {dimension_semantics = [#tpu.dimension_semantics<arbitrary>], iteration_bounds = array<i64: 1>, scalar_prefetch = 0 : i64, scratch_operands = 0 : i64, tpu.core_type = #tpu.core_type<tc>, window_params = [{pipeline_mode = #tpu.pipeline_mode<synchronous>, transform_indices = @transform_0, window_bounds = array<i64: 112, 128>}, {pipeline_mode = #tpu.pipeline_mode<synchronous>, transform_indices = @transform_1, window_bounds = array<i64: 50, 16>}, {pipeline_mode = #tpu.pipeline_mode<synchronous>, transform_indices = @transform_2, window_bounds = array<i64: 8, 1>}, {pipeline_mode = #tpu.pipeline_mode<synchronous>, transform_indices = @transform_3, window_bounds = array<i64: 2, 32>}, {pipeline_mode = #tpu.pipeline_mode<synchronous>, transform_indices = @transform_4, window_bounds = array<i64: 9, 128>}]} {
    %c0 = arith.constant 0 : index
    %c0_0 = arith.constant 0 : index
    %0 = vector.load %arg3[%c0, %c0_0] : memref<8x1xi32, #tpu.memory_space<vmem>>, vector<8x1xi32>
    %1 = tpu.iota {dimensions = array<i32: 1>} : vector<8x50xi32>
    %2 = vector.broadcast %0 : vector<8x1xi32> to vector<8x50xi32>
    %3 = arith.cmpi eq, %1, %2 : vector<8x50xi32>
    %4 = arith.extui %3 : vector<8x50xi1> to vector<8x50xi32>
    %5 = arith.sitofp %4 : vector<8x50xi32> to vector<8x50xf32>
    %c0_1 = arith.constant 0 : index
    %c0_2 = arith.constant 0 : index
    %6 = vector.load %arg2[%c0_1, %c0_2] : memref<50x16xf32, #tpu.memory_space<vmem>>, vector<50x16xf32>
    %cst = arith.constant dense<0.000000e+00> : vector<8x16xf32>
    %7 = tpu.matmul %5, %6, %cst {dimension_numbers = #tpu.dot_dimension_numbers<[1], [0], [0], [1], [0, 0, 1, 1], [], []>} : vector<8x50xf32>, vector<50x16xf32>, vector<8x16xf32> -> vector<8x16xf32>
    %c0_3 = arith.constant 0 : index
    %c0_4 = arith.constant 0 : index
    %8 = vector.load %arg1[%c0_3, %c0_4] : memref<112x128xf32, #tpu.memory_space<vmem>>, vector<16x128xf32>
    %cst_5 = arith.constant dense<0.000000e+00> : vector<8x128xf32>
    %9 = tpu.matmul %7, %8, %cst_5 {dimension_numbers = #tpu.dot_dimension_numbers<[1], [0], [0], [1], [0, 0, 1, 1], [], []>} : vector<8x16xf32>, vector<16x128xf32>, vector<8x128xf32> -> vector<8x128xf32>
    %c48 = arith.constant 48 : index
    %c0_6 = arith.constant 0 : index
    %10 = vector.load %arg1[%c48, %c0_6] : memref<112x128xf32, #tpu.memory_space<vmem>>, vector<1x128xf32>
    %11 = vector.broadcast %10 : vector<1x128xf32> to vector<8x128xf32>
    %12 = arith.addf %9, %11 : vector<8x128xf32>
    %c16 = arith.constant 16 : index
    %c0_7 = arith.constant 0 : index
    %13 = vector.load %arg1[%c16, %c0_7] : memref<112x128xf32, #tpu.memory_space<vmem>>, vector<32x128xf32>
    %14 = tpu.iota {dimensions = array<i32: 1>} : vector<1x128xi32>
    %c32_i32 = arith.constant 32 : i32
    %c0_i32 = arith.constant 0 : i32
    %15 = arith.cmpi eq, %c32_i32, %c0_i32 : i32
    %c1_i32 = arith.constant 1 : i32
    %16 = arith.select %15, %c1_i32, %c32_i32 : i32
    %17 = vector.broadcast %16 : i32 to vector<1x128xi32>
    %18 = arith.remsi %14, %17 : vector<1x128xi32>
    %c0_i32_8 = arith.constant 0 : i32
    %19 = vector.broadcast %c0_i32_8 : i32 to vector<1x128xi32>
    %20 = arith.cmpi ne, %18, %19 : vector<1x128xi32>
    %c0_i32_9 = arith.constant 0 : i32
    %21 = vector.broadcast %c0_i32_9 : i32 to vector<1x128xi32>
    %22 = arith.cmpi slt, %18, %21 : vector<1x128xi32>
    %c0_i32_10 = arith.constant 0 : i32
    %23 = arith.cmpi slt, %16, %c0_i32_10 : i32
    %24 = vector.broadcast %23 : i1 to vector<1x128xi1>
    %25 = vector.broadcast %24 : vector<1x128xi1> to vector<1x128xi1>
    %26 = arith.xori %22, %25 : vector<1x128xi1>
    %27 = arith.andi %26, %20 : vector<1x128xi1>
    %28 = vector.broadcast %16 : i32 to vector<1x128xi32>
    %29 = arith.addi %18, %28 : vector<1x128xi32>
    %30 = arith.select %27, %29, %18 : vector<1x128xi1>, vector<1x128xi32>
    %c16_i32 = arith.constant 16 : i32
    %31 = vector.broadcast %c16_i32 : i32 to vector<1x128xi32>
    %32 = arith.cmpi slt, %30, %31 : vector<1x128xi32>
    %c0_11 = arith.constant 0 : index
    %c0_12 = arith.constant 0 : index
    %33 = vector.load %arg4[%c0_11, %c0_12] : memref<2x32xf32, #tpu.memory_space<vmem>>, vector<1x32xf32>
    %c1 = arith.constant 1 : index
    %c0_13 = arith.constant 0 : index
    %34 = vector.load %arg4[%c1, %c0_13] : memref<2x32xf32, #tpu.memory_space<vmem>>, vector<1x32xf32>
    %35 = vector.extract_strided_slice %12 {offsets = [0, 0], sizes = [1, 128], strides = [1, 1]} : vector<8x128xf32> to vector<1x128xf32>
    %36 = vector.extract_strided_slice %12 {offsets = [7, 0], sizes = [1, 128], strides = [1, 1]} : vector<8x128xf32> to vector<1x128xf32>
    %37 = arith.select %32, %35, %36 : vector<1x128xi1>, vector<1x128xf32>
    %cst_14 = arith.constant dense<0.000000e+00> : vector<1x128xf32>
    %38 = tpu.matmul %33, %13, %cst_14 {dimension_numbers = #tpu.dot_dimension_numbers<[1], [0], [0], [1], [0, 0, 1, 1], [], []>} : vector<1x32xf32>, vector<32x128xf32>, vector<1x128xf32> -> vector<1x128xf32>
    %39 = arith.addf %37, %38 : vector<1x128xf32>
    %40 = arith.negf %39 : vector<1x128xf32>
    %41 = math.exp %40 : vector<1x128xf32>
    %cst_15 = arith.constant 1.000000e+00 : f32
    %42 = vector.broadcast %cst_15 : f32 to vector<1x128xf32>
    %43 = arith.addf %42, %41 : vector<1x128xf32>
    %44 = arith.divf %42, %43 : vector<1x128xf32>
    %45 = math.tanh %39 : vector<1x128xf32>
    %46 = vector.extract_strided_slice %44 {offsets = [0, 0], sizes = [1, 32], strides = [1, 1]} : vector<1x128xf32> to vector<1x32xf32>
    %47 = vector.extract_strided_slice %44 {offsets = [0, 32], sizes = [1, 32], strides = [1, 1]} : vector<1x128xf32> to vector<1x32xf32>
    %48 = vector.extract_strided_slice %45 {offsets = [0, 64], sizes = [1, 32], strides = [1, 1]} : vector<1x128xf32> to vector<1x32xf32>
    %49 = vector.extract_strided_slice %44 {offsets = [0, 96], sizes = [1, 32], strides = [1, 1]} : vector<1x128xf32> to vector<1x32xf32>
    %50 = arith.mulf %47, %34 : vector<1x32xf32>
    %51 = arith.mulf %46, %48 : vector<1x32xf32>
    %52 = arith.addf %50, %51 : vector<1x32xf32>
    %53 = math.tanh %52 : vector<1x32xf32>
    %54 = arith.mulf %49, %53 : vector<1x32xf32>
    %55 = vector.extract_strided_slice %54 {offsets = [0, 0], sizes = [1, 16], strides = [1, 1]} : vector<1x32xf32> to vector<1x16xf32>
    %56 = vector.extract_strided_slice %54 {offsets = [0, 16], sizes = [1, 16], strides = [1, 1]} : vector<1x32xf32> to vector<1x16xf32>
    %57 = vector.extract_strided_slice %12 {offsets = [1, 0], sizes = [1, 128], strides = [1, 1]} : vector<8x128xf32> to vector<1x128xf32>
    %58 = vector.extract_strided_slice %12 {offsets = [6, 0], sizes = [1, 128], strides = [1, 1]} : vector<8x128xf32> to vector<1x128xf32>
    %59 = arith.select %32, %57, %58 : vector<1x128xi1>, vector<1x128xf32>
    %cst_16 = arith.constant dense<0.000000e+00> : vector<1x128xf32>
    %60 = tpu.matmul %54, %13, %cst_16 {dimension_numbers = #tpu.dot_dimension_numbers<[1], [0], [0], [1], [0, 0, 1, 1], [], []>} : vector<1x32xf32>, vector<32x128xf32>, vector<1x128xf32> -> vector<1x128xf32>
    %61 = arith.addf %59, %60 : vector<1x128xf32>
    %62 = arith.negf %61 : vector<1x128xf32>
    %63 = math.exp %62 : vector<1x128xf32>
    %cst_17 = arith.constant 1.000000e+00 : f32
    %64 = vector.broadcast %cst_17 : f32 to vector<1x128xf32>
    %65 = arith.addf %64, %63 : vector<1x128xf32>
    %66 = arith.divf %64, %65 : vector<1x128xf32>
    %67 = math.tanh %61 : vector<1x128xf32>
    %68 = vector.extract_strided_slice %66 {offsets = [0, 0], sizes = [1, 32], strides = [1, 1]} : vector<1x128xf32> to vector<1x32xf32>
    %69 = vector.extract_strided_slice %66 {offsets = [0, 32], sizes = [1, 32], strides = [1, 1]} : vector<1x128xf32> to vector<1x32xf32>
    %70 = vector.extract_strided_slice %67 {offsets = [0, 64], sizes = [1, 32], strides = [1, 1]} : vector<1x128xf32> to vector<1x32xf32>
    %71 = vector.extract_strided_slice %66 {offsets = [0, 96], sizes = [1, 32], strides = [1, 1]} : vector<1x128xf32> to vector<1x32xf32>
    %72 = arith.mulf %69, %52 : vector<1x32xf32>
    %73 = arith.mulf %68, %70 : vector<1x32xf32>
    %74 = arith.addf %72, %73 : vector<1x32xf32>
    %75 = math.tanh %74 : vector<1x32xf32>
    %76 = arith.mulf %71, %75 : vector<1x32xf32>
    %77 = vector.extract_strided_slice %76 {offsets = [0, 0], sizes = [1, 16], strides = [1, 1]} : vector<1x32xf32> to vector<1x16xf32>
    %78 = vector.extract_strided_slice %76 {offsets = [0, 16], sizes = [1, 16], strides = [1, 1]} : vector<1x32xf32> to vector<1x16xf32>
    %79 = vector.extract_strided_slice %12 {offsets = [2, 0], sizes = [1, 128], strides = [1, 1]} : vector<8x128xf32> to vector<1x128xf32>
    %80 = vector.extract_strided_slice %12 {offsets = [5, 0], sizes = [1, 128], strides = [1, 1]} : vector<8x128xf32> to vector<1x128xf32>
    %81 = arith.select %32, %79, %80 : vector<1x128xi1>, vector<1x128xf32>
    %cst_18 = arith.constant dense<0.000000e+00> : vector<1x128xf32>
    %82 = tpu.matmul %76, %13, %cst_18 {dimension_numbers = #tpu.dot_dimension_numbers<[1], [0], [0], [1], [0, 0, 1, 1], [], []>} : vector<1x32xf32>, vector<32x128xf32>, vector<1x128xf32> -> vector<1x128xf32>
    %83 = arith.addf %81, %82 : vector<1x128xf32>
    %84 = arith.negf %83 : vector<1x128xf32>
    %85 = math.exp %84 : vector<1x128xf32>
    %cst_19 = arith.constant 1.000000e+00 : f32
    %86 = vector.broadcast %cst_19 : f32 to vector<1x128xf32>
    %87 = arith.addf %86, %85 : vector<1x128xf32>
    %88 = arith.divf %86, %87 : vector<1x128xf32>
    %89 = math.tanh %83 : vector<1x128xf32>
    %90 = vector.extract_strided_slice %88 {offsets = [0, 0], sizes = [1, 32], strides = [1, 1]} : vector<1x128xf32> to vector<1x32xf32>
    %91 = vector.extract_strided_slice %88 {offsets = [0, 32], sizes = [1, 32], strides = [1, 1]} : vector<1x128xf32> to vector<1x32xf32>
    %92 = vector.extract_strided_slice %89 {offsets = [0, 64], sizes = [1, 32], strides = [1, 1]} : vector<1x128xf32> to vector<1x32xf32>
    %93 = vector.extract_strided_slice %88 {offsets = [0, 96], sizes = [1, 32], strides = [1, 1]} : vector<1x128xf32> to vector<1x32xf32>
    %94 = arith.mulf %91, %74 : vector<1x32xf32>
    %95 = arith.mulf %90, %92 : vector<1x32xf32>
    %96 = arith.addf %94, %95 : vector<1x32xf32>
    %97 = math.tanh %96 : vector<1x32xf32>
    %98 = arith.mulf %93, %97 : vector<1x32xf32>
    %99 = vector.extract_strided_slice %98 {offsets = [0, 0], sizes = [1, 16], strides = [1, 1]} : vector<1x32xf32> to vector<1x16xf32>
    %100 = vector.extract_strided_slice %98 {offsets = [0, 16], sizes = [1, 16], strides = [1, 1]} : vector<1x32xf32> to vector<1x16xf32>
    %101 = vector.extract_strided_slice %12 {offsets = [3, 0], sizes = [1, 128], strides = [1, 1]} : vector<8x128xf32> to vector<1x128xf32>
    %102 = vector.extract_strided_slice %12 {offsets = [4, 0], sizes = [1, 128], strides = [1, 1]} : vector<8x128xf32> to vector<1x128xf32>
    %103 = arith.select %32, %101, %102 : vector<1x128xi1>, vector<1x128xf32>
    %cst_20 = arith.constant dense<0.000000e+00> : vector<1x128xf32>
    %104 = tpu.matmul %98, %13, %cst_20 {dimension_numbers = #tpu.dot_dimension_numbers<[1], [0], [0], [1], [0, 0, 1, 1], [], []>} : vector<1x32xf32>, vector<32x128xf32>, vector<1x128xf32> -> vector<1x128xf32>
    %105 = arith.addf %103, %104 : vector<1x128xf32>
    %106 = arith.negf %105 : vector<1x128xf32>
    %107 = math.exp %106 : vector<1x128xf32>
    %cst_21 = arith.constant 1.000000e+00 : f32
    %108 = vector.broadcast %cst_21 : f32 to vector<1x128xf32>
    %109 = arith.addf %108, %107 : vector<1x128xf32>
    %110 = arith.divf %108, %109 : vector<1x128xf32>
    %111 = math.tanh %105 : vector<1x128xf32>
    %112 = vector.extract_strided_slice %110 {offsets = [0, 0], sizes = [1, 32], strides = [1, 1]} : vector<1x128xf32> to vector<1x32xf32>
    %113 = vector.extract_strided_slice %110 {offsets = [0, 32], sizes = [1, 32], strides = [1, 1]} : vector<1x128xf32> to vector<1x32xf32>
    %114 = vector.extract_strided_slice %111 {offsets = [0, 64], sizes = [1, 32], strides = [1, 1]} : vector<1x128xf32> to vector<1x32xf32>
    %115 = vector.extract_strided_slice %110 {offsets = [0, 96], sizes = [1, 32], strides = [1, 1]} : vector<1x128xf32> to vector<1x32xf32>
    %116 = arith.mulf %113, %96 : vector<1x32xf32>
    %117 = arith.mulf %112, %114 : vector<1x32xf32>
    %118 = arith.addf %116, %117 : vector<1x32xf32>
    %119 = math.tanh %118 : vector<1x32xf32>
    %120 = arith.mulf %115, %119 : vector<1x32xf32>
    %121 = vector.extract_strided_slice %120 {offsets = [0, 0], sizes = [1, 16], strides = [1, 1]} : vector<1x32xf32> to vector<1x16xf32>
    %122 = vector.extract_strided_slice %120 {offsets = [0, 16], sizes = [1, 16], strides = [1, 1]} : vector<1x32xf32> to vector<1x16xf32>
    %123 = vector.extract_strided_slice %12 {offsets = [4, 0], sizes = [1, 128], strides = [1, 1]} : vector<8x128xf32> to vector<1x128xf32>
    %124 = vector.extract_strided_slice %12 {offsets = [3, 0], sizes = [1, 128], strides = [1, 1]} : vector<8x128xf32> to vector<1x128xf32>
    %125 = arith.select %32, %123, %124 : vector<1x128xi1>, vector<1x128xf32>
    %cst_22 = arith.constant dense<0.000000e+00> : vector<1x128xf32>
    %126 = tpu.matmul %120, %13, %cst_22 {dimension_numbers = #tpu.dot_dimension_numbers<[1], [0], [0], [1], [0, 0, 1, 1], [], []>} : vector<1x32xf32>, vector<32x128xf32>, vector<1x128xf32> -> vector<1x128xf32>
    %127 = arith.addf %125, %126 : vector<1x128xf32>
    %128 = arith.negf %127 : vector<1x128xf32>
    %129 = math.exp %128 : vector<1x128xf32>
    %cst_23 = arith.constant 1.000000e+00 : f32
    %130 = vector.broadcast %cst_23 : f32 to vector<1x128xf32>
    %131 = arith.addf %130, %129 : vector<1x128xf32>
    %132 = arith.divf %130, %131 : vector<1x128xf32>
    %133 = math.tanh %127 : vector<1x128xf32>
    %134 = vector.extract_strided_slice %132 {offsets = [0, 0], sizes = [1, 32], strides = [1, 1]} : vector<1x128xf32> to vector<1x32xf32>
    %135 = vector.extract_strided_slice %132 {offsets = [0, 32], sizes = [1, 32], strides = [1, 1]} : vector<1x128xf32> to vector<1x32xf32>
    %136 = vector.extract_strided_slice %133 {offsets = [0, 64], sizes = [1, 32], strides = [1, 1]} : vector<1x128xf32> to vector<1x32xf32>
    %137 = vector.extract_strided_slice %132 {offsets = [0, 96], sizes = [1, 32], strides = [1, 1]} : vector<1x128xf32> to vector<1x32xf32>
    %138 = arith.mulf %135, %118 : vector<1x32xf32>
    %139 = arith.mulf %134, %136 : vector<1x32xf32>
    %140 = arith.addf %138, %139 : vector<1x32xf32>
    %141 = math.tanh %140 : vector<1x32xf32>
    %142 = arith.mulf %137, %141 : vector<1x32xf32>
    %143 = vector.extract_strided_slice %142 {offsets = [0, 0], sizes = [1, 16], strides = [1, 1]} : vector<1x32xf32> to vector<1x16xf32>
    %144 = vector.extract_strided_slice %142 {offsets = [0, 16], sizes = [1, 16], strides = [1, 1]} : vector<1x32xf32> to vector<1x16xf32>
    %145 = vector.extract_strided_slice %12 {offsets = [5, 0], sizes = [1, 128], strides = [1, 1]} : vector<8x128xf32> to vector<1x128xf32>
    %146 = vector.extract_strided_slice %12 {offsets = [2, 0], sizes = [1, 128], strides = [1, 1]} : vector<8x128xf32> to vector<1x128xf32>
    %147 = arith.select %32, %145, %146 : vector<1x128xi1>, vector<1x128xf32>
    %cst_24 = arith.constant dense<0.000000e+00> : vector<1x128xf32>
    %148 = tpu.matmul %142, %13, %cst_24 {dimension_numbers = #tpu.dot_dimension_numbers<[1], [0], [0], [1], [0, 0, 1, 1], [], []>} : vector<1x32xf32>, vector<32x128xf32>, vector<1x128xf32> -> vector<1x128xf32>
    %149 = arith.addf %147, %148 : vector<1x128xf32>
    %150 = arith.negf %149 : vector<1x128xf32>
    %151 = math.exp %150 : vector<1x128xf32>
    %cst_25 = arith.constant 1.000000e+00 : f32
    %152 = vector.broadcast %cst_25 : f32 to vector<1x128xf32>
    %153 = arith.addf %152, %151 : vector<1x128xf32>
    %154 = arith.divf %152, %153 : vector<1x128xf32>
    %155 = math.tanh %149 : vector<1x128xf32>
    %156 = vector.extract_strided_slice %154 {offsets = [0, 0], sizes = [1, 32], strides = [1, 1]} : vector<1x128xf32> to vector<1x32xf32>
    %157 = vector.extract_strided_slice %154 {offsets = [0, 32], sizes = [1, 32], strides = [1, 1]} : vector<1x128xf32> to vector<1x32xf32>
    %158 = vector.extract_strided_slice %155 {offsets = [0, 64], sizes = [1, 32], strides = [1, 1]} : vector<1x128xf32> to vector<1x32xf32>
    %159 = vector.extract_strided_slice %154 {offsets = [0, 96], sizes = [1, 32], strides = [1, 1]} : vector<1x128xf32> to vector<1x32xf32>
    %160 = arith.mulf %157, %140 : vector<1x32xf32>
    %161 = arith.mulf %156, %158 : vector<1x32xf32>
    %162 = arith.addf %160, %161 : vector<1x32xf32>
    %163 = math.tanh %162 : vector<1x32xf32>
    %164 = arith.mulf %159, %163 : vector<1x32xf32>
    %165 = vector.extract_strided_slice %164 {offsets = [0, 0], sizes = [1, 16], strides = [1, 1]} : vector<1x32xf32> to vector<1x16xf32>
    %166 = vector.extract_strided_slice %164 {offsets = [0, 16], sizes = [1, 16], strides = [1, 1]} : vector<1x32xf32> to vector<1x16xf32>
    %167 = vector.extract_strided_slice %12 {offsets = [6, 0], sizes = [1, 128], strides = [1, 1]} : vector<8x128xf32> to vector<1x128xf32>
    %168 = vector.extract_strided_slice %12 {offsets = [1, 0], sizes = [1, 128], strides = [1, 1]} : vector<8x128xf32> to vector<1x128xf32>
    %169 = arith.select %32, %167, %168 : vector<1x128xi1>, vector<1x128xf32>
    %cst_26 = arith.constant dense<0.000000e+00> : vector<1x128xf32>
    %170 = tpu.matmul %164, %13, %cst_26 {dimension_numbers = #tpu.dot_dimension_numbers<[1], [0], [0], [1], [0, 0, 1, 1], [], []>} : vector<1x32xf32>, vector<32x128xf32>, vector<1x128xf32> -> vector<1x128xf32>
    %171 = arith.addf %169, %170 : vector<1x128xf32>
    %172 = arith.negf %171 : vector<1x128xf32>
    %173 = math.exp %172 : vector<1x128xf32>
    %cst_27 = arith.constant 1.000000e+00 : f32
    %174 = vector.broadcast %cst_27 : f32 to vector<1x128xf32>
    %175 = arith.addf %174, %173 : vector<1x128xf32>
    %176 = arith.divf %174, %175 : vector<1x128xf32>
    %177 = math.tanh %171 : vector<1x128xf32>
    %178 = vector.extract_strided_slice %176 {offsets = [0, 0], sizes = [1, 32], strides = [1, 1]} : vector<1x128xf32> to vector<1x32xf32>
    %179 = vector.extract_strided_slice %176 {offsets = [0, 32], sizes = [1, 32], strides = [1, 1]} : vector<1x128xf32> to vector<1x32xf32>
    %180 = vector.extract_strided_slice %177 {offsets = [0, 64], sizes = [1, 32], strides = [1, 1]} : vector<1x128xf32> to vector<1x32xf32>
    %181 = vector.extract_strided_slice %176 {offsets = [0, 96], sizes = [1, 32], strides = [1, 1]} : vector<1x128xf32> to vector<1x32xf32>
    %182 = arith.mulf %179, %162 : vector<1x32xf32>
    %183 = arith.mulf %178, %180 : vector<1x32xf32>
    %184 = arith.addf %182, %183 : vector<1x32xf32>
    %185 = math.tanh %184 : vector<1x32xf32>
    %186 = arith.mulf %181, %185 : vector<1x32xf32>
    %187 = vector.extract_strided_slice %186 {offsets = [0, 0], sizes = [1, 16], strides = [1, 1]} : vector<1x32xf32> to vector<1x16xf32>
    %188 = vector.extract_strided_slice %186 {offsets = [0, 16], sizes = [1, 16], strides = [1, 1]} : vector<1x32xf32> to vector<1x16xf32>
    %189 = vector.extract_strided_slice %12 {offsets = [7, 0], sizes = [1, 128], strides = [1, 1]} : vector<8x128xf32> to vector<1x128xf32>
    %190 = vector.extract_strided_slice %12 {offsets = [0, 0], sizes = [1, 128], strides = [1, 1]} : vector<8x128xf32> to vector<1x128xf32>
    %191 = arith.select %32, %189, %190 : vector<1x128xi1>, vector<1x128xf32>
    %cst_28 = arith.constant dense<0.000000e+00> : vector<1x128xf32>
    %192 = tpu.matmul %186, %13, %cst_28 {dimension_numbers = #tpu.dot_dimension_numbers<[1], [0], [0], [1], [0, 0, 1, 1], [], []>} : vector<1x32xf32>, vector<32x128xf32>, vector<1x128xf32> -> vector<1x128xf32>
    %193 = arith.addf %191, %192 : vector<1x128xf32>
    %194 = arith.negf %193 : vector<1x128xf32>
    %195 = math.exp %194 : vector<1x128xf32>
    %cst_29 = arith.constant 1.000000e+00 : f32
    %196 = vector.broadcast %cst_29 : f32 to vector<1x128xf32>
    %197 = arith.addf %196, %195 : vector<1x128xf32>
    %198 = arith.divf %196, %197 : vector<1x128xf32>
    %199 = math.tanh %193 : vector<1x128xf32>
    %200 = vector.extract_strided_slice %198 {offsets = [0, 0], sizes = [1, 32], strides = [1, 1]} : vector<1x128xf32> to vector<1x32xf32>
    %201 = vector.extract_strided_slice %198 {offsets = [0, 32], sizes = [1, 32], strides = [1, 1]} : vector<1x128xf32> to vector<1x32xf32>
    %202 = vector.extract_strided_slice %199 {offsets = [0, 64], sizes = [1, 32], strides = [1, 1]} : vector<1x128xf32> to vector<1x32xf32>
    %203 = vector.extract_strided_slice %198 {offsets = [0, 96], sizes = [1, 32], strides = [1, 1]} : vector<1x128xf32> to vector<1x32xf32>
    %204 = arith.mulf %201, %184 : vector<1x32xf32>
    %205 = arith.mulf %200, %202 : vector<1x32xf32>
    %206 = arith.addf %204, %205 : vector<1x32xf32>
    %207 = math.tanh %206 : vector<1x32xf32>
    %208 = arith.mulf %203, %207 : vector<1x32xf32>
    %209 = vector.extract_strided_slice %208 {offsets = [0, 0], sizes = [1, 16], strides = [1, 1]} : vector<1x32xf32> to vector<1x16xf32>
    %210 = vector.extract_strided_slice %208 {offsets = [0, 16], sizes = [1, 16], strides = [1, 1]} : vector<1x32xf32> to vector<1x16xf32>
    %211 = tpu.concatenate %55, %77, %99, %121, %143, %165, %187, %209 in 0 : vector<1x16xf32>, vector<1x16xf32>, vector<1x16xf32>, vector<1x16xf32>, vector<1x16xf32>, vector<1x16xf32>, vector<1x16xf32>, vector<1x16xf32> -> vector<8x16xf32>
    %212 = tpu.concatenate %210, %188, %166, %144, %122, %100, %78, %56 in 0 : vector<1x16xf32>, vector<1x16xf32>, vector<1x16xf32>, vector<1x16xf32>, vector<1x16xf32>, vector<1x16xf32>, vector<1x16xf32>, vector<1x16xf32> -> vector<8x16xf32>
    %c56 = arith.constant 56 : index
    %c0_30 = arith.constant 0 : index
    %213 = vector.load %arg1[%c56, %c0_30] : memref<112x128xf32, #tpu.memory_space<vmem>>, vector<32x128xf32>
    %c88 = arith.constant 88 : index
    %c0_31 = arith.constant 0 : index
    %214 = vector.load %arg1[%c88, %c0_31] : memref<112x128xf32, #tpu.memory_space<vmem>>, vector<1x128xf32>
    %215 = vector.extract_strided_slice %213 {offsets = [0, 0], sizes = [16, 128], strides = [1, 1]} : vector<32x128xf32> to vector<16x128xf32>
    %cst_32 = arith.constant dense<0.000000e+00> : vector<8x128xf32>
    %216 = tpu.matmul %211, %215, %cst_32 {dimension_numbers = #tpu.dot_dimension_numbers<[1], [0], [0], [1], [0, 0, 1, 1], [], []>} : vector<8x16xf32>, vector<16x128xf32>, vector<8x128xf32> -> vector<8x128xf32>
    %217 = vector.extract_strided_slice %213 {offsets = [16, 0], sizes = [16, 128], strides = [1, 1]} : vector<32x128xf32> to vector<16x128xf32>
    %cst_33 = arith.constant dense<0.000000e+00> : vector<8x128xf32>
    %218 = tpu.matmul %212, %217, %cst_33 {dimension_numbers = #tpu.dot_dimension_numbers<[1], [0], [0], [1], [0, 0, 1, 1], [], []>} : vector<8x16xf32>, vector<16x128xf32>, vector<8x128xf32> -> vector<8x128xf32>
    %219 = arith.addf %216, %218 : vector<8x128xf32>
    %220 = vector.broadcast %214 : vector<1x128xf32> to vector<8x128xf32>
    %221 = arith.addf %219, %220 : vector<8x128xf32>
    %c0_34 = arith.constant 0 : index
    %c0_35 = arith.constant 0 : index
    %222 = vector.load %arg5[%c0_34, %c0_35] : memref<9x128xf32, #tpu.memory_space<vmem>>, vector<8x128xf32>
    tpu.vector_store %arg5[%c0_34, %c0_35], %221 {strides = array<i32>} : memref<9x128xf32, #tpu.memory_space<vmem>>, vector<8x128xf32>,
    %223 = vector.extract_strided_slice %221 {offsets = [0, 0], sizes = [8, 10], strides = [1, 1]} : vector<8x128xf32> to vector<8x10xf32>
    %c96 = arith.constant 96 : index
    %c0_36 = arith.constant 0 : index
    %224 = vector.load %arg1[%c96, %c0_36] : memref<112x128xf32, #tpu.memory_space<vmem>>, vector<10x10xf32>
    %225 = tpu.iota {dimensions = array<i32: 1>} : vector<1x10xi32>
    %226 = tpu.iota {dimensions = array<i32: 1>} : vector<10x10xi32>
    %c7_i32 = arith.constant 7 : i32
    %227 = vector.broadcast %c7_i32 : i32 to vector<1x10xi32>
    %228 = arith.cmpi eq, %225, %227 : vector<1x10xi32>
    %cst_37 = arith.constant 0.000000e+00 : f32
    %cst_38 = arith.constant -1.000000e+04 : f32
    %229 = vector.broadcast %cst_37 : f32 to vector<1x10xf32>
    %230 = vector.broadcast %cst_38 : f32 to vector<1x10xf32>
    %231 = arith.select %228, %229, %230 : vector<1x10xi1>, vector<1x10xf32>
    %232 = vector.broadcast %231 : vector<1x10xf32> to vector<10x10xf32>
    %233 = arith.addf %232, %224 : vector<10x10xf32>
    %cst_39 = arith.constant dense<0xFF800000> : vector<10xf32>
    %234 = vector.multi_reduction <maximumf>, %233, %cst_39 [1] : vector<10x10xf32> to vector<10xf32>
    %235 = vector.shape_cast %234 : vector<10xf32> to vector<1x10xf32>
    %236 = vector.extract_strided_slice %223 {offsets = [0, 0], sizes = [1, 10], strides = [1, 1]} : vector<8x10xf32> to vector<1x10xf32>
    %237 = arith.addf %235, %236 : vector<1x10xf32>
    %238 = vector.broadcast %237 : vector<1x10xf32> to vector<10x10xf32>
    %239 = arith.addf %238, %224 : vector<10x10xf32>
    %cst_40 = arith.constant dense<0xFF800000> : vector<10xf32>
    %240 = vector.multi_reduction <maximumf>, %239, %cst_40 [1] : vector<10x10xf32> to vector<10xf32>
    %241 = vector.shape_cast %240 : vector<10xf32> to vector<10x1xf32>
    %242 = vector.broadcast %241 : vector<10x1xf32> to vector<10x10xf32>
    %243 = arith.cmpf oeq, %239, %242 : vector<10x10xf32>
    %c10_i32 = arith.constant 10 : i32
    %244 = vector.broadcast %c10_i32 : i32 to vector<10x10xi32>
    %245 = arith.select %243, %226, %244 : vector<10x10xi1>, vector<10x10xi32>
    %cst_41 = arith.constant dense<2147483647> : vector<10xi32>
    %246 = vector.multi_reduction <minsi>, %245, %cst_41 [1] : vector<10x10xi32> to vector<10xi32>
    %247 = vector.shape_cast %246 : vector<10xi32> to vector<1x10xi32>
    %248 = vector.shape_cast %240 : vector<10xf32> to vector<1x10xf32>
    %249 = vector.extract_strided_slice %223 {offsets = [1, 0], sizes = [1, 10], strides = [1, 1]} : vector<8x10xf32> to vector<1x10xf32>
    %250 = arith.addf %248, %249 : vector<1x10xf32>
    %251 = vector.broadcast %250 : vector<1x10xf32> to vector<10x10xf32>
    %252 = arith.addf %251, %224 : vector<10x10xf32>
    %cst_42 = arith.constant dense<0xFF800000> : vector<10xf32>
    %253 = vector.multi_reduction <maximumf>, %252, %cst_42 [1] : vector<10x10xf32> to vector<10xf32>
    %254 = vector.shape_cast %253 : vector<10xf32> to vector<10x1xf32>
    %255 = vector.broadcast %254 : vector<10x1xf32> to vector<10x10xf32>
    %256 = arith.cmpf oeq, %252, %255 : vector<10x10xf32>
    %c10_i32_43 = arith.constant 10 : i32
    %257 = vector.broadcast %c10_i32_43 : i32 to vector<10x10xi32>
    %258 = arith.select %256, %226, %257 : vector<10x10xi1>, vector<10x10xi32>
    %cst_44 = arith.constant dense<2147483647> : vector<10xi32>
    %259 = vector.multi_reduction <minsi>, %258, %cst_44 [1] : vector<10x10xi32> to vector<10xi32>
    %260 = vector.shape_cast %259 : vector<10xi32> to vector<1x10xi32>
    %261 = vector.shape_cast %253 : vector<10xf32> to vector<1x10xf32>
    %262 = vector.extract_strided_slice %223 {offsets = [2, 0], sizes = [1, 10], strides = [1, 1]} : vector<8x10xf32> to vector<1x10xf32>
    %263 = arith.addf %261, %262 : vector<1x10xf32>
    %264 = vector.broadcast %263 : vector<1x10xf32> to vector<10x10xf32>
    %265 = arith.addf %264, %224 : vector<10x10xf32>
    %cst_45 = arith.constant dense<0xFF800000> : vector<10xf32>
    %266 = vector.multi_reduction <maximumf>, %265, %cst_45 [1] : vector<10x10xf32> to vector<10xf32>
    %267 = vector.shape_cast %266 : vector<10xf32> to vector<10x1xf32>
    %268 = vector.broadcast %267 : vector<10x1xf32> to vector<10x10xf32>
    %269 = arith.cmpf oeq, %265, %268 : vector<10x10xf32>
    %c10_i32_46 = arith.constant 10 : i32
    %270 = vector.broadcast %c10_i32_46 : i32 to vector<10x10xi32>
    %271 = arith.select %269, %226, %270 : vector<10x10xi1>, vector<10x10xi32>
    %cst_47 = arith.constant dense<2147483647> : vector<10xi32>
    %272 = vector.multi_reduction <minsi>, %271, %cst_47 [1] : vector<10x10xi32> to vector<10xi32>
    %273 = vector.shape_cast %272 : vector<10xi32> to vector<1x10xi32>
    %274 = vector.shape_cast %266 : vector<10xf32> to vector<1x10xf32>
    %275 = vector.extract_strided_slice %223 {offsets = [3, 0], sizes = [1, 10], strides = [1, 1]} : vector<8x10xf32> to vector<1x10xf32>
    %276 = arith.addf %274, %275 : vector<1x10xf32>
    %277 = vector.broadcast %276 : vector<1x10xf32> to vector<10x10xf32>
    %278 = arith.addf %277, %224 : vector<10x10xf32>
    %cst_48 = arith.constant dense<0xFF800000> : vector<10xf32>
    %279 = vector.multi_reduction <maximumf>, %278, %cst_48 [1] : vector<10x10xf32> to vector<10xf32>
    %280 = vector.shape_cast %279 : vector<10xf32> to vector<10x1xf32>
    %281 = vector.broadcast %280 : vector<10x1xf32> to vector<10x10xf32>
    %282 = arith.cmpf oeq, %278, %281 : vector<10x10xf32>
    %c10_i32_49 = arith.constant 10 : i32
    %283 = vector.broadcast %c10_i32_49 : i32 to vector<10x10xi32>
    %284 = arith.select %282, %226, %283 : vector<10x10xi1>, vector<10x10xi32>
    %cst_50 = arith.constant dense<2147483647> : vector<10xi32>
    %285 = vector.multi_reduction <minsi>, %284, %cst_50 [1] : vector<10x10xi32> to vector<10xi32>
    %286 = vector.shape_cast %285 : vector<10xi32> to vector<1x10xi32>
    %287 = vector.shape_cast %279 : vector<10xf32> to vector<1x10xf32>
    %288 = vector.extract_strided_slice %223 {offsets = [4, 0], sizes = [1, 10], strides = [1, 1]} : vector<8x10xf32> to vector<1x10xf32>
    %289 = arith.addf %287, %288 : vector<1x10xf32>
    %290 = vector.broadcast %289 : vector<1x10xf32> to vector<10x10xf32>
    %291 = arith.addf %290, %224 : vector<10x10xf32>
    %cst_51 = arith.constant dense<0xFF800000> : vector<10xf32>
    %292 = vector.multi_reduction <maximumf>, %291, %cst_51 [1] : vector<10x10xf32> to vector<10xf32>
    %293 = vector.shape_cast %292 : vector<10xf32> to vector<10x1xf32>
    %294 = vector.broadcast %293 : vector<10x1xf32> to vector<10x10xf32>
    %295 = arith.cmpf oeq, %291, %294 : vector<10x10xf32>
    %c10_i32_52 = arith.constant 10 : i32
    %296 = vector.broadcast %c10_i32_52 : i32 to vector<10x10xi32>
    %297 = arith.select %295, %226, %296 : vector<10x10xi1>, vector<10x10xi32>
    %cst_53 = arith.constant dense<2147483647> : vector<10xi32>
    %298 = vector.multi_reduction <minsi>, %297, %cst_53 [1] : vector<10x10xi32> to vector<10xi32>
    %299 = vector.shape_cast %298 : vector<10xi32> to vector<1x10xi32>
    %300 = vector.shape_cast %292 : vector<10xf32> to vector<1x10xf32>
    %301 = vector.extract_strided_slice %223 {offsets = [5, 0], sizes = [1, 10], strides = [1, 1]} : vector<8x10xf32> to vector<1x10xf32>
    %302 = arith.addf %300, %301 : vector<1x10xf32>
    %303 = vector.broadcast %302 : vector<1x10xf32> to vector<10x10xf32>
    %304 = arith.addf %303, %224 : vector<10x10xf32>
    %cst_54 = arith.constant dense<0xFF800000> : vector<10xf32>
    %305 = vector.multi_reduction <maximumf>, %304, %cst_54 [1] : vector<10x10xf32> to vector<10xf32>
    %306 = vector.shape_cast %305 : vector<10xf32> to vector<10x1xf32>
    %307 = vector.broadcast %306 : vector<10x1xf32> to vector<10x10xf32>
    %308 = arith.cmpf oeq, %304, %307 : vector<10x10xf32>
    %c10_i32_55 = arith.constant 10 : i32
    %309 = vector.broadcast %c10_i32_55 : i32 to vector<10x10xi32>
    %310 = arith.select %308, %226, %309 : vector<10x10xi1>, vector<10x10xi32>
    %cst_56 = arith.constant dense<2147483647> : vector<10xi32>
    %311 = vector.multi_reduction <minsi>, %310, %cst_56 [1] : vector<10x10xi32> to vector<10xi32>
    %312 = vector.shape_cast %311 : vector<10xi32> to vector<1x10xi32>
    %313 = vector.shape_cast %305 : vector<10xf32> to vector<1x10xf32>
    %314 = vector.extract_strided_slice %223 {offsets = [6, 0], sizes = [1, 10], strides = [1, 1]} : vector<8x10xf32> to vector<1x10xf32>
    %315 = arith.addf %313, %314 : vector<1x10xf32>
    %316 = vector.broadcast %315 : vector<1x10xf32> to vector<10x10xf32>
    %317 = arith.addf %316, %224 : vector<10x10xf32>
    %cst_57 = arith.constant dense<0xFF800000> : vector<10xf32>
    %318 = vector.multi_reduction <maximumf>, %317, %cst_57 [1] : vector<10x10xf32> to vector<10xf32>
    %319 = vector.shape_cast %318 : vector<10xf32> to vector<10x1xf32>
    %320 = vector.broadcast %319 : vector<10x1xf32> to vector<10x10xf32>
    %321 = arith.cmpf oeq, %317, %320 : vector<10x10xf32>
    %c10_i32_58 = arith.constant 10 : i32
    %322 = vector.broadcast %c10_i32_58 : i32 to vector<10x10xi32>
    %323 = arith.select %321, %226, %322 : vector<10x10xi1>, vector<10x10xi32>
    %cst_59 = arith.constant dense<2147483647> : vector<10xi32>
    %324 = vector.multi_reduction <minsi>, %323, %cst_59 [1] : vector<10x10xi32> to vector<10xi32>
    %325 = vector.shape_cast %324 : vector<10xi32> to vector<1x10xi32>
    %326 = vector.shape_cast %318 : vector<10xf32> to vector<1x10xf32>
    %327 = vector.extract_strided_slice %223 {offsets = [7, 0], sizes = [1, 10], strides = [1, 1]} : vector<8x10xf32> to vector<1x10xf32>
    %328 = arith.addf %326, %327 : vector<1x10xf32>
    %329 = vector.extract_strided_slice %224 {offsets = [8, 0], sizes = [1, 10], strides = [1, 1]} : vector<10x10xf32> to vector<1x10xf32>
    %330 = arith.addf %328, %329 : vector<1x10xf32>
    %cst_60 = arith.constant dense<0xFF800000> : vector<1xf32>
    %331 = vector.multi_reduction <maximumf>, %330, %cst_60 [1] : vector<1x10xf32> to vector<1xf32>
    %332 = vector.shape_cast %331 : vector<1xf32> to vector<1x1xf32>
    %333 = vector.broadcast %332 : vector<1x1xf32> to vector<1x10xf32>
    %334 = arith.cmpf oeq, %330, %333 : vector<1x10xf32>
    %c10_i32_61 = arith.constant 10 : i32
    %335 = vector.broadcast %c10_i32_61 : i32 to vector<1x10xi32>
    %336 = arith.select %334, %225, %335 : vector<1x10xi1>, vector<1x10xi32>
    %cst_62 = arith.constant dense<2147483647> : vector<1xi32>
    %337 = vector.multi_reduction <minsi>, %336, %cst_62 [1] : vector<1x10xi32> to vector<1xi32>
    %338 = vector.shape_cast %337 : vector<1xi32> to vector<1x1xi32>
    %339 = tpu.iota {dimensions = array<i32: 1>} : vector<1x128xi32>
    %c0_i32_63 = arith.constant 0 : i32
    %340 = vector.broadcast %c0_i32_63 : i32 to vector<1x128xi32>
    %341 = arith.cmpi eq, %339, %340 : vector<1x128xi32>
    %cst_64 = arith.constant 0.000000e+00 : f32
    %342 = vector.broadcast %cst_64 : f32 to vector<1x128xf32>
    %343 = vector.shape_cast %332 : vector<1x1xf32> to vector<1x1xf32>
    %344 = vector.broadcast %343 : vector<1x1xf32> to vector<1x128xf32>
    %345 = arith.select %341, %344, %342 : vector<1x128xi1>, vector<1x128xf32>
    %c8_i32 = arith.constant 8 : i32
    %346 = vector.broadcast %c8_i32 : i32 to vector<1x128xi32>
    %347 = arith.cmpi eq, %339, %346 : vector<1x128xi32>
    %348 = arith.sitofp %338 : vector<1x1xi32> to vector<1x1xf32>
    %349 = vector.shape_cast %348 : vector<1x1xf32> to vector<1x1xf32>
    %350 = vector.broadcast %349 : vector<1x1xf32> to vector<1x128xf32>
    %351 = arith.select %347, %350, %345 : vector<1x128xi1>, vector<1x128xf32>
    %352 = vector.broadcast %338 : vector<1x1xi32> to vector<1x10xi32>
    %353 = arith.cmpi eq, %225, %352 : vector<1x10xi32>
    %c0_i32_65 = arith.constant 0 : i32
    %354 = vector.broadcast %c0_i32_65 : i32 to vector<1x10xi32>
    %355 = arith.select %353, %325, %354 : vector<1x10xi1>, vector<1x10xi32>
    %cst_66 = arith.constant dense<0> : vector<1xi32>
    %356 = vector.multi_reduction <add>, %355, %cst_66 [1] : vector<1x10xi32> to vector<1xi32>
    %357 = vector.shape_cast %356 : vector<1xi32> to vector<1x1xi32>
    %c7_i32_67 = arith.constant 7 : i32
    %358 = vector.broadcast %c7_i32_67 : i32 to vector<1x128xi32>
    %359 = arith.cmpi eq, %339, %358 : vector<1x128xi32>
    %360 = arith.sitofp %357 : vector<1x1xi32> to vector<1x1xf32>
    %361 = vector.shape_cast %360 : vector<1x1xf32> to vector<1x1xf32>
    %362 = vector.broadcast %361 : vector<1x1xf32> to vector<1x128xf32>
    %363 = arith.select %359, %362, %351 : vector<1x128xi1>, vector<1x128xf32>
    %364 = vector.broadcast %357 : vector<1x1xi32> to vector<1x10xi32>
    %365 = arith.cmpi eq, %225, %364 : vector<1x10xi32>
    %c0_i32_68 = arith.constant 0 : i32
    %366 = vector.broadcast %c0_i32_68 : i32 to vector<1x10xi32>
    %367 = arith.select %365, %312, %366 : vector<1x10xi1>, vector<1x10xi32>
    %cst_69 = arith.constant dense<0> : vector<1xi32>
    %368 = vector.multi_reduction <add>, %367, %cst_69 [1] : vector<1x10xi32> to vector<1xi32>
    %369 = vector.shape_cast %368 : vector<1xi32> to vector<1x1xi32>
    %c6_i32 = arith.constant 6 : i32
    %370 = vector.broadcast %c6_i32 : i32 to vector<1x128xi32>
    %371 = arith.cmpi eq, %339, %370 : vector<1x128xi32>
    %372 = arith.sitofp %369 : vector<1x1xi32> to vector<1x1xf32>
    %373 = vector.shape_cast %372 : vector<1x1xf32> to vector<1x1xf32>
    %374 = vector.broadcast %373 : vector<1x1xf32> to vector<1x128xf32>
    %375 = arith.select %371, %374, %363 : vector<1x128xi1>, vector<1x128xf32>
    %376 = vector.broadcast %369 : vector<1x1xi32> to vector<1x10xi32>
    %377 = arith.cmpi eq, %225, %376 : vector<1x10xi32>
    %c0_i32_70 = arith.constant 0 : i32
    %378 = vector.broadcast %c0_i32_70 : i32 to vector<1x10xi32>
    %379 = arith.select %377, %299, %378 : vector<1x10xi1>, vector<1x10xi32>
    %cst_71 = arith.constant dense<0> : vector<1xi32>
    %380 = vector.multi_reduction <add>, %379, %cst_71 [1] : vector<1x10xi32> to vector<1xi32>
    %381 = vector.shape_cast %380 : vector<1xi32> to vector<1x1xi32>
    %c5_i32 = arith.constant 5 : i32
    %382 = vector.broadcast %c5_i32 : i32 to vector<1x128xi32>
    %383 = arith.cmpi eq, %339, %382 : vector<1x128xi32>
    %384 = arith.sitofp %381 : vector<1x1xi32> to vector<1x1xf32>
    %385 = vector.shape_cast %384 : vector<1x1xf32> to vector<1x1xf32>
    %386 = vector.broadcast %385 : vector<1x1xf32> to vector<1x128xf32>
    %387 = arith.select %383, %386, %375 : vector<1x128xi1>, vector<1x128xf32>
    %388 = vector.broadcast %381 : vector<1x1xi32> to vector<1x10xi32>
    %389 = arith.cmpi eq, %225, %388 : vector<1x10xi32>
    %c0_i32_72 = arith.constant 0 : i32
    %390 = vector.broadcast %c0_i32_72 : i32 to vector<1x10xi32>
    %391 = arith.select %389, %286, %390 : vector<1x10xi1>, vector<1x10xi32>
    %cst_73 = arith.constant dense<0> : vector<1xi32>
    %392 = vector.multi_reduction <add>, %391, %cst_73 [1] : vector<1x10xi32> to vector<1xi32>
    %393 = vector.shape_cast %392 : vector<1xi32> to vector<1x1xi32>
    %c4_i32 = arith.constant 4 : i32
    %394 = vector.broadcast %c4_i32 : i32 to vector<1x128xi32>
    %395 = arith.cmpi eq, %339, %394 : vector<1x128xi32>
    %396 = arith.sitofp %393 : vector<1x1xi32> to vector<1x1xf32>
    %397 = vector.shape_cast %396 : vector<1x1xf32> to vector<1x1xf32>
    %398 = vector.broadcast %397 : vector<1x1xf32> to vector<1x128xf32>
    %399 = arith.select %395, %398, %387 : vector<1x128xi1>, vector<1x128xf32>
    %400 = vector.broadcast %393 : vector<1x1xi32> to vector<1x10xi32>
    %401 = arith.cmpi eq, %225, %400 : vector<1x10xi32>
    %c0_i32_74 = arith.constant 0 : i32
    %402 = vector.broadcast %c0_i32_74 : i32 to vector<1x10xi32>
    %403 = arith.select %401, %273, %402 : vector<1x10xi1>, vector<1x10xi32>
    %cst_75 = arith.constant dense<0> : vector<1xi32>
    %404 = vector.multi_reduction <add>, %403, %cst_75 [1] : vector<1x10xi32> to vector<1xi32>
    %405 = vector.shape_cast %404 : vector<1xi32> to vector<1x1xi32>
    %c3_i32 = arith.constant 3 : i32
    %406 = vector.broadcast %c3_i32 : i32 to vector<1x128xi32>
    %407 = arith.cmpi eq, %339, %406 : vector<1x128xi32>
    %408 = arith.sitofp %405 : vector<1x1xi32> to vector<1x1xf32>
    %409 = vector.shape_cast %408 : vector<1x1xf32> to vector<1x1xf32>
    %410 = vector.broadcast %409 : vector<1x1xf32> to vector<1x128xf32>
    %411 = arith.select %407, %410, %399 : vector<1x128xi1>, vector<1x128xf32>
    %412 = vector.broadcast %405 : vector<1x1xi32> to vector<1x10xi32>
    %413 = arith.cmpi eq, %225, %412 : vector<1x10xi32>
    %c0_i32_76 = arith.constant 0 : i32
    %414 = vector.broadcast %c0_i32_76 : i32 to vector<1x10xi32>
    %415 = arith.select %413, %260, %414 : vector<1x10xi1>, vector<1x10xi32>
    %cst_77 = arith.constant dense<0> : vector<1xi32>
    %416 = vector.multi_reduction <add>, %415, %cst_77 [1] : vector<1x10xi32> to vector<1xi32>
    %417 = vector.shape_cast %416 : vector<1xi32> to vector<1x1xi32>
    %c2_i32 = arith.constant 2 : i32
    %418 = vector.broadcast %c2_i32 : i32 to vector<1x128xi32>
    %419 = arith.cmpi eq, %339, %418 : vector<1x128xi32>
    %420 = arith.sitofp %417 : vector<1x1xi32> to vector<1x1xf32>
    %421 = vector.shape_cast %420 : vector<1x1xf32> to vector<1x1xf32>
    %422 = vector.broadcast %421 : vector<1x1xf32> to vector<1x128xf32>
    %423 = arith.select %419, %422, %411 : vector<1x128xi1>, vector<1x128xf32>
    %424 = vector.broadcast %417 : vector<1x1xi32> to vector<1x10xi32>
    %425 = arith.cmpi eq, %225, %424 : vector<1x10xi32>
    %c0_i32_78 = arith.constant 0 : i32
    %426 = vector.broadcast %c0_i32_78 : i32 to vector<1x10xi32>
    %427 = arith.select %425, %247, %426 : vector<1x10xi1>, vector<1x10xi32>
    %cst_79 = arith.constant dense<0> : vector<1xi32>
    %428 = vector.multi_reduction <add>, %427, %cst_79 [1] : vector<1x10xi32> to vector<1xi32>
    %429 = vector.shape_cast %428 : vector<1xi32> to vector<1x1xi32>
    %c1_i32_80 = arith.constant 1 : i32
    %430 = vector.broadcast %c1_i32_80 : i32 to vector<1x128xi32>
    %431 = arith.cmpi eq, %339, %430 : vector<1x128xi32>
    %432 = arith.sitofp %429 : vector<1x1xi32> to vector<1x1xf32>
    %433 = vector.shape_cast %432 : vector<1x1xf32> to vector<1x1xf32>
    %434 = vector.broadcast %433 : vector<1x1xf32> to vector<1x128xf32>
    %435 = arith.select %431, %434, %423 : vector<1x128xi1>, vector<1x128xf32>
    %c8 = arith.constant 8 : index
    %c0_81 = arith.constant 0 : index
    %436 = vector.load %arg5[%c8, %c0_81] : memref<9x128xf32, #tpu.memory_space<vmem>>, vector<1x128xf32>
    tpu.vector_store %arg5[%c8, %c0_81], %435 {strides = array<i32>} : memref<9x128xf32, #tpu.memory_space<vmem>>, vector<1x128xf32>,
    return
  }
  func.func @transform_0(%arg0: i32) -> (i32, i32) {
    %c0_i32 = arith.constant 0 : i32
    %c0_i32_0 = arith.constant 0 : i32
    %c0_i32_1 = arith.constant 0 : i32
    return %c0_i32, %c0_i32_0 : i32, i32
  }
  func.func @transform_1(%arg0: i32) -> (i32, i32) {
    %c0_i32 = arith.constant 0 : i32
    %c0_i32_0 = arith.constant 0 : i32
    %c0_i32_1 = arith.constant 0 : i32
    return %c0_i32, %c0_i32_0 : i32, i32
  }
  func.func @transform_2(%arg0: i32) -> (i32, i32) {
    %c0_i32 = arith.constant 0 : i32
    %c0_i32_0 = arith.constant 0 : i32
    %c0_i32_1 = arith.constant 0 : i32
    return %c0_i32, %c0_i32_0 : i32, i32
  }
  func.func @transform_3(%arg0: i32) -> (i32, i32) {
    %c0_i32 = arith.constant 0 : i32
    %c0_i32_0 = arith.constant 0 : i32
    %c0_i32_1 = arith.constant 0 : i32
    return %c0_i32, %c0_i32_0 : i32, i32
  }
  func.func @transform_4(%arg0: i32) -> (i32, i32) {
    %c0_i32 = arith.constant 0 : i32
    %c0_i32_0 = arith.constant 0 : i32
    %c0_i32_1 = arith.constant 0 : i32
    return %c0_i32, %c0_i32_0 : i32, i32
  }
}

</mosaic_0001>

<llo_original>
// kernel: bilstm_crf_forward.1
$region0: #{bilstm_crf_forward.1}
  #allocation0 [shape = 'u32[]', space=smem, size = 0x4, offset = 0x4, fixed_abs, tag = 'smem constant byte address 0x4 - core index']
  #allocation1 [shape = 'u32[144,128]{1,0:T(1,128)}', space=vmem, size = 0x12000, scoped, tag = 'internal scratch']
  %s0 = inlined_call_operand.hbm [shape: f32[112,128], index: 0, kind: input, shape index: {}]
  %s1 = inlined_call_operand.vmem [shape: f32[50,16], index: 1, kind: input, shape index: {}]
  %s2 = inlined_call_operand.vmem [shape: s32[8,1], index: 2, kind: input, shape index: {}]
  %s3 = inlined_call_operand.vmem [shape: f32[2,32], index: 3, kind: input, shape index: {}]
  %s4 = inlined_call_operand.vmem [shape: f32[9,128], index: 4, kind: output, shape index: {}]
  %s5 = sld [smem:[#allocation0]]
  $region30: #{bilstm_crf_forward.1} parent=0
    _
  %s7 = ssub.s32 1, %s5
  %s8 = scalar_select 0, %s7, %s5
  $region1: #{bilstm_crf_forward.1} parent=0
    #allocation2 [shape = 'u8[57344]{0}', space=vmem, size = 0xe000, scoped, tag = 'input window, operand 0, single buffered']
    #allocation3 [shape = 's32[1]{0}', space=sflag, size = 0x4, scoped, tag = 'scoped memory for bilstm_crf_forward.1']
    %9 = vsyncpa [#allocation3], 0
    // Predicated region
    $region2: #{bilstm_crf_forward.1} parent=1 // pred_check
      _
    $region3: #{bilstm_crf_forward.1} parent=1 // pred_check_branch
      %11 = sbr.rel (0) target = $region5
    $region4: #{bilstm_crf_forward.1} parent=1 // pred_region
      %s13 = ssub.s32 1792, 1792
      %14 = vsyncadd [#allocation3], %s13
      %s15 = sshll.u32 [#allocation2], 4
      %s16 = int_to_ptr.vmem [resolvable:$true] %s15
      %21 = dma.hbm_to_vmem [thread:$0]  %s0, 1792, %s16, [#allocation3], 128, 128, 8
    $region5: #{bilstm_crf_forward.1} parent=1 // pred_fallthru
      _
    // Predicated region
    $region6: #{bilstm_crf_forward.1} parent=1 // pred_check
      _
    $region7: #{bilstm_crf_forward.1} parent=1 // pred_check_branch
      %23 = sbr.rel (0) target = $region9
    $region8: #{bilstm_crf_forward.1} parent=1 // pred_region
      _
    $region9: #{bilstm_crf_forward.1} parent=1 // pred_fallthru
      _
    // Predicated region
    $region10: #{bilstm_crf_forward.1} parent=1 // pred_check
      _
    $region11: #{bilstm_crf_forward.1} parent=1 // pred_check_branch
      %25 = sbr.rel (0) target = $region13
    $region12: #{bilstm_crf_forward.1} parent=1 // pred_region
      _
    $region13: #{bilstm_crf_forward.1} parent=1 // pred_fallthru
      _
    // Predicated region
    $region14: #{bilstm_crf_forward.1} parent=1 // pred_check
      _
    $region15: #{bilstm_crf_forward.1} parent=1 // pred_check_branch
      %27 = sbr.rel (0) target = $region17
    $region16: #{bilstm_crf_forward.1} parent=1 // pred_region
      _
    $region17: #{bilstm_crf_forward.1} parent=1 // pred_fallthru
      _
    // Predicated region
    $region18: #{bilstm_crf_forward.1} parent=1 // pred_check
      _
    $region19: #{bilstm_crf_forward.1} parent=1 // pred_check_branch
      %29 = sbr.rel (0) target = $region21
    $region20: #{bilstm_crf_forward.1} parent=1 // pred_region
      %30 = dma.done [#allocation3], 1792
    $region21: #{bilstm_crf_forward.1} parent=1 // pred_fallthru
      _
    %v31 = vld [vmem:[%s2] sm:$0xff]
    %v32 = vlaneseq
    %v33 = vand.u32 %v32, 127
    %34 = vset.pattern.permute.xlu0 0
    %35 = vperm.xlu0 %34, %v31
    %v36 = vpop.permute.xlu0 %35
    %vm37 = vcmp.eq.s32.totalorder %v33, %v36
    %v38 = vsel %vm37, 1, 0
    %v39 = vcvt.s32.f32 %v38
    %v40 = vld [vmem:[%s1] sm:$0xff]
    %v41 = vld [vmem:[%s1 + $0x8] sm:$0xff]
    %v42 = vld [vmem:[%s1 + $0x10] sm:$0xff]
    %v43 = vld [vmem:[%s1 + $0x18] sm:$0xff]
    %v44 = vld [vmem:[%s1 + $0x20] sm:$0xff]
    %v45 = vld [vmem:[%s1 + $0x28] sm:$0xff]
    %v46 = vld [vmem:[%s1 + $0x30] sm:$0x3]
    %vm47 = vcmask 408576
    %v49 = vsel %vm47, %v39, 0
    %vm51 = vcmask 1041408
    %v53 = vsel %vm51, %v46, 0
    %55 = vmatprep.subr.mxu0 0.0
    %56 = vmatpush1.msra.mxu0 0.0
    %57 = vmatprep.subr.mxu0 0.0
    %58 = vmatpush1.msra.mxu0 0.0
    %59 = vmatprep.subr.mxu0 0.0
    %60 = vmatpush1.msra.mxu0 0.0
    %61 = vmatprep.subr.mxu0 0.0
    %62 = vmatpush1.msra.mxu0 0.0
    %63 = vmatprep.subr.mxu0 0.0
    %64 = vmatpush1.msra.mxu0 0.0
    %65 = vmatprep.subr.mxu0 0.0
    %66 = vmatpush1.msra.mxu0 0.0
    %67 = vmatprep.subr.mxu0 0.0
    %68 = vmatpush1.msra.mxu0 0.0
    %69 = vmatprep.subr.mxu0 0.0
    %70 = vmatpush1.msra.mxu0 0.0
    %71 = vmatprep.subr.mxu0 0.0
    %72 = vmatpush1.msra.mxu0 0.0
    %73 = vmatprep.subr.mxu0 0.0
    %74 = vmatpush1.msra.mxu0 %v53
    %75 = vmatprep.subr.mxu0 0.0
    %76 = vmatpush1.msra.mxu0 %v45
    %77 = vmatprep.subr.mxu0 0.0
    %78 = vmatpush1.msra.mxu0 %v44
    %79 = vmatprep.subr.mxu0 0.0
    %80 = vmatpush1.msra.mxu0 %v43
    %81 = vmatprep.subr.mxu0 0.0
    %82 = vmatpush1.msra.mxu0 %v42
    %83 = vmatprep.subr.mxu0 0.0
    %84 = vmatpush1.msra.mxu0 %v41
    %85 = vmatprep.subr.mxu0 0.0
    %86 = vmatpush1.msra.mxu0 %v40
    %87 = vmatprep.subr.mxu0 0.0
    %88 = vmatpush2.msra.mxu0 0.0
    %89 = vmatprep.subr.mxu0 0.0
    %90 = vmatpush2.msra.mxu0 0.0
    %91 = vmatprep.subr.mxu0 0.0
    %92 = vmatpush2.msra.mxu0 0.0
    %93 = vmatprep.subr.mxu0 0.0
    %94 = vmatpush2.msra.mxu0 0.0
    %95 = vmatprep.subr.mxu0 0.0
    %96 = vmatpush2.msra.mxu0 0.0
    %97 = vmatprep.subr.mxu0 0.0
    %98 = vmatpush2.msra.mxu0 0.0
    %99 = vmatprep.subr.mxu0 0.0
    %100 = vmatpush2.msra.mxu0 0.0
    %101 = vmatprep.subr.mxu0 0.0
    %102 = vmatpush2.msra.mxu0 0.0
    %103 = vmatprep.subr.mxu0 0.0
    %104 = vmatpush2.msra.mxu0 0.0
    %105 = vmatprep.subr.mxu0 0.0
    %106 = vmatpush2.msra.mxu0 0.0
    %107 = vmatprep.subr.mxu0 0.0
    %108 = vmatpush2.msra.mxu0 0.0
    %109 = vmatprep.subr.mxu0 0.0
    %110 = vmatpush2.msra.mxu0 0.0
    %111 = vmatprep.subr.mxu0 0.0
    %112 = vmatpush2.msra.mxu0 0.0
    %113 = vmatprep.subr.mxu0 0.0
    %114 = vmatpush2.msra.mxu0 0.0
    %115 = vmatprep.subr.mxu0 0.0
    %116 = vmatpush2.msra.mxu0 0.0
    %117 = vmatprep.subr.mxu0 0.0
    %118 = vmatpush2.msra.mxu0 0.0
    %119 = vmatprep.mubr.f32.mxu0 0.0
    %120 = vmatmul.mubr.f32.gmra.mxu0 %v49
    %v121 = vpop.f32.mrf.mxu0
    %v122 = vadd.f32 0.0, %v121
    %v123 = vpop.f32.mrf.mxu0
    %124 = vdwg.mxu0
    %v125 = vld [vmem:[#allocation2] sm:$0xff]
    %v126 = vld [vmem:[#allocation2 + $0x8] sm:$0xff]
    %v127 = vld [vmem:[#allocation2 + $0x30] sm:$0x1]
    %v128 = vlaneseq
    %v129 = vshrl.u32 %v128, 7
    %v130 = vsub.s32 0, %v129
    %v131 = vrot.slane %v127, %v130
    %vm132 = vcmask 130048
    %v134 = vsel %vm132, %v122, 0
    %136 = vmatprep.subr.mxu0 0.0
    %137 = vmatpush1.msra.mxu0 0.0
    %138 = vmatprep.subr.mxu0 0.0
    %139 = vmatpush1.msra.mxu0 0.0
    %140 = vmatprep.subr.mxu0 0.0
    %141 = vmatpush1.msra.mxu0 0.0
    %142 = vmatprep.subr.mxu0 0.0
    %143 = vmatpush1.msra.mxu0 0.0
    %144 = vmatprep.subr.mxu0 0.0
    %145 = vmatpush1.msra.mxu0 0.0
    %146 = vmatprep.subr.mxu0 0.0
    %147 = vmatpush1.msra.mxu0 0.0
    %148 = vmatprep.subr.mxu0 0.0
    %149 = vmatpush1.msra.mxu0 0.0
    %150 = vmatprep.subr.mxu0 0.0
    %151 = vmatpush1.msra.mxu0 0.0
    %152 = vmatprep.subr.mxu0 0.0
    %153 = vmatpush1.msra.mxu0 0.0
    %154 = vmatprep.subr.mxu0 0.0
    %155 = vmatpush1.msra.mxu0 0.0
    %156 = vmatprep.subr.mxu0 0.0
    %157 = vmatpush1.msra.mxu0 0.0
    %158 = vmatprep.subr.mxu0 0.0
    %159 = vmatpush1.msra.mxu0 0.0
    %160 = vmatprep.subr.mxu0 0.0
    %161 = vmatpush1.msra.mxu0 0.0
    %162 = vmatprep.subr.mxu0 0.0
    %163 = vmatpush1.msra.mxu0 0.0
    %164 = vmatprep.subr.mxu0 0.0
    %165 = vmatpush1.msra.mxu0 %v126
    %166 = vmatprep.subr.mxu0 0.0
    %167 = vmatpush1.msra.mxu0 %v125
    %168 = vmatprep.subr.mxu0 0.0
    %169 = vmatpush2.msra.mxu0 0.0
    %170 = vmatprep.subr.mxu0 0.0
    %171 = vmatpush2.msra.mxu0 0.0
    %172 = vmatprep.subr.mxu0 0.0
    %173 = vmatpush2.msra.mxu0 0.0
    %174 = vmatprep.subr.mxu0 0.0
    %175 = vmatpush2.msra.mxu0 0.0
    %176 = vmatprep.subr.mxu0 0.0
    %177 = vmatpush2.msra.mxu0 0.0
    %178 = vmatprep.subr.mxu0 0.0
    %179 = vmatpush2.msra.mxu0 0.0
    %180 = vmatprep.subr.mxu0 0.0
    %181 = vmatpush2.msra.mxu0 0.0
    %182 = vmatprep.subr.mxu0 0.0
    %183 = vmatpush2.msra.mxu0 0.0
    %184 = vmatprep.subr.mxu0 0.0
    %185 = vmatpush2.msra.mxu0 0.0
    %186 = vmatprep.subr.mxu0 0.0
    %187 = vmatpush2.msra.mxu0 0.0
    %188 = vmatprep.subr.mxu0 0.0
    %189 = vmatpush2.msra.mxu0 0.0
    %190 = vmatprep.subr.mxu0 0.0
    %191 = vmatpush2.msra.mxu0 0.0
    %192 = vmatprep.subr.mxu0 0.0
    %193 = vmatpush2.msra.mxu0 0.0
    %194 = vmatprep.subr.mxu0 0.0
    %195 = vmatpush2.msra.mxu0 0.0
    %196 = vmatprep.subr.mxu0 0.0
    %197 = vmatpush2.msra.mxu0 0.0
    %198 = vmatprep.subr.mxu0 0.0
    %199 = vmatpush2.msra.mxu0 0.0
    %200 = vmatprep.mubr.f32.mxu0 0.0
    %201 = vmatmul.mubr.f32.gmra.mxu0 %v134
    %v202 = vpop.f32.mrf.mxu0
    %v203 = vadd.f32 %v131, %v202
    %v204 = vpop.f32.mrf.mxu0
    %205 = vdwg.mxu0
    %v206 = vld [vmem:[#allocation2 + $0x10] sm:$0xff]
    %v207 = vld [vmem:[#allocation2 + $0x18] sm:$0xff]
    %v208 = vld [vmem:[#allocation2 + $0x20] sm:$0xff]
    %v209 = vld [vmem:[#allocation2 + $0x28] sm:$0xff]
    %vm210 = vcmp.lt.s32.totalorder %v33, 0
    %v211 = vsub.s32 0, %v33
    %v212 = vsel %vm210, %v211, %v33
    %v213 = vshrl.u32 %v212, 5
    %v214 = vand.u32 %v212, 31
    %v215 = vsub.s32 0, %v214
    %v216 = vsel %vm210, %v215, %v214
    %vm217 = vcmp.ne.s32.totalorder %v216, 0
    %vm218 = vcmp.lt.s32.totalorder %v216, 0
    %vm219 = vmand %vm218, %vm217
    %v220 = vadd.s32 %v216, 32
    %v221 = vsel %vm219, %v220, %v216
    %vm222 = vcmp.lt.s32.totalorder %v221, 16
    %v223 = vld [vmem:[%s3] sm:$0x1]
    %v224 = vld [vmem:[%s3 + $0x1] sm:$0x1]
    %v226 = vrot.slane %v203, 7
    %v228 = vsel %vm222, %v203, %v226
    %vm229 = vcmask 261120
    %v231 = vsel %vm229, %v223, 0
    %233 = vmatprep.subr.mxu0 0.0
    %234 = vmatpush1.msra.mxu0 0.0
    %235 = vmatprep.subr.mxu0 0.0
    %236 = vmatpush1.msra.mxu0 0.0
    %237 = vmatprep.subr.mxu0 0.0
    %238 = vmatpush1.msra.mxu0 0.0
    %239 = vmatprep.subr.mxu0 0.0
    %240 = vmatpush1.msra.mxu0 0.0
    %241 = vmatprep.subr.mxu0 0.0
    %242 = vmatpush1.msra.mxu0 0.0
    %243 = vmatprep.subr.mxu0 0.0
    %244 = vmatpush1.msra.mxu0 0.0
    %245 = vmatprep.subr.mxu0 0.0
    %246 = vmatpush1.msra.mxu0 0.0
    %247 = vmatprep.subr.mxu0 0.0
    %248 = vmatpush1.msra.mxu0 0.0
    %249 = vmatprep.subr.mxu0 0.0
    %250 = vmatpush1.msra.mxu0 0.0
    %251 = vmatprep.subr.mxu0 0.0
    %252 = vmatpush1.msra.mxu0 0.0
    %253 = vmatprep.subr.mxu0 0.0
    %254 = vmatpush1.msra.mxu0 0.0
    %255 = vmatprep.subr.mxu0 0.0
    %256 = vmatpush1.msra.mxu0 0.0
    %257 = vmatprep.subr.mxu0 0.0
    %258 = vmatpush1.msra.mxu0 %v209
    %259 = vmatprep.subr.mxu0 0.0
    %260 = vmatpush1.msra.mxu0 %v208
    %261 = vmatprep.subr.mxu0 0.0
    %262 = vmatpush1.msra.mxu0 %v207
    %263 = vmatprep.subr.mxu0 0.0
    %264 = vmatpush1.msra.mxu0 %v206
    %265 = vmatprep.subr.mxu0 0.0
    %266 = vmatpush2.msra.mxu0 0.0
    %267 = vmatprep.subr.mxu0 0.0
    %268 = vmatpush2.msra.mxu0 0.0
    %269 = vmatprep.subr.mxu0 0.0
    %270 = vmatpush2.msra.mxu0 0.0
    %271 = vmatprep.subr.mxu0 0.0
    %272 = vmatpush2.msra.mxu0 0.0
    %273 = vmatprep.subr.mxu0 0.0
    %274 = vmatpush2.msra.mxu0 0.0
    %275 = vmatprep.subr.mxu0 0.0
    %276 = vmatpush2.msra.mxu0 0.0
    %277 = vmatprep.subr.mxu0 0.0
    %278 = vmatpush2.msra.mxu0 0.0
    %279 = vmatprep.subr.mxu0 0.0
    %280 = vmatpush2.msra.mxu0 0.0
    %281 = vmatprep.subr.mxu0 0.0
    %282 = vmatpush2.msra.mxu0 0.0
    %283 = vmatprep.subr.mxu0 0.0
    %284 = vmatpush2.msra.mxu0 0.0
    %285 = vmatprep.subr.mxu0 0.0
    %286 = vmatpush2.msra.mxu0 0.0
    %287 = vmatprep.subr.mxu0 0.0
    %288 = vmatpush2.msra.mxu0 0.0
    %289 = vmatprep.subr.mxu0 0.0
    %290 = vmatpush2.msra.mxu0 0.0
    %291 = vmatprep.subr.mxu0 0.0
    %292 = vmatpush2.msra.mxu0 0.0
    %293 = vmatprep.subr.mxu0 0.0
    %294 = vmatpush2.msra.mxu0 0.0
    %295 = vmatprep.subr.mxu0 0.0
    %296 = vmatpush2.msra.mxu0 0.0
    %297 = vmatprep.mubr.f32.mxu0 0.0
    %298 = vmatmul.mubr.f32.gmra.mxu0 %v231
    %v299 = vpop.f32.mrf.mxu0
    %v300 = vadd.f32 0.0, %v299
    %v301 = vpop.f32.mrf.mxu0
    %302 = vdwg.mxu0
    %v303 = vadd.f32 %v228, %v300
    %v304 = vxor.u32 %v303, 2147483648
    %v305 = vmul.f32 %v304, 1.442695
    %v306 = vpow.pop %v305
    %v307 = vadd.f32 %v306, 1.0
    %v308 = vrcp.pop %v307
    %v309 = vmul.f32 1.0, %v308
    %v310 = vtanh.pop %v303
    %312 = vrot.lane.b32.xlu0 %v224, 32
    %v313 = vpop.permute.xlu0 %312
    %v315 = vmul.f32 %v309, %v313
    %317 = vrot.lane.b32.xlu0 %v310, 64
    %v318 = vpop.permute.xlu0 %317
    %v320 = vmul.f32 %v309, %v318
    %322 = vrot.lane.b32.xlu0 %v320, 32
    %v323 = vpop.permute.xlu0 %322
    %v325 = vadd.f32 %v315, %v323
    %v326 = vtanh.pop %v325
    %328 = vrot.lane.b32.xlu0 %v326, 64
    %v329 = vpop.permute.xlu0 %328
    %v331 = vmul.f32 %v309, %v329
    %v332 = vrot.slane %v203, 5
    %v334 = vsel %vm222, %v203, %v332
    %336 = vrot.lane.b32.xlu0 %v331, 32
    %v337 = vpop.permute.xlu0 %336
    %v338 = vsel %vm229, %v337, 0
    %340 = vmatprep.subr.mxu0 0.0
    %341 = vmatpush1.msra.mxu0 0.0
    %342 = vmatprep.subr.mxu0 0.0
    %343 = vmatpush1.msra.mxu0 0.0
    %344 = vmatprep.subr.mxu0 0.0
    %345 = vmatpush1.msra.mxu0 0.0
    %346 = vmatprep.subr.mxu0 0.0
    %347 = vmatpush1.msra.mxu0 0.0
    %348 = vmatprep.subr.mxu0 0.0
    %349 = vmatpush1.msra.mxu0 0.0
    %350 = vmatprep.subr.mxu0 0.0
    %351 = vmatpush1.msra.mxu0 0.0
    %352 = vmatprep.subr.mxu0 0.0
    %353 = vmatpush1.msra.mxu0 0.0
    %354 = vmatprep.subr.mxu0 0.0
    %355 = vmatpush1.msra.mxu0 0.0
    %356 = vmatprep.subr.mxu0 0.0
    %357 = vmatpush1.msra.mxu0 0.0
    %358 = vmatprep.subr.mxu0 0.0
    %359 = vmatpush1.msra.mxu0 0.0
    %360 = vmatprep.subr.mxu0 0.0
    %361 = vmatpush1.msra.mxu0 0.0
    %362 = vmatprep.subr.mxu0 0.0
    %363 = vmatpush1.msra.mxu0 0.0
    %364 = vmatprep.subr.mxu0 0.0
    %365 = vmatpush1.msra.mxu0 %v209
    %366 = vmatprep.subr.mxu0 0.0
    %367 = vmatpush1.msra.mxu0 %v208
    %368 = vmatprep.subr.mxu0 0.0
    %369 = vmatpush1.msra.mxu0 %v207
    %370 = vmatprep.subr.mxu0 0.0
    %371 = vmatpush1.msra.mxu0 %v206
    %372 = vmatprep.subr.mxu0 0.0
    %373 = vmatpush2.msra.mxu0 0.0
    %374 = vmatprep.subr.mxu0 0.0
    %375 = vmatpush2.msra.mxu0 0.0
    %376 = vmatprep.subr.mxu0 0.0
    %377 = vmatpush2.msra.mxu0 0.0
    %378 = vmatprep.subr.mxu0 0.0
    %379 = vmatpush2.msra.mxu0 0.0
    %380 = vmatprep.subr.mxu0 0.0
    %381 = vmatpush2.msra.mxu0 0.0
    %382 = vmatprep.subr.mxu0 0.0
    %383 = vmatpush2.msra.mxu0 0.0
    %384 = vmatprep.subr.mxu0 0.0
    %385 = vmatpush2.msra.mxu0 0.0
    %386 = vmatprep.subr.mxu0 0.0
    %387 = vmatpush2.msra.mxu0 0.0
    %388 = vmatprep.subr.mxu0 0.0
    %389 = vmatpush2.msra.mxu0 0.0
    %390 = vmatprep.subr.mxu0 0.0
    %391 = vmatpush2.msra.mxu0 0.0
    %392 = vmatprep.subr.mxu0 0.0
    %393 = vmatpush2.msra.mxu0 0.0
    %394 = vmatprep.subr.mxu0 0.0
    %395 = vmatpush2.msra.mxu0 0.0
    %396 = vmatprep.subr.mxu0 0.0
    %397 = vmatpush2.msra.mxu0 0.0
    %398 = vmatprep.subr.mxu0 0.0
    %399 = vmatpush2.msra.mxu0 0.0
    %400 = vmatprep.subr.mxu0 0.0
    %401 = vmatpush2.msra.mxu0 0.0
    %402 = vmatprep.subr.mxu0 0.0
    %403 = vmatpush2.msra.mxu0 0.0
    %404 = vmatprep.mubr.f32.mxu0 0.0
    %405 = vmatmul.mubr.f32.gmra.mxu0 %v338
    %v406 = vpop.f32.mrf.mxu0
    %v407 = vadd.f32 0.0, %v406
    %v408 = vpop.f32.mrf.mxu0
    %409 = vdwg.mxu0
    %v411 = vrot.slane %v407, 7
    %v413 = vadd.f32 %v334, %v411
    %v414 = vxor.u32 %v413, 2147483648
    %v415 = vmul.f32 %v414, 1.442695
    %v416 = vpow.pop %v415
    %v417 = vadd.f32 %v416, 1.0
    %v418 = vrcp.pop %v417
    %v419 = vmul.f32 1.0, %v418
    %v420 = vtanh.pop %v413
    %v422 = vrot.slane %v325, 7
    %v424 = vmul.f32 %v419, %v422
    %426 = vrot.lane.b32.xlu0 %v420, 64
    %v427 = vpop.permute.xlu0 %426
    %v429 = vmul.f32 %v419, %v427
    %431 = vrot.lane.b32.xlu0 %v429, 32
    %v432 = vpop.permute.xlu0 %431
    %v434 = vadd.f32 %v424, %v432
    %v435 = vtanh.pop %v434
    %437 = vrot.lane.b32.xlu0 %v435, 64
    %v438 = vpop.permute.xlu0 %437
    %v440 = vmul.f32 %v419, %v438
    %v441 = vrot.slane %v203, 3
    %v443 = vsel %vm222, %v203, %v441
    %v445 = vrot.slane %v440, 1
    %446 = vrot.lane.b32.xlu0 %v445, 32
    %v447 = vpop.permute.xlu0 %446
    %v448 = vsel %vm229, %v447, 0
    %450 = vmatprep.subr.mxu0 0.0
    %451 = vmatpush1.msra.mxu0 0.0
    %452 = vmatprep.subr.mxu0 0.0
    %453 = vmatpush1.msra.mxu0 0.0
    %454 = vmatprep.subr.mxu0 0.0
    %455 = vmatpush1.msra.mxu0 0.0
    %456 = vmatprep.subr.mxu0 0.0
    %457 = vmatpush1.msra.mxu0 0.0
    %458 = vmatprep.subr.mxu0 0.0
    %459 = vmatpush1.msra.mxu0 0.0
    %460 = vmatprep.subr.mxu0 0.0
    %461 = vmatpush1.msra.mxu0 0.0
    %462 = vmatprep.subr.mxu0 0.0
    %463 = vmatpush1.msra.mxu0 0.0
    %464 = vmatprep.subr.mxu0 0.0
    %465 = vmatpush1.msra.mxu0 0.0
    %466 = vmatprep.subr.mxu0 0.0
    %467 = vmatpush1.msra.mxu0 0.0
    %468 = vmatprep.subr.mxu0 0.0
    %469 = vmatpush1.msra.mxu0 0.0
    %470 = vmatprep.subr.mxu0 0.0
    %471 = vmatpush1.msra.mxu0 0.0
    %472 = vmatprep.subr.mxu0 0.0
    %473 = vmatpush1.msra.mxu0 0.0
    %474 = vmatprep.subr.mxu0 0.0
    %475 = vmatpush1.msra.mxu0 %v209
    %476 = vmatprep.subr.mxu0 0.0
    %477 = vmatpush1.msra.mxu0 %v208
    %478 = vmatprep.subr.mxu0 0.0
    %479 = vmatpush1.msra.mxu0 %v207
    %480 = vmatprep.subr.mxu0 0.0
    %481 = vmatpush1.msra.mxu0 %v206
    %482 = vmatprep.subr.mxu0 0.0
    %483 = vmatpush2.msra.mxu0 0.0
    %484 = vmatprep.subr.mxu0 0.0
    %485 = vmatpush2.msra.mxu0 0.0
    %486 = vmatprep.subr.mxu0 0.0
    %487 = vmatpush2.msra.mxu0 0.0
    %488 = vmatprep.subr.mxu0 0.0
    %489 = vmatpush2.msra.mxu0 0.0
    %490 = vmatprep.subr.mxu0 0.0
    %491 = vmatpush2.msra.mxu0 0.0
    %492 = vmatprep.subr.mxu0 0.0
    %493 = vmatpush2.msra.mxu0 0.0
    %494 = vmatprep.subr.mxu0 0.0
    %495 = vmatpush2.msra.mxu0 0.0
    %496 = vmatprep.subr.mxu0 0.0
    %497 = vmatpush2.msra.mxu0 0.0
    %498 = vmatprep.subr.mxu0 0.0
    %499 = vmatpush2.msra.mxu0 0.0
    %500 = vmatprep.subr.mxu0 0.0
    %501 = vmatpush2.msra.mxu0 0.0
    %502 = vmatprep.subr.mxu0 0.0
    %503 = vmatpush2.msra.mxu0 0.0
    %504 = vmatprep.subr.mxu0 0.0
    %505 = vmatpush2.msra.mxu0 0.0
    %506 = vmatprep.subr.mxu0 0.0
    %507 = vmatpush2.msra.mxu0 0.0
    %508 = vmatprep.subr.mxu0 0.0
    %509 = vmatpush2.msra.mxu0 0.0
    %510 = vmatprep.subr.mxu0 0.0
    %511 = vmatpush2.msra.mxu0 0.0
    %512 = vmatprep.subr.mxu0 0.0
    %513 = vmatpush2.msra.mxu0 0.0
    %514 = vmatprep.mubr.f32.mxu0 0.0
    %515 = vmatmul.mubr.f32.gmra.mxu0 %v448
    %v516 = vpop.f32.mrf.mxu0
    %v517 = vadd.f32 0.0, %v516
    %v518 = vpop.f32.mrf.mxu0
    %519 = vdwg.mxu0
    %v521 = vrot.slane %v517, 6
    %v523 = vadd.f32 %v443, %v521
    %v524 = vxor.u32 %v523, 2147483648
    %v525 = vmul.f32 %v524, 1.442695
    %v526 = vpow.pop %v525
    %v527 = vadd.f32 %v526, 1.0
    %v528 = vrcp.pop %v527
    %v529 = vmul.f32 1.0, %v528
    %v530 = vtanh.pop %v523
    %v532 = vrot.slane %v434, 7
    %v534 = vmul.f32 %v529, %v532
    %536 = vrot.lane.b32.xlu0 %v530, 64
    %v537 = vpop.permute.xlu0 %536
    %v539 = vmul.f32 %v529, %v537
    %541 = vrot.lane.b32.xlu0 %v539, 32
    %v542 = vpop.permute.xlu0 %541
    %v544 = vadd.f32 %v534, %v542
    %v545 = vtanh.pop %v544
    %547 = vrot.lane.b32.xlu0 %v545, 64
    %v548 = vpop.permute.xlu0 %547
    %v550 = vmul.f32 %v529, %v548
    %v551 = vrot.slane %v203, 1
    %v553 = vsel %vm222, %v203, %v551
    %v555 = vrot.slane %v550, 2
    %556 = vrot.lane.b32.xlu0 %v555, 32
    %v557 = vpop.permute.xlu0 %556
    %v558 = vsel %vm229, %v557, 0
    %560 = vmatprep.subr.mxu0 0.0
    %561 = vmatpush1.msra.mxu0 0.0
    %562 = vmatprep.subr.mxu0 0.0
    %563 = vmatpush1.msra.mxu0 0.0
    %564 = vmatprep.subr.mxu0 0.0
    %565 = vmatpush1.msra.mxu0 0.0
    %566 = vmatprep.subr.mxu0 0.0
    %567 = vmatpush1.msra.mxu0 0.0
    %568 = vmatprep.subr.mxu0 0.0
    %569 = vmatpush1.msra.mxu0 0.0
    %570 = vmatprep.subr.mxu0 0.0
    %571 = vmatpush1.msra.mxu0 0.0
    %572 = vmatprep.subr.mxu0 0.0
    %573 = vmatpush1.msra.mxu0 0.0
    %574 = vmatprep.subr.mxu0 0.0
    %575 = vmatpush1.msra.mxu0 0.0
    %576 = vmatprep.subr.mxu0 0.0
    %577 = vmatpush1.msra.mxu0 0.0
    %578 = vmatprep.subr.mxu0 0.0
    %579 = vmatpush1.msra.mxu0 0.0
    %580 = vmatprep.subr.mxu0 0.0
    %581 = vmatpush1.msra.mxu0 0.0
    %582 = vmatprep.subr.mxu0 0.0
    %583 = vmatpush1.msra.mxu0 0.0
    %584 = vmatprep.subr.mxu0 0.0
    %585 = vmatpush1.msra.mxu0 %v209
    %586 = vmatprep.subr.mxu0 0.0
    %587 = vmatpush1.msra.mxu0 %v208
    %588 = vmatprep.subr.mxu0 0.0
    %589 = vmatpush1.msra.mxu0 %v207
    %590 = vmatprep.subr.mxu0 0.0
    %591 = vmatpush1.msra.mxu0 %v206
    %592 = vmatprep.subr.mxu0 0.0
    %593 = vmatpush2.msra.mxu0 0.0
    %594 = vmatprep.subr.mxu0 0.0
    %595 = vmatpush2.msra.mxu0 0.0
    %596 = vmatprep.subr.mxu0 0.0
    %597 = vmatpush2.msra.mxu0 0.0
    %598 = vmatprep.subr.mxu0 0.0
    %599 = vmatpush2.msra.mxu0 0.0
    %600 = vmatprep.subr.mxu0 0.0
    %601 = vmatpush2.msra.mxu0 0.0
    %602 = vmatprep.subr.mxu0 0.0
    %603 = vmatpush2.msra.mxu0 0.0
    %604 = vmatprep.subr.mxu0 0.0
    %605 = vmatpush2.msra.mxu0 0.0
    %606 = vmatprep.subr.mxu0 0.0
    %607 = vmatpush2.msra.mxu0 0.0
    %608 = vmatprep.subr.mxu0 0.0
    %609 = vmatpush2.msra.mxu0 0.0
    %610 = vmatprep.subr.mxu0 0.0
    %611 = vmatpush2.msra.mxu0 0.0
    %612 = vmatprep.subr.mxu0 0.0
    %613 = vmatpush2.msra.mxu0 0.0
    %614 = vmatprep.subr.mxu0 0.0
    %615 = vmatpush2.msra.mxu0 0.0
    %616 = vmatprep.subr.mxu0 0.0
    %617 = vmatpush2.msra.mxu0 0.0
    %618 = vmatprep.subr.mxu0 0.0
    %619 = vmatpush2.msra.mxu0 0.0
    %620 = vmatprep.subr.mxu0 0.0
    %621 = vmatpush2.msra.mxu0 0.0
    %622 = vmatprep.subr.mxu0 0.0
    %623 = vmatpush2.msra.mxu0 0.0
    %624 = vmatprep.mubr.f32.mxu0 0.0
    %625 = vmatmul.mubr.f32.gmra.mxu0 %v558
    %v626 = vpop.f32.mrf.mxu0
    %v627 = vadd.f32 0.0, %v626
    %v628 = vpop.f32.mrf.mxu0
    %629 = vdwg.mxu0
    %v631 = vrot.slane %v627, 5
    %v633 = vadd.f32 %v553, %v631
    %v634 = vxor.u32 %v633, 2147483648
    %v635 = vmul.f32 %v634, 1.442695
    %v636 = vpow.pop %v635
    %v637 = vadd.f32 %v636, 1.0
    %v638 = vrcp.pop %v637
    %v639 = vmul.f32 1.0, %v638
    %v640 = vtanh.pop %v633
    %v642 = vrot.slane %v544, 7
    %v644 = vmul.f32 %v639, %v642
    %646 = vrot.lane.b32.xlu0 %v640, 64
    %v647 = vpop.permute.xlu0 %646
    %v649 = vmul.f32 %v639, %v647
    %651 = vrot.lane.b32.xlu0 %v649, 32
    %v652 = vpop.permute.xlu0 %651
    %v654 = vadd.f32 %v644, %v652
    %v655 = vtanh.pop %v654
    %657 = vrot.lane.b32.xlu0 %v655, 64
    %v658 = vpop.permute.xlu0 %657
    %v660 = vmul.f32 %v639, %v658
    %v662 = vrot.slane %v660, 3
    %663 = vrot.lane.b32.xlu0 %v662, 32
    %v664 = vpop.permute.xlu0 %663
    %v665 = vsel %vm229, %v664, 0
    %667 = vmatprep.subr.mxu0 0.0
    %668 = vmatpush1.msra.mxu0 0.0
    %669 = vmatprep.subr.mxu0 0.0
    %670 = vmatpush1.msra.mxu0 0.0
    %671 = vmatprep.subr.mxu0 0.0
    %672 = vmatpush1.msra.mxu0 0.0
    %673 = vmatprep.subr.mxu0 0.0
    %674 = vmatpush1.msra.mxu0 0.0
    %675 = vmatprep.subr.mxu0 0.0
    %676 = vmatpush1.msra.mxu0 0.0
    %677 = vmatprep.subr.mxu0 0.0
    %678 = vmatpush1.msra.mxu0 0.0
    %679 = vmatprep.subr.mxu0 0.0
    %680 = vmatpush1.msra.mxu0 0.0
    %681 = vmatprep.subr.mxu0 0.0
    %682 = vmatpush1.msra.mxu0 0.0
    %683 = vmatprep.subr.mxu0 0.0
    %684 = vmatpush1.msra.mxu0 0.0
    %685 = vmatprep.subr.mxu0 0.0
    %686 = vmatpush1.msra.mxu0 0.0
    %687 = vmatprep.subr.mxu0 0.0
    %688 = vmatpush1.msra.mxu0 0.0
    %689 = vmatprep.subr.mxu0 0.0
    %690 = vmatpush1.msra.mxu0 0.0
    %691 = vmatprep.subr.mxu0 0.0
    %692 = vmatpush1.msra.mxu0 %v209
    %693 = vmatprep.subr.mxu0 0.0
    %694 = vmatpush1.msra.mxu0 %v208
    %695 = vmatprep.subr.mxu0 0.0
    %696 = vmatpush1.msra.mxu0 %v207
    %697 = vmatprep.subr.mxu0 0.0
    %698 = vmatpush1.msra.mxu0 %v206
    %699 = vmatprep.subr.mxu0 0.0
    %700 = vmatpush2.msra.mxu0 0.0
    %701 = vmatprep.subr.mxu0 0.0
    %702 = vmatpush2.msra.mxu0 0.0
    %703 = vmatprep.subr.mxu0 0.0
    %704 = vmatpush2.msra.mxu0 0.0
    %705 = vmatprep.subr.mxu0 0.0
    %706 = vmatpush2.msra.mxu0 0.0
    %707 = vmatprep.subr.mxu0 0.0
    %708 = vmatpush2.msra.mxu0 0.0
    %709 = vmatprep.subr.mxu0 0.0
    %710 = vmatpush2.msra.mxu0 0.0
    %711 = vmatprep.subr.mxu0 0.0
    %712 = vmatpush2.msra.mxu0 0.0
    %713 = vmatprep.subr.mxu0 0.0
    %714 = vmatpush2.msra.mxu0 0.0
    %715 = vmatprep.subr.mxu0 0.0
    %716 = vmatpush2.msra.mxu0 0.0
    %717 = vmatprep.subr.mxu0 0.0
    %718 = vmatpush2.msra.mxu0 0.0
    %719 = vmatprep.subr.mxu0 0.0
    %720 = vmatpush2.msra.mxu0 0.0
    %721 = vmatprep.subr.mxu0 0.0
    %722 = vmatpush2.msra.mxu0 0.0
    %723 = vmatprep.subr.mxu0 0.0
    %724 = vmatpush2.msra.mxu0 0.0
    %725 = vmatprep.subr.mxu0 0.0
    %726 = vmatpush2.msra.mxu0 0.0
    %727 = vmatprep.subr.mxu0 0.0
    %728 = vmatpush2.msra.mxu0 0.0
    %729 = vmatprep.subr.mxu0 0.0
    %730 = vmatpush2.msra.mxu0 0.0
    %731 = vmatprep.mubr.f32.mxu0 0.0
    %732 = vmatmul.mubr.f32.gmra.mxu0 %v665
    %v733 = vpop.f32.mrf.mxu0
    %v734 = vadd.f32 0.0, %v733
    %v735 = vpop.f32.mrf.mxu0
    %736 = vdwg.mxu0
    %v738 = vrot.slane %v734, 4
    %v740 = vadd.f32 %v228, %v738
    %v741 = vxor.u32 %v740, 2147483648
    %v742 = vmul.f32 %v741, 1.442695
    %v743 = vpow.pop %v742
    %v744 = vadd.f32 %v743, 1.0
    %v745 = vrcp.pop %v744
    %v746 = vmul.f32 1.0, %v745
    %v747 = vtanh.pop %v740
    %v749 = vrot.slane %v654, 7
    %v751 = vmul.f32 %v746, %v749
    %753 = vrot.lane.b32.xlu0 %v747, 64
    %v754 = vpop.permute.xlu0 %753
    %v756 = vmul.f32 %v746, %v754
    %758 = vrot.lane.b32.xlu0 %v756, 32
    %v759 = vpop.permute.xlu0 %758
    %v761 = vadd.f32 %v751, %v759
    %v762 = vtanh.pop %v761
    %764 = vrot.lane.b32.xlu0 %v762, 64
    %v765 = vpop.permute.xlu0 %764
    %v767 = vmul.f32 %v746, %v765
    %v769 = vrot.slane %v767, 4
    %770 = vrot.lane.b32.xlu0 %v769, 32
    %v771 = vpop.permute.xlu0 %770
    %v772 = vsel %vm229, %v771, 0
    %774 = vmatprep.subr.mxu0 0.0
    %775 = vmatpush1.msra.mxu0 0.0
    %776 = vmatprep.subr.mxu0 0.0
    %777 = vmatpush1.msra.mxu0 0.0
    %778 = vmatprep.subr.mxu0 0.0
    %779 = vmatpush1.msra.mxu0 0.0
    %780 = vmatprep.subr.mxu0 0.0
    %781 = vmatpush1.msra.mxu0 0.0
    %782 = vmatprep.subr.mxu0 0.0
    %783 = vmatpush1.msra.mxu0 0.0
    %784 = vmatprep.subr.mxu0 0.0
    %785 = vmatpush1.msra.mxu0 0.0
    %786 = vmatprep.subr.mxu0 0.0
    %787 = vmatpush1.msra.mxu0 0.0
    %788 = vmatprep.subr.mxu0 0.0
    %789 = vmatpush1.msra.mxu0 0.0
    %790 = vmatprep.subr.mxu0 0.0
    %791 = vmatpush1.msra.mxu0 0.0
    %792 = vmatprep.subr.mxu0 0.0
    %793 = vmatpush1.msra.mxu0 0.0
    %794 = vmatprep.subr.mxu0 0.0
    %795 = vmatpush1.msra.mxu0 0.0
    %796 = vmatprep.subr.mxu0 0.0
    %797 = vmatpush1.msra.mxu0 0.0
    %798 = vmatprep.subr.mxu0 0.0
    %799 = vmatpush1.msra.mxu0 %v209
    %800 = vmatprep.subr.mxu0 0.0
    %801 = vmatpush1.msra.mxu0 %v208
    %802 = vmatprep.subr.mxu0 0.0
    %803 = vmatpush1.msra.mxu0 %v207
    %804 = vmatprep.subr.mxu0 0.0
    %805 = vmatpush1.msra.mxu0 %v206
    %806 = vmatprep.subr.mxu0 0.0
    %807 = vmatpush2.msra.mxu0 0.0
    %808 = vmatprep.subr.mxu0 0.0
    %809 = vmatpush2.msra.mxu0 0.0
    %810 = vmatprep.subr.mxu0 0.0
    %811 = vmatpush2.msra.mxu0 0.0
    %812 = vmatprep.subr.mxu0 0.0
    %813 = vmatpush2.msra.mxu0 0.0
    %814 = vmatprep.subr.mxu0 0.0
    %815 = vmatpush2.msra.mxu0 0.0
    %816 = vmatprep.subr.mxu0 0.0
    %817 = vmatpush2.msra.mxu0 0.0
    %818 = vmatprep.subr.mxu0 0.0
    %819 = vmatpush2.msra.mxu0 0.0
    %820 = vmatprep.subr.mxu0 0.0
    %821 = vmatpush2.msra.mxu0 0.0
    %822 = vmatprep.subr.mxu0 0.0
    %823 = vmatpush2.msra.mxu0 0.0
    %824 = vmatprep.subr.mxu0 0.0
    %825 = vmatpush2.msra.mxu0 0.0
    %826 = vmatprep.subr.mxu0 0.0
    %827 = vmatpush2.msra.mxu0 0.0
    %828 = vmatprep.subr.mxu0 0.0
    %829 = vmatpush2.msra.mxu0 0.0
    %830 = vmatprep.subr.mxu0 0.0
    %831 = vmatpush2.msra.mxu0 0.0
    %832 = vmatprep.subr.mxu0 0.0
    %833 = vmatpush2.msra.mxu0 0.0
    %834 = vmatprep.subr.mxu0 0.0
    %835 = vmatpush2.msra.mxu0 0.0
    %836 = vmatprep.subr.mxu0 0.0
    %837 = vmatpush2.msra.mxu0 0.0
    %838 = vmatprep.mubr.f32.mxu0 0.0
    %839 = vmatmul.mubr.f32.gmra.mxu0 %v772
    %v840 = vpop.f32.mrf.mxu0
    %v841 = vadd.f32 0.0, %v840
    %v842 = vpop.f32.mrf.mxu0
    %843 = vdwg.mxu0
    %v845 = vrot.slane %v841, 3
    %v847 = vadd.f32 %v334, %v845
    %v848 = vxor.u32 %v847, 2147483648
    %v849 = vmul.f32 %v848, 1.442695
    %v850 = vpow.pop %v849
    %v851 = vadd.f32 %v850, 1.0
    %v852 = vrcp.pop %v851
    %v853 = vmul.f32 1.0, %v852
    %v854 = vtanh.pop %v847
    %v856 = vrot.slane %v761, 7
    %v858 = vmul.f32 %v853, %v856
    %860 = vrot.lane.b32.xlu0 %v854, 64
    %v861 = vpop.permute.xlu0 %860
    %v863 = vmul.f32 %v853, %v861
    %865 = vrot.lane.b32.xlu0 %v863, 32
    %v866 = vpop.permute.xlu0 %865
    %v868 = vadd.f32 %v858, %v866
    %v869 = vtanh.pop %v868
    %871 = vrot.lane.b32.xlu0 %v869, 64
    %v872 = vpop.permute.xlu0 %871
    %v874 = vmul.f32 %v853, %v872
    %v876 = vrot.slane %v874, 5
    %877 = vrot.lane.b32.xlu0 %v876, 32
    %v878 = vpop.permute.xlu0 %877
    %v879 = vsel %vm229, %v878, 0
    %881 = vmatprep.subr.mxu0 0.0
    %882 = vmatpush1.msra.mxu0 0.0
    %883 = vmatprep.subr.mxu0 0.0
    %884 = vmatpush1.msra.mxu0 0.0
    %885 = vmatprep.subr.mxu0 0.0
    %886 = vmatpush1.msra.mxu0 0.0
    %887 = vmatprep.subr.mxu0 0.0
    %888 = vmatpush1.msra.mxu0 0.0
    %889 = vmatprep.subr.mxu0 0.0
    %890 = vmatpush1.msra.mxu0 0.0
    %891 = vmatprep.subr.mxu0 0.0
    %892 = vmatpush1.msra.mxu0 0.0
    %893 = vmatprep.subr.mxu0 0.0
    %894 = vmatpush1.msra.mxu0 0.0
    %895 = vmatprep.subr.mxu0 0.0
    %896 = vmatpush1.msra.mxu0 0.0
    %897 = vmatprep.subr.mxu0 0.0
    %898 = vmatpush1.msra.mxu0 0.0
    %899 = vmatprep.subr.mxu0 0.0
    %900 = vmatpush1.msra.mxu0 0.0
    %901 = vmatprep.subr.mxu0 0.0
    %902 = vmatpush1.msra.mxu0 0.0
    %903 = vmatprep.subr.mxu0 0.0
    %904 = vmatpush1.msra.mxu0 0.0
    %905 = vmatprep.subr.mxu0 0.0
    %906 = vmatpush1.msra.mxu0 %v209
    %907 = vmatprep.subr.mxu0 0.0
    %908 = vmatpush1.msra.mxu0 %v208
    %909 = vmatprep.subr.mxu0 0.0
    %910 = vmatpush1.msra.mxu0 %v207
    %911 = vmatprep.subr.mxu0 0.0
    %912 = vmatpush1.msra.mxu0 %v206
    %913 = vmatprep.subr.mxu0 0.0
    %914 = vmatpush2.msra.mxu0 0.0
    %915 = vmatprep.subr.mxu0 0.0
    %916 = vmatpush2.msra.mxu0 0.0
    %917 = vmatprep.subr.mxu0 0.0
    %918 = vmatpush2.msra.mxu0 0.0
    %919 = vmatprep.subr.mxu0 0.0
    %920 = vmatpush2.msra.mxu0 0.0
    %921 = vmatprep.subr.mxu0 0.0
    %922 = vmatpush2.msra.mxu0 0.0
    %923 = vmatprep.subr.mxu0 0.0
    %924 = vmatpush2.msra.mxu0 0.0
    %925 = vmatprep.subr.mxu0 0.0
    %926 = vmatpush2.msra.mxu0 0.0
    %927 = vmatprep.subr.mxu0 0.0
    %928 = vmatpush2.msra.mxu0 0.0
    %929 = vmatprep.subr.mxu0 0.0
    %930 = vmatpush2.msra.mxu0 0.0
    %931 = vmatprep.subr.mxu0 0.0
    %932 = vmatpush2.msra.mxu0 0.0
    %933 = vmatprep.subr.mxu0 0.0
    %934 = vmatpush2.msra.mxu0 0.0
    %935 = vmatprep.subr.mxu0 0.0
    %936 = vmatpush2.msra.mxu0 0.0
    %937 = vmatprep.subr.mxu0 0.0
    %938 = vmatpush2.msra.mxu0 0.0
    %939 = vmatprep.subr.mxu0 0.0
    %940 = vmatpush2.msra.mxu0 0.0
    %941 = vmatprep.subr.mxu0 0.0
    %942 = vmatpush2.msra.mxu0 0.0
    %943 = vmatprep.subr.mxu0 0.0
    %944 = vmatpush2.msra.mxu0 0.0
    %945 = vmatprep.mubr.f32.mxu0 0.0
    %946 = vmatmul.mubr.f32.gmra.mxu0 %v879
    %v947 = vpop.f32.mrf.mxu0
    %v948 = vadd.f32 0.0, %v947
    %v949 = vpop.f32.mrf.mxu0
    %950 = vdwg.mxu0
    %v952 = vrot.slane %v948, 2
    %v954 = vadd.f32 %v443, %v952
    %v955 = vxor.u32 %v954, 2147483648
    %v956 = vmul.f32 %v955, 1.442695
    %v957 = vpow.pop %v956
    %v958 = vadd.f32 %v957, 1.0
    %v959 = vrcp.pop %v958
    %v960 = vmul.f32 1.0, %v959
    %v961 = vtanh.pop %v954
    %v963 = vrot.slane %v868, 7
    %v965 = vmul.f32 %v960, %v963
    %967 = vrot.lane.b32.xlu0 %v961, 64
    %v968 = vpop.permute.xlu0 %967
    %v970 = vmul.f32 %v960, %v968
    %972 = vrot.lane.b32.xlu0 %v970, 32
    %v973 = vpop.permute.xlu0 %972
    %v975 = vadd.f32 %v965, %v973
    %v976 = vtanh.pop %v975
    %978 = vrot.lane.b32.xlu0 %v976, 64
    %v979 = vpop.permute.xlu0 %978
    %v981 = vmul.f32 %v960, %v979
    %v983 = vrot.slane %v981, 6
    %984 = vrot.lane.b32.xlu0 %v983, 32
    %v985 = vpop.permute.xlu0 %984
    %v986 = vsel %vm229, %v985, 0
    %988 = vmatprep.subr.mxu0 0.0
    %989 = vmatpush1.msra.mxu0 0.0
    %990 = vmatprep.subr.mxu0 0.0
    %991 = vmatpush1.msra.mxu0 0.0
    %992 = vmatprep.subr.mxu0 0.0
    %993 = vmatpush1.msra.mxu0 0.0
    %994 = vmatprep.subr.mxu0 0.0
    %995 = vmatpush1.msra.mxu0 0.0
    %996 = vmatprep.subr.mxu0 0.0
    %997 = vmatpush1.msra.mxu0 0.0
    %998 = vmatprep.subr.mxu0 0.0
    %999 = vmatpush1.msra.mxu0 0.0
    %1000 = vmatprep.subr.mxu0 0.0
    %1001 = vmatpush1.msra.mxu0 0.0
    %1002 = vmatprep.subr.mxu0 0.0
    %1003 = vmatpush1.msra.mxu0 0.0
    %1004 = vmatprep.subr.mxu0 0.0
    %1005 = vmatpush1.msra.mxu0 0.0
    %1006 = vmatprep.subr.mxu0 0.0
    %1007 = vmatpush1.msra.mxu0 0.0
    %1008 = vmatprep.subr.mxu0 0.0
    %1009 = vmatpush1.msra.mxu0 0.0
    %1010 = vmatprep.subr.mxu0 0.0
    %1011 = vmatpush1.msra.mxu0 0.0
    %1012 = vmatprep.subr.mxu0 0.0
    %1013 = vmatpush1.msra.mxu0 %v209
    %1014 = vmatprep.subr.mxu0 0.0
    %1015 = vmatpush1.msra.mxu0 %v208
    %1016 = vmatprep.subr.mxu0 0.0
    %1017 = vmatpush1.msra.mxu0 %v207
    %1018 = vmatprep.subr.mxu0 0.0
    %1019 = vmatpush1.msra.mxu0 %v206
    %1020 = vmatprep.subr.mxu0 0.0
    %1021 = vmatpush2.msra.mxu0 0.0
    %1022 = vmatprep.subr.mxu0 0.0
    %1023 = vmatpush2.msra.mxu0 0.0
    %1024 = vmatprep.subr.mxu0 0.0
    %1025 = vmatpush2.msra.mxu0 0.0
    %1026 = vmatprep.subr.mxu0 0.0
    %1027 = vmatpush2.msra.mxu0 0.0
    %1028 = vmatprep.subr.mxu0 0.0
    %1029 = vmatpush2.msra.mxu0 0.0
    %1030 = vmatprep.subr.mxu0 0.0
    %1031 = vmatpush2.msra.mxu0 0.0
    %1032 = vmatprep.subr.mxu0 0.0
    %1033 = vmatpush2.msra.mxu0 0.0
    %1034 = vmatprep.subr.mxu0 0.0
    %1035 = vmatpush2.msra.mxu0 0.0
    %1036 = vmatprep.subr.mxu0 0.0
    %1037 = vmatpush2.msra.mxu0 0.0
    %1038 = vmatprep.subr.mxu0 0.0
    %1039 = vmatpush2.msra.mxu0 0.0
    %1040 = vmatprep.subr.mxu0 0.0
    %1041 = vmatpush2.msra.mxu0 0.0
    %1042 = vmatprep.subr.mxu0 0.0
    %1043 = vmatpush2.msra.mxu0 0.0
    %1044 = vmatprep.subr.mxu0 0.0
    %1045 = vmatpush2.msra.mxu0 0.0
    %1046 = vmatprep.subr.mxu0 0.0
    %1047 = vmatpush2.msra.mxu0 0.0
    %1048 = vmatprep.subr.mxu0 0.0
    %1049 = vmatpush2.msra.mxu0 0.0
    %1050 = vmatprep.subr.mxu0 0.0
    %1051 = vmatpush2.msra.mxu0 0.0
    %1052 = vmatprep.mubr.f32.mxu0 0.0
    %1053 = vmatmul.mubr.f32.gmra.mxu0 %v986
    %v1054 = vpop.f32.mrf.mxu0
    %v1055 = vadd.f32 0.0, %v1054
    %v1056 = vpop.f32.mrf.mxu0
    %1057 = vdwg.mxu0
    %v1059 = vrot.slane %v1055, 1
    %v1061 = vadd.f32 %v553, %v1059
    %v1062 = vxor.u32 %v1061, 2147483648
    %v1063 = vmul.f32 %v1062, 1.442695
    %v1064 = vpow.pop %v1063
    %v1065 = vadd.f32 %v1064, 1.0
    %v1066 = vrcp.pop %v1065
    %v1067 = vmul.f32 1.0, %v1066
    %v1068 = vtanh.pop %v1061
    %v1070 = vrot.slane %v975, 7
    %v1072 = vmul.f32 %v1067, %v1070
    %1074 = vrot.lane.b32.xlu0 %v1068, 64
    %v1075 = vpop.permute.xlu0 %1074
    %v1077 = vmul.f32 %v1067, %v1075
    %1079 = vrot.lane.b32.xlu0 %v1077, 32
    %v1080 = vpop.permute.xlu0 %1079
    %v1082 = vadd.f32 %v1072, %v1080
    %v1083 = vtanh.pop %v1082
    %1085 = vrot.lane.b32.xlu0 %v1083, 64
    %v1086 = vpop.permute.xlu0 %1085
    %v1088 = vmul.f32 %v1067, %v1086
    %vm1089 = vcmask 1040384
    %v1090 = vsel %vm1089, %v331, %v440
    %v1091 = vsel %vm51, %v1090, %v550
    %vm1092 = vcmask 1042432
    %v1093 = vsel %vm1092, %v1091, %v660
    %vm1094 = vcmask 1043456
    %v1095 = vsel %vm1094, %v1093, %v767
    %vm1096 = vcmask 1044480
    %v1097 = vsel %vm1096, %v1095, %v874
    %vm1098 = vcmask 1045504
    %v1099 = vsel %vm1098, %v1097, %v981
    %vm1100 = vcmask 1046528
    %v1101 = vsel %vm1100, %v1099, %v1088
    %v1103 = vrot.slane %v1088, 7
    %v1105 = vrot.slane %v981, 5
    %v1107 = vrot.slane %v874, 3
    %v1109 = vrot.slane %v767, 1
    %v1111 = vrot.slane %v660, 7
    %v1113 = vrot.slane %v550, 5
    %v1115 = vrot.slane %v440, 3
    %v1117 = vrot.slane %v331, 1
    %v1119 = vsel %vm1089, %v1103, %v1105
    %v1120 = vsel %vm51, %v1119, %v1107
    %v1121 = vsel %vm1092, %v1120, %v1109
    %v1122 = vsel %vm1094, %v1121, %v1111
    %v1123 = vsel %vm1096, %v1122, %v1113
    %v1124 = vsel %vm1098, %v1123, %v1115
    %v1125 = vsel %vm1100, %v1124, %v1117
    %v1126 = vld [vmem:[#allocation2 + $0x38] sm:$0xff]
    %v1127 = vld [vmem:[#allocation2 + $0x40] sm:$0xff]
    %v1128 = vld [vmem:[#allocation2 + $0x48] sm:$0xff]
    %v1129 = vld [vmem:[#allocation2 + $0x50] sm:$0xff]
    %v1130 = vld [vmem:[#allocation2 + $0x58] sm:$0x1]
    %1132 = vrot.lane.b32.xlu0 %v1125, 16
    %v1133 = vpop.permute.xlu0 %1132
    %v1134 = vsel %vm132, %v1133, 0
    %1136 = vmatprep.subr.mxu0 0.0
    %1137 = vmatpush1.msra.mxu0 0.0
    %1138 = vmatprep.subr.mxu0 0.0
    %1139 = vmatpush1.msra.mxu0 0.0
    %1140 = vmatprep.subr.mxu0 0.0
    %1141 = vmatpush1.msra.mxu0 0.0
    %1142 = vmatprep.subr.mxu0 0.0
    %1143 = vmatpush1.msra.mxu0 0.0
    %1144 = vmatprep.subr.mxu0 0.0
    %1145 = vmatpush1.msra.mxu0 0.0
    %1146 = vmatprep.subr.mxu0 0.0
    %1147 = vmatpush1.msra.mxu0 0.0
    %1148 = vmatprep.subr.mxu0 0.0
    %1149 = vmatpush1.msra.mxu0 0.0
    %1150 = vmatprep.subr.mxu0 0.0
    %1151 = vmatpush1.msra.mxu0 0.0
    %1152 = vmatprep.subr.mxu0 0.0
    %1153 = vmatpush1.msra.mxu0 0.0
    %1154 = vmatprep.subr.mxu0 0.0
    %1155 = vmatpush1.msra.mxu0 0.0
    %1156 = vmatprep.subr.mxu0 0.0
    %1157 = vmatpush1.msra.mxu0 0.0
    %1158 = vmatprep.subr.mxu0 0.0
    %1159 = vmatpush1.msra.mxu0 0.0
    %1160 = vmatprep.subr.mxu0 0.0
    %1161 = vmatpush1.msra.mxu0 0.0
    %1162 = vmatprep.subr.mxu0 0.0
    %1163 = vmatpush1.msra.mxu0 0.0
    %1164 = vmatprep.subr.mxu0 0.0
    %1165 = vmatpush1.msra.mxu0 %v1129
    %1166 = vmatprep.subr.mxu0 0.0
    %1167 = vmatpush1.msra.mxu0 %v1128
    %1168 = vmatprep.subr.mxu0 0.0
    %1169 = vmatpush2.msra.mxu0 0.0
    %1170 = vmatprep.subr.mxu0 0.0
    %1171 = vmatpush2.msra.mxu0 0.0
    %1172 = vmatprep.subr.mxu0 0.0
    %1173 = vmatpush2.msra.mxu0 0.0
    %1174 = vmatprep.subr.mxu0 0.0
    %1175 = vmatpush2.msra.mxu0 0.0
    %1176 = vmatprep.subr.mxu0 0.0
    %1177 = vmatpush2.msra.mxu0 0.0
    %1178 = vmatprep.subr.mxu0 0.0
    %1179 = vmatpush2.msra.mxu0 0.0
    %1180 = vmatprep.subr.mxu0 0.0
    %1181 = vmatpush2.msra.mxu0 0.0
    %1182 = vmatprep.subr.mxu0 0.0
    %1183 = vmatpush2.msra.mxu0 0.0
    %1184 = vmatprep.subr.mxu0 0.0
    %1185 = vmatpush2.msra.mxu0 0.0
    %1186 = vmatprep.subr.mxu0 0.0
    %1187 = vmatpush2.msra.mxu0 0.0
    %1188 = vmatprep.subr.mxu0 0.0
    %1189 = vmatpush2.msra.mxu0 0.0
    %1190 = vmatprep.subr.mxu0 0.0
    %1191 = vmatpush2.msra.mxu0 0.0
    %1192 = vmatprep.subr.mxu0 0.0
    %1193 = vmatpush2.msra.mxu0 0.0
    %1194 = vmatprep.subr.mxu0 0.0
    %1195 = vmatpush2.msra.mxu0 0.0
    %1196 = vmatprep.subr.mxu0 0.0
    %1197 = vmatpush2.msra.mxu0 0.0
    %1198 = vmatprep.subr.mxu0 0.0
    %1199 = vmatpush2.msra.mxu0 0.0
    %1200 = vmatprep.mubr.f32.mxu0 0.0
    %1201 = vmatmul.mubr.f32.gmra.mxu0 %v1134
    %v1202 = vpop.f32.mrf.mxu0
    %v1203 = vadd.f32 0.0, %v1202
    %v1204 = vpop.f32.mrf.mxu0
    %1205 = vdwg.mxu0
    %1207 = vrot.lane.b32.xlu0 %v1101, 32
    %v1208 = vpop.permute.xlu0 %1207
    %v1209 = vsel %vm132, %v1208, 0
    %1211 = vmatprep.subr.mxu0 0.0
    %1212 = vmatpush1.msra.mxu0 0.0
    %1213 = vmatprep.subr.mxu0 0.0
    %1214 = vmatpush1.msra.mxu0 0.0
    %1215 = vmatprep.subr.mxu0 0.0
    %1216 = vmatpush1.msra.mxu0 0.0
    %1217 = vmatprep.subr.mxu0 0.0
    %1218 = vmatpush1.msra.mxu0 0.0
    %1219 = vmatprep.subr.mxu0 0.0
    %1220 = vmatpush1.msra.mxu0 0.0
    %1221 = vmatprep.subr.mxu0 0.0
    %1222 = vmatpush1.msra.mxu0 0.0
    %1223 = vmatprep.subr.mxu0 0.0
    %1224 = vmatpush1.msra.mxu0 0.0
    %1225 = vmatprep.subr.mxu0 0.0
    %1226 = vmatpush1.msra.mxu0 0.0
    %1227 = vmatprep.subr.mxu0 0.0
    %1228 = vmatpush1.msra.mxu0 0.0
    %1229 = vmatprep.subr.mxu0 0.0
    %1230 = vmatpush1.msra.mxu0 0.0
    %1231 = vmatprep.subr.mxu0 0.0
    %1232 = vmatpush1.msra.mxu0 0.0
    %1233 = vmatprep.subr.mxu0 0.0
    %1234 = vmatpush1.msra.mxu0 0.0
    %1235 = vmatprep.subr.mxu0 0.0
    %1236 = vmatpush1.msra.mxu0 0.0
    %1237 = vmatprep.subr.mxu0 0.0
    %1238 = vmatpush1.msra.mxu0 0.0
    %1239 = vmatprep.subr.mxu0 0.0
    %1240 = vmatpush1.msra.mxu0 %v1127
    %1241 = vmatprep.subr.mxu0 0.0
    %1242 = vmatpush1.msra.mxu0 %v1126
    %1243 = vmatprep.subr.mxu0 0.0
    %1244 = vmatpush2.msra.mxu0 0.0
    %1245 = vmatprep.subr.mxu0 0.0
    %1246 = vmatpush2.msra.mxu0 0.0
    %1247 = vmatprep.subr.mxu0 0.0
    %1248 = vmatpush2.msra.mxu0 0.0
    %1249 = vmatprep.subr.mxu0 0.0
    %1250 = vmatpush2.msra.mxu0 0.0
    %1251 = vmatprep.subr.mxu0 0.0
    %1252 = vmatpush2.msra.mxu0 0.0
    %1253 = vmatprep.subr.mxu0 0.0
    %1254 = vmatpush2.msra.mxu0 0.0
    %1255 = vmatprep.subr.mxu0 0.0
    %1256 = vmatpush2.msra.mxu0 0.0
    %1257 = vmatprep.subr.mxu0 0.0
    %1258 = vmatpush2.msra.mxu0 0.0
    %1259 = vmatprep.subr.mxu0 0.0
    %1260 = vmatpush2.msra.mxu0 0.0
    %1261 = vmatprep.subr.mxu0 0.0
    %1262 = vmatpush2.msra.mxu0 0.0
    %1263 = vmatprep.subr.mxu0 0.0
    %1264 = vmatpush2.msra.mxu0 0.0
    %1265 = vmatprep.subr.mxu0 0.0
    %1266 = vmatpush2.msra.mxu0 0.0
    %1267 = vmatprep.subr.mxu0 0.0
    %1268 = vmatpush2.msra.mxu0 0.0
    %1269 = vmatprep.subr.mxu0 0.0
    %1270 = vmatpush2.msra.mxu0 0.0
    %1271 = vmatprep.subr.mxu0 0.0
    %1272 = vmatpush2.msra.mxu0 0.0
    %1273 = vmatprep.subr.mxu0 0.0
    %1274 = vmatpush2.msra.mxu0 0.0
    %1275 = vmatprep.mubr.f32.mxu0 0.0
    %1276 = vmatmul.mubr.f32.gmra.mxu0 %v1209
    %v1277 = vpop.f32.mrf.mxu0
    %v1278 = vadd.f32 %v1203, %v1277
    %v1279 = vpop.f32.mrf.mxu0
    %1280 = vdwg.mxu0
    %v1281 = vlaneseq
    %v1282 = vshrl.u32 %v1281, 7
    %v1283 = vsub.s32 0, %v1282
    %v1284 = vrot.slane %v1130, %v1283
    %v1285 = vadd.f32 %v1278, %v1284
    %1286 = vst [vmem:[%s4] sm:$0xff] %v1285
    %v1287 = vld [vmem:[#allocation2 + $0x60] sm:$0xff]
    %v1288 = vld [vmem:[#allocation2 + $0x68] sm:$0x3]
    %vm1289 = vcmp.eq.s32.totalorder %v33, 7
    %v1290 = vsel %vm1289, 0.0, -10000.0
    %v1291 = vadd.f32 %v1290, %v1287
    %v1292 = vadd.f32 %v1290, %v1288
    %vm1293 = vcmask 80896
    %v1294 = vsel %vm1293, %v1291, -inf
    %1295 = vmax.xlane.f32.xlu0 %v1294
    %v1296 = vpop.xlane.xlu0 %1295
    %vm1297 = vcmask 74752
    %v1298 = vsel %vm1297, %v1292, -inf
    %1299 = vmax.xlane.f32.xlu0 %v1298
    %v1300 = vpop.xlane.xlu0 %1299
    %v1302 = vlaneseq
    %v1303 = vshrl.u32 %v1302, 7
    %v1304 = vsub.s32 0, %v1303
    %v1305 = vrot.slane %v1285, %v1304
    %1307 = vbcast.lane.b32.xlu0 %v1305, 256
    %v1308 = vpop.permute.xlu0 %1307
    %s1310 = sor.u32 256, 8
    %1311 = vbcast.lane.b32.xlu0 %v1305, %s1310
    %v1312 = vpop.permute.xlu0 %1311
    %v1315 = vadd.f32 %v1296, %v1308
    %v1316 = vadd.f32 %v1300, %v1312
    %v1319 = vlaneseq
    %v1320 = vshrl.u32 %v1319, 7
    %v1321 = vsub.s32 0, %v1320
    %v1322 = vrot.slane %v1287, %v1321
    %1324 = vbcast.lane.b32.xlu0 %v1322, 256
    %v1325 = vpop.permute.xlu0 %1324
    %s1327 = sor.u32 256, 8
    %1328 = vbcast.lane.b32.xlu0 %v1322, %s1327
    %v1329 = vpop.permute.xlu0 %1328
    %v1330 = vlaneseq
    %v1331 = vshrl.u32 %v1330, 7
    %v1332 = vsub.s32 1, %v1331
    %v1333 = vrot.slane %v1287, %v1332
    %1335 = vbcast.lane.b32.xlu0 %v1333, 256
    %v1336 = vpop.permute.xlu0 %1335
    %s1338 = sor.u32 256, 8
    %1339 = vbcast.lane.b32.xlu0 %v1333, %s1338
    %v1340 = vpop.permute.xlu0 %1339
    %v1341 = vlaneseq
    %v1342 = vshrl.u32 %v1341, 7
    %v1343 = vsub.s32 2, %v1342
    %v1344 = vrot.slane %v1287, %v1343
    %1346 = vbcast.lane.b32.xlu0 %v1344, 256
    %v1347 = vpop.permute.xlu0 %1346
    %s1349 = sor.u32 256, 8
    %1350 = vbcast.lane.b32.xlu0 %v1344, %s1349
    %v1351 = vpop.permute.xlu0 %1350
    %v1352 = vlaneseq
    %v1353 = vshrl.u32 %v1352, 7
    %v1354 = vsub.s32 3, %v1353
    %v1355 = vrot.slane %v1287, %v1354
    %1357 = vbcast.lane.b32.xlu0 %v1355, 256
    %v1358 = vpop.permute.xlu0 %1357
    %s1360 = sor.u32 256, 8
    %1361 = vbcast.lane.b32.xlu0 %v1355, %s1360
    %v1362 = vpop.permute.xlu0 %1361
    %v1363 = vlaneseq
    %v1364 = vshrl.u32 %v1363, 7
    %v1365 = vsub.s32 4, %v1364
    %v1366 = vrot.slane %v1287, %v1365
    %1368 = vbcast.lane.b32.xlu0 %v1366, 256
    %v1369 = vpop.permute.xlu0 %1368
    %s1371 = sor.u32 256, 8
    %1372 = vbcast.lane.b32.xlu0 %v1366, %s1371
    %v1373 = vpop.permute.xlu0 %1372
    %v1374 = vlaneseq
    %v1375 = vshrl.u32 %v1374, 7
    %v1376 = vsub.s32 5, %v1375
    %v1377 = vrot.slane %v1287, %v1376
    %1379 = vbcast.lane.b32.xlu0 %v1377, 256
    %v1380 = vpop.permute.xlu0 %1379
    %s1382 = sor.u32 256, 8
    %1383 = vbcast.lane.b32.xlu0 %v1377, %s1382
    %v1384 = vpop.permute.xlu0 %1383
    %v1385 = vlaneseq
    %v1386 = vshrl.u32 %v1385, 7
    %v1387 = vsub.s32 6, %v1386
    %v1388 = vrot.slane %v1287, %v1387
    %1390 = vbcast.lane.b32.xlu0 %v1388, 256
    %v1391 = vpop.permute.xlu0 %1390
    %s1393 = sor.u32 256, 8
    %1394 = vbcast.lane.b32.xlu0 %v1388, %s1393
    %v1395 = vpop.permute.xlu0 %1394
    %v1396 = vlaneseq
    %v1397 = vshrl.u32 %v1396, 7
    %v1398 = vsub.s32 7, %v1397
    %v1399 = vrot.slane %v1287, %v1398
    %1401 = vbcast.lane.b32.xlu0 %v1399, 256
    %v1402 = vpop.permute.xlu0 %1401
    %s1404 = sor.u32 256, 8
    %1405 = vbcast.lane.b32.xlu0 %v1399, %s1404
    %v1406 = vpop.permute.xlu0 %1405
    %v1407 = vlaneseq
    %v1408 = vshrl.u32 %v1407, 7
    %v1409 = vsub.s32 0, %v1408
    %v1410 = vrot.slane %v1288, %v1409
    %1412 = vbcast.lane.b32.xlu0 %v1410, 256
    %v1413 = vpop.permute.xlu0 %1412
    %s1415 = sor.u32 256, 8
    %1416 = vbcast.lane.b32.xlu0 %v1410, %s1415
    %v1417 = vpop.permute.xlu0 %1416
    %v1418 = vlaneseq
    %v1419 = vshrl.u32 %v1418, 7
    %v1420 = vsub.s32 1, %v1419
    %v1421 = vrot.slane %v1288, %v1420
    %1423 = vbcast.lane.b32.xlu0 %v1421, 256
    %v1424 = vpop.permute.xlu0 %1423
    %s1426 = sor.u32 256, 8
    %1427 = vbcast.lane.b32.xlu0 %v1421, %s1426
    %v1428 = vpop.permute.xlu0 %1427
    %v1449 = vadd.f32 %v1315, %v1325
    %v1450 = vadd.f32 %v1316, %v1329
    %v1451 = vadd.f32 %v1315, %v1336
    %v1452 = vadd.f32 %v1316, %v1340
    %v1453 = vadd.f32 %v1315, %v1347
    %v1454 = vadd.f32 %v1316, %v1351
    %v1455 = vadd.f32 %v1315, %v1358
    %v1456 = vadd.f32 %v1316, %v1362
    %v1457 = vadd.f32 %v1315, %v1369
    %v1458 = vadd.f32 %v1316, %v1373
    %v1459 = vadd.f32 %v1315, %v1380
    %v1460 = vadd.f32 %v1316, %v1384
    %v1461 = vadd.f32 %v1315, %v1391
    %v1462 = vadd.f32 %v1316, %v1395
    %v1463 = vadd.f32 %v1315, %v1402
    %v1464 = vadd.f32 %v1316, %v1406
    %v1465 = vadd.f32 %v1315, %v1413
    %v1466 = vadd.f32 %v1316, %v1417
    %v1467 = vadd.f32 %v1315, %v1424
    %v1468 = vadd.f32 %v1316, %v1428
    %1489 = vset.pattern.permute.xlu0 0
    %1490 = vperm.xlu0 %1489, %v1449
    %v1491 = vpop.permute.xlu0 %1490
    %1492 = vset.pattern.permute.xlu0 0
    %1493 = vperm.xlu0 %1492, %v1450
    %v1494 = vpop.permute.xlu0 %1493
    %1495 = vset.pattern.permute.xlu0 0
    %1496 = vperm.xlu0 %1495, %v1451
    %v1497 = vpop.permute.xlu0 %1496
    %1498 = vset.pattern.permute.xlu0 0
    %1499 = vperm.xlu0 %1498, %v1452
    %v1500 = vpop.permute.xlu0 %1499
    %1501 = vset.pattern.permute.xlu0 0
    %1502 = vperm.xlu0 %1501, %v1453
    %v1503 = vpop.permute.xlu0 %1502
    %1504 = vset.pattern.permute.xlu0 0
    %1505 = vperm.xlu0 %1504, %v1454
    %v1506 = vpop.permute.xlu0 %1505
    %1507 = vset.pattern.permute.xlu0 0
    %1508 = vperm.xlu0 %1507, %v1455
    %v1509 = vpop.permute.xlu0 %1508
    %1510 = vset.pattern.permute.xlu0 0
    %1511 = vperm.xlu0 %1510, %v1456
    %v1512 = vpop.permute.xlu0 %1511
    %1513 = vset.pattern.permute.xlu0 0
    %1514 = vperm.xlu0 %1513, %v1457
    %v1515 = vpop.permute.xlu0 %1514
    %1516 = vset.pattern.permute.xlu0 0
    %1517 = vperm.xlu0 %1516, %v1458
    %v1518 = vpop.permute.xlu0 %1517
    %1519 = vset.pattern.permute.xlu0 0
    %1520 = vperm.xlu0 %1519, %v1459
    %v1521 = vpop.permute.xlu0 %1520
    %1522 = vset.pattern.permute.xlu0 0
    %1523 = vperm.xlu0 %1522, %v1460
    %v1524 = vpop.permute.xlu0 %1523
    %1525 = vset.pattern.permute.xlu0 0
    %1526 = vperm.xlu0 %1525, %v1461
    %v1527 = vpop.permute.xlu0 %1526
    %1528 = vset.pattern.permute.xlu0 0
    %1529 = vperm.xlu0 %1528, %v1462
    %v1530 = vpop.permute.xlu0 %1529
    %1531 = vset.pattern.permute.xlu0 0
    %1532 = vperm.xlu0 %1531, %v1463
    %v1533 = vpop.permute.xlu0 %1532
    %1534 = vset.pattern.permute.xlu0 0
    %1535 = vperm.xlu0 %1534, %v1464
    %v1536 = vpop.permute.xlu0 %1535
    %1537 = vset.pattern.permute.xlu0 0
    %1538 = vperm.xlu0 %1537, %v1465
    %v1539 = vpop.permute.xlu0 %1538
    %1540 = vset.pattern.permute.xlu0 0
    %1541 = vperm.xlu0 %1540, %v1466
    %v1542 = vpop.permute.xlu0 %1541
    %1543 = vset.pattern.permute.xlu0 0
    %1544 = vperm.xlu0 %1543, %v1467
    %v1545 = vpop.permute.xlu0 %1544
    %1546 = vset.pattern.permute.xlu0 0
    %1547 = vperm.xlu0 %1546, %v1468
    %v1548 = vpop.permute.xlu0 %1547
    %v1549 = vlaneseq
    %v1550 = vshrl.u32 %v1549, 7
    %v1551 = vsub.s32 %v33, %v1550
    %v1552 = vrot.slane %v1491, %v1551
    %v1553 = vadd.s32 %v33, 4294967288
    %v1554 = vlaneseq
    %v1555 = vshrl.u32 %v1554, 7
    %v1556 = vsub.s32 %v1553, %v1555
    %v1557 = vrot.slane %v1494, %v1556
    %vm1558 = vcmask 130112
    %v1559 = vsel %vm1558, %v1557, %v1552
    %v1560 = vlaneseq
    %v1561 = vshrl.u32 %v1560, 7
    %v1562 = vsub.s32 %v33, %v1561
    %v1563 = vrot.slane %v1497, %v1562
    %v1564 = vlaneseq
    %v1565 = vshrl.u32 %v1564, 7
    %v1566 = vsub.s32 %v1553, %v1565
    %v1567 = vrot.slane %v1500, %v1566
    %v1568 = vsel %vm1558, %v1567, %v1563
    %v1569 = vlaneseq
    %v1570 = vshrl.u32 %v1569, 7
    %v1571 = vsub.s32 %v33, %v1570
    %v1572 = vrot.slane %v1503, %v1571
    %v1573 = vlaneseq
    %v1574 = vshrl.u32 %v1573, 7
    %v1575 = vsub.s32 %v1553, %v1574
    %v1576 = vrot.slane %v1506, %v1575
    %v1577 = vsel %vm1558, %v1576, %v1572
    %v1578 = vlaneseq
    %v1579 = vshrl.u32 %v1578, 7
    %v1580 = vsub.s32 %v33, %v1579
    %v1581 = vrot.slane %v1509, %v1580
    %v1582 = vlaneseq
    %v1583 = vshrl.u32 %v1582, 7
    %v1584 = vsub.s32 %v1553, %v1583
    %v1585 = vrot.slane %v1512, %v1584
    %v1586 = vsel %vm1558, %v1585, %v1581
    %v1587 = vlaneseq
    %v1588 = vshrl.u32 %v1587, 7
    %v1589 = vsub.s32 %v33, %v1588
    %v1590 = vrot.slane %v1515, %v1589
    %v1591 = vlaneseq
    %v1592 = vshrl.u32 %v1591, 7
    %v1593 = vsub.s32 %v1553, %v1592
    %v1594 = vrot.slane %v1518, %v1593
    %v1595 = vsel %vm1558, %v1594, %v1590
    %v1596 = vlaneseq
    %v1597 = vshrl.u32 %v1596, 7
    %v1598 = vsub.s32 %v33, %v1597
    %v1599 = vrot.slane %v1521, %v1598
    %v1600 = vlaneseq
    %v1601 = vshrl.u32 %v1600, 7
    %v1602 = vsub.s32 %v1553, %v1601
    %v1603 = vrot.slane %v1524, %v1602
    %v1604 = vsel %vm1558, %v1603, %v1599
    %v1605 = vlaneseq
    %v1606 = vshrl.u32 %v1605, 7
    %v1607 = vsub.s32 %v33, %v1606
    %v1608 = vrot.slane %v1527, %v1607
    %v1609 = vlaneseq
    %v1610 = vshrl.u32 %v1609, 7
    %v1611 = vsub.s32 %v1553, %v1610
    %v1612 = vrot.slane %v1530, %v1611
    %v1613 = vsel %vm1558, %v1612, %v1608
    %v1614 = vlaneseq
    %v1615 = vshrl.u32 %v1614, 7
    %v1616 = vsub.s32 %v33, %v1615
    %v1617 = vrot.slane %v1533, %v1616
    %v1618 = vlaneseq
    %v1619 = vshrl.u32 %v1618, 7
    %v1620 = vsub.s32 %v1553, %v1619
    %v1621 = vrot.slane %v1536, %v1620
    %v1622 = vsel %vm1558, %v1621, %v1617
    %v1623 = vlaneseq
    %v1624 = vshrl.u32 %v1623, 7
    %v1625 = vsub.s32 %v33, %v1624
    %v1626 = vrot.slane %v1539, %v1625
    %v1627 = vlaneseq
    %v1628 = vshrl.u32 %v1627, 7
    %v1629 = vsub.s32 %v1553, %v1628
    %v1630 = vrot.slane %v1542, %v1629
    %v1631 = vsel %vm1558, %v1630, %v1626
    %v1632 = vlaneseq
    %v1633 = vshrl.u32 %v1632, 7
    %v1634 = vsub.s32 %v33, %v1633
    %v1635 = vrot.slane %v1545, %v1634
    %v1636 = vlaneseq
    %v1637 = vshrl.u32 %v1636, 7
    %v1638 = vsub.s32 %v1553, %v1637
    %v1639 = vrot.slane %v1548, %v1638
    %v1640 = vsel %vm1558, %v1639, %v1635
    %vm1641 = vcmask 1041409
    %v1642 = vsel %vm1641, %v1568, %v1559
    %vm1643 = vcmask 1042434
    %v1644 = vsel %vm1643, %v1577, %v1642
    %vm1645 = vcmask 1043459
    %v1646 = vsel %vm1645, %v1586, %v1644
    %vm1647 = vcmask 1044484
    %v1648 = vsel %vm1647, %v1595, %v1646
    %vm1649 = vcmask 1045509
    %v1650 = vsel %vm1649, %v1604, %v1648
    %vm1651 = vcmask 1046534
    %v1652 = vsel %vm1651, %v1613, %v1650
    %vm1653 = vcmask 1047559
    %v1654 = vsel %vm1653, %v1622, %v1652
    %v1655 = vsel %vm1641, %v1640, %v1631
    %v1658 = vsel %vm1293, %v1654, -inf
    %1659 = vmax.xlane.f32.xlu0 %v1658
    %v1660 = vpop.xlane.xlu0 %1659
    %v1661 = vsel %vm1297, %v1655, -inf
    %1662 = vmax.xlane.f32.xlu0 %v1661
    %v1663 = vpop.xlane.xlu0 %1662
    %v1666 = vlaneseq
    %v1667 = vshrl.u32 %v1666, 7
    %v1668 = vsub.s32 0, %v1667
    %v1669 = vrot.slane %v1660, %v1668
    %v1670 = vlaneseq
    %v1671 = vshrl.u32 %v1670, 7
    %v1672 = vsub.s32 1, %v1671
    %v1673 = vrot.slane %v1660, %v1672
    %v1674 = vlaneseq
    %v1675 = vshrl.u32 %v1674, 7
    %v1676 = vsub.s32 2, %v1675
    %v1677 = vrot.slane %v1660, %v1676
    %v1678 = vlaneseq
    %v1679 = vshrl.u32 %v1678, 7
    %v1680 = vsub.s32 3, %v1679
    %v1681 = vrot.slane %v1660, %v1680
    %v1682 = vlaneseq
    %v1683 = vshrl.u32 %v1682, 7
    %v1684 = vsub.s32 4, %v1683
    %v1685 = vrot.slane %v1660, %v1684
    %v1686 = vlaneseq
    %v1687 = vshrl.u32 %v1686, 7
    %v1688 = vsub.s32 5, %v1687
    %v1689 = vrot.slane %v1660, %v1688
    %v1690 = vlaneseq
    %v1691 = vshrl.u32 %v1690, 7
    %v1692 = vsub.s32 6, %v1691
    %v1693 = vrot.slane %v1660, %v1692
    %v1694 = vlaneseq
    %v1695 = vshrl.u32 %v1694, 7
    %v1696 = vsub.s32 7, %v1695
    %v1697 = vrot.slane %v1660, %v1696
    %v1698 = vlaneseq
    %v1699 = vshrl.u32 %v1698, 7
    %v1700 = vsub.s32 0, %v1699
    %v1701 = vrot.slane %v1663, %v1700
    %v1702 = vlaneseq
    %v1703 = vshrl.u32 %v1702, 7
    %v1704 = vsub.s32 1, %v1703
    %v1705 = vrot.slane %v1663, %v1704
    %vm1716 = vcmp.eq.f32.partialorder %v1449, %v1669
    %vm1717 = vcmp.eq.f32.partialorder %v1450, %v1669
    %vm1718 = vcmp.eq.f32.partialorder %v1451, %v1673
    %vm1719 = vcmp.eq.f32.partialorder %v1452, %v1673
    %vm1720 = vcmp.eq.f32.partialorder %v1453, %v1677
    %vm1721 = vcmp.eq.f32.partialorder %v1454, %v1677
    %vm1722 = vcmp.eq.f32.partialorder %v1455, %v1681
    %vm1723 = vcmp.eq.f32.partialorder %v1456, %v1681
    %vm1724 = vcmp.eq.f32.partialorder %v1457, %v1685
    %vm1725 = vcmp.eq.f32.partialorder %v1458, %v1685
    %vm1726 = vcmp.eq.f32.partialorder %v1459, %v1689
    %vm1727 = vcmp.eq.f32.partialorder %v1460, %v1689
    %vm1728 = vcmp.eq.f32.partialorder %v1461, %v1693
    %vm1729 = vcmp.eq.f32.partialorder %v1462, %v1693
    %vm1730 = vcmp.eq.f32.partialorder %v1463, %v1697
    %vm1731 = vcmp.eq.f32.partialorder %v1464, %v1697
    %vm1732 = vcmp.eq.f32.partialorder %v1465, %v1701
    %vm1733 = vcmp.eq.f32.partialorder %v1466, %v1701
    %vm1734 = vcmp.eq.f32.partialorder %v1467, %v1705
    %vm1735 = vcmp.eq.f32.partialorder %v1468, %v1705
    %1737 = vbcast.lane.b32.xlu0 %v33, 256
    %v1738 = vpop.permute.xlu0 %1737
    %s1740 = sor.u32 256, 8
    %1741 = vbcast.lane.b32.xlu0 %v33, %s1740
    %v1742 = vpop.permute.xlu0 %1741
    %v1743 = vsel %vm1716, %v1738, 10
    %v1744 = vsel %vm1717, %v1742, 10
    %v1745 = vsel %vm1718, %v1738, 10
    %v1746 = vsel %vm1719, %v1742, 10
    %v1747 = vsel %vm1720, %v1738, 10
    %v1748 = vsel %vm1721, %v1742, 10
    %v1749 = vsel %vm1722, %v1738, 10
    %v1750 = vsel %vm1723, %v1742, 10
    %v1751 = vsel %vm1724, %v1738, 10
    %v1752 = vsel %vm1725, %v1742, 10
    %v1753 = vsel %vm1726, %v1738, 10
    %v1754 = vsel %vm1727, %v1742, 10
    %v1755 = vsel %vm1728, %v1738, 10
    %v1756 = vsel %vm1729, %v1742, 10
    %v1757 = vsel %vm1730, %v1738, 10
    %v1758 = vsel %vm1731, %v1742, 10
    %v1759 = vsel %vm1732, %v1738, 10
    %v1760 = vsel %vm1733, %v1742, 10
    %v1761 = vsel %vm1734, %v1738, 10
    %v1762 = vsel %vm1735, %v1742, 10
    %1763 = vset.pattern.permute.xlu0 0
    %1764 = vperm.xlu0 %1763, %v1743
    %v1765 = vpop.permute.xlu0 %1764
    %1766 = vset.pattern.permute.xlu0 0
    %1767 = vperm.xlu0 %1766, %v1744
    %v1768 = vpop.permute.xlu0 %1767
    %1769 = vset.pattern.permute.xlu0 0
    %1770 = vperm.xlu0 %1769, %v1745
    %v1771 = vpop.permute.xlu0 %1770
    %1772 = vset.pattern.permute.xlu0 0
    %1773 = vperm.xlu0 %1772, %v1746
    %v1774 = vpop.permute.xlu0 %1773
    %1775 = vset.pattern.permute.xlu0 0
    %1776 = vperm.xlu0 %1775, %v1747
    %v1777 = vpop.permute.xlu0 %1776
    %1778 = vset.pattern.permute.xlu0 0
    %1779 = vperm.xlu0 %1778, %v1748
    %v1780 = vpop.permute.xlu0 %1779
    %1781 = vset.pattern.permute.xlu0 0
    %1782 = vperm.xlu0 %1781, %v1749
    %v1783 = vpop.permute.xlu0 %1782
    %1784 = vset.pattern.permute.xlu0 0
    %1785 = vperm.xlu0 %1784, %v1750
    %v1786 = vpop.permute.xlu0 %1785
    %1787 = vset.pattern.permute.xlu0 0
    %1788 = vperm.xlu0 %1787, %v1751
    %v1789 = vpop.permute.xlu0 %1788
    %1790 = vset.pattern.permute.xlu0 0
    %1791 = vperm.xlu0 %1790, %v1752
    %v1792 = vpop.permute.xlu0 %1791
    %1793 = vset.pattern.permute.xlu0 0
    %1794 = vperm.xlu0 %1793, %v1753
    %v1795 = vpop.permute.xlu0 %1794
    %1796 = vset.pattern.permute.xlu0 0
    %1797 = vperm.xlu0 %1796, %v1754
    %v1798 = vpop.permute.xlu0 %1797
    %1799 = vset.pattern.permute.xlu0 0
    %1800 = vperm.xlu0 %1799, %v1755
    %v1801 = vpop.permute.xlu0 %1800
    %1802 = vset.pattern.permute.xlu0 0
    %1803 = vperm.xlu0 %1802, %v1756
    %v1804 = vpop.permute.xlu0 %1803
    %1805 = vset.pattern.permute.xlu0 0
    %1806 = vperm.xlu0 %1805, %v1757
    %v1807 = vpop.permute.xlu0 %1806
    %1808 = vset.pattern.permute.xlu0 0
    %1809 = vperm.xlu0 %1808, %v1758
    %v1810 = vpop.permute.xlu0 %1809
    %1811 = vset.pattern.permute.xlu0 0
    %1812 = vperm.xlu0 %1811, %v1759
    %v1813 = vpop.permute.xlu0 %1812
    %1814 = vset.pattern.permute.xlu0 0
    %1815 = vperm.xlu0 %1814, %v1760
    %v1816 = vpop.permute.xlu0 %1815
    %1817 = vset.pattern.permute.xlu0 0
    %1818 = vperm.xlu0 %1817, %v1761
    %v1819 = vpop.permute.xlu0 %1818
    %1820 = vset.pattern.permute.xlu0 0
    %1821 = vperm.xlu0 %1820, %v1762
    %v1822 = vpop.permute.xlu0 %1821
    %v1823 = vlaneseq
    %v1824 = vshrl.u32 %v1823, 7
    %v1825 = vsub.s32 %v33, %v1824
    %v1826 = vrot.slane %v1765, %v1825
    %v1827 = vlaneseq
    %v1828 = vshrl.u32 %v1827, 7
    %v1829 = vsub.s32 %v1553, %v1828
    %v1830 = vrot.slane %v1768, %v1829
    %v1831 = vsel %vm1558, %v1830, %v1826
    %v1832 = vlaneseq
    %v1833 = vshrl.u32 %v1832, 7
    %v1834 = vsub.s32 %v33, %v1833
    %v1835 = vrot.slane %v1771, %v1834
    %v1836 = vlaneseq
    %v1837 = vshrl.u32 %v1836, 7
    %v1838 = vsub.s32 %v1553, %v1837
    %v1839 = vrot.slane %v1774, %v1838
    %v1840 = vsel %vm1558, %v1839, %v1835
    %v1841 = vlaneseq
    %v1842 = vshrl.u32 %v1841, 7
    %v1843 = vsub.s32 %v33, %v1842
    %v1844 = vrot.slane %v1777, %v1843
    %v1845 = vlaneseq
    %v1846 = vshrl.u32 %v1845, 7
    %v1847 = vsub.s32 %v1553, %v1846
    %v1848 = vrot.slane %v1780, %v1847
    %v1849 = vsel %vm1558, %v1848, %v1844
    %v1850 = vlaneseq
    %v1851 = vshrl.u32 %v1850, 7
    %v1852 = vsub.s32 %v33, %v1851
    %v1853 = vrot.slane %v1783, %v1852
    %v1854 = vlaneseq
    %v1855 = vshrl.u32 %v1854, 7
    %v1856 = vsub.s32 %v1553, %v1855
    %v1857 = vrot.slane %v1786, %v1856
    %v1858 = vsel %vm1558, %v1857, %v1853
    %v1859 = vlaneseq
    %v1860 = vshrl.u32 %v1859, 7
    %v1861 = vsub.s32 %v33, %v1860
    %v1862 = vrot.slane %v1789, %v1861
    %v1863 = vlaneseq
    %v1864 = vshrl.u32 %v1863, 7
    %v1865 = vsub.s32 %v1553, %v1864
    %v1866 = vrot.slane %v1792, %v1865
    %v1867 = vsel %vm1558, %v1866, %v1862
    %v1868 = vlaneseq
    %v1869 = vshrl.u32 %v1868, 7
    %v1870 = vsub.s32 %v33, %v1869
    %v1871 = vrot.slane %v1795, %v1870
    %v1872 = vlaneseq
    %v1873 = vshrl.u32 %v1872, 7
    %v1874 = vsub.s32 %v1553, %v1873
    %v1875 = vrot.slane %v1798, %v1874
    %v1876 = vsel %vm1558, %v1875, %v1871
    %v1877 = vlaneseq
    %v1878 = vshrl.u32 %v1877, 7
    %v1879 = vsub.s32 %v33, %v1878
    %v1880 = vrot.slane %v1801, %v1879
    %v1881 = vlaneseq
    %v1882 = vshrl.u32 %v1881, 7
    %v1883 = vsub.s32 %v1553, %v1882
    %v1884 = vrot.slane %v1804, %v1883
    %v1885 = vsel %vm1558, %v1884, %v1880
    %v1886 = vlaneseq
    %v1887 = vshrl.u32 %v1886, 7
    %v1888 = vsub.s32 %v33, %v1887
    %v1889 = vrot.slane %v1807, %v1888
    %v1890 = vlaneseq
    %v1891 = vshrl.u32 %v1890, 7
    %v1892 = vsub.s32 %v1553, %v1891
    %v1893 = vrot.slane %v1810, %v1892
    %v1894 = vsel %vm1558, %v1893, %v1889
    %v1895 = vlaneseq
    %v1896 = vshrl.u32 %v1895, 7
    %v1897 = vsub.s32 %v33, %v1896
    %v1898 = vrot.slane %v1813, %v1897
    %v1899 = vlaneseq
    %v1900 = vshrl.u32 %v1899, 7
    %v1901 = vsub.s32 %v1553, %v1900
    %v1902 = vrot.slane %v1816, %v1901
    %v1903 = vsel %vm1558, %v1902, %v1898
    %v1904 = vlaneseq
    %v1905 = vshrl.u32 %v1904, 7
    %v1906 = vsub.s32 %v33, %v1905
    %v1907 = vrot.slane %v1819, %v1906
    %v1908 = vlaneseq
    %v1909 = vshrl.u32 %v1908, 7
    %v1910 = vsub.s32 %v1553, %v1909
    %v1911 = vrot.slane %v1822, %v1910
    %v1912 = vsel %vm1558, %v1911, %v1907
    %v1913 = vsel %vm1641, %v1840, %v1831
    %v1914 = vsel %vm1643, %v1849, %v1913
    %v1915 = vsel %vm1645, %v1858, %v1914
    %v1916 = vsel %vm1647, %v1867, %v1915
    %v1917 = vsel %vm1649, %v1876, %v1916
    %v1918 = vsel %vm1651, %v1885, %v1917
    %v1919 = vsel %vm1653, %v1894, %v1918
    %v1920 = vsel %vm1641, %v1912, %v1903
    %v1921 = vsel %vm1293, %v1919, 2147483647
    %v1922 = vand.u32 %v1921, 65535
    %v1923 = vshra.s32 %v1921, 16
    %v1924 = vcvt.s32.f32 %v1922
    %v1925 = vcvt.s32.f32 %v1923
    %1926 = vmin.xlane.f32.xlu0 %v1925
    %v1927 = vpop.xlane.xlu0 %1926
    %vm1928 = vcmp.eq.f32.partialorder %v1925, %v1927
    %v1929 = vsel %vm1928, %v1924, inf
    %1930 = vmin.xlane.f32.xlu0 %v1929
    %v1931 = vpop.xlane.xlu0 %1930
    %v1932 = vcvt.f32.s32 %v1931
    %v1933 = vcvt.f32.s32 %v1927
    %v1934 = vshll.u32 %v1933, 16
    %v1935 = vadd.s32 %v1934, %v1932
    %v1936 = vsel %vm1297, %v1920, 2147483647
    %v1937 = vand.u32 %v1936, 65535
    %v1938 = vshra.s32 %v1936, 16
    %v1939 = vcvt.s32.f32 %v1937
    %v1940 = vcvt.s32.f32 %v1938
    %1941 = vmin.xlane.f32.xlu0 %v1940
    %v1942 = vpop.xlane.xlu0 %1941
    %vm1943 = vcmp.eq.f32.partialorder %v1940, %v1942
    %v1944 = vsel %vm1943, %v1939, inf
    %1945 = vmin.xlane.f32.xlu0 %v1944
    %v1946 = vpop.xlane.xlu0 %1945
    %v1947 = vcvt.f32.s32 %v1946
    %v1948 = vcvt.f32.s32 %v1942
    %v1949 = vshll.u32 %v1948, 16
    %v1950 = vadd.s32 %v1949, %v1947
    %v1951 = vlaneseq
    %v1952 = vshrl.u32 %v1951, 7
    %v1953 = vsub.s32 1, %v1952
    %v1954 = vrot.slane %v1285, %v1953
    %1956 = vbcast.lane.b32.xlu0 %v1954, 256
    %v1957 = vpop.permute.xlu0 %1956
    %s1959 = sor.u32 256, 8
    %1960 = vbcast.lane.b32.xlu0 %v1954, %s1959
    %v1961 = vpop.permute.xlu0 %1960
    %v1964 = vadd.f32 %v1660, %v1957
    %v1965 = vadd.f32 %v1663, %v1961
    %v1966 = vadd.f32 %v1964, %v1325
    %v1967 = vadd.f32 %v1965, %v1329
    %v1968 = vadd.f32 %v1964, %v1336
    %v1969 = vadd.f32 %v1965, %v1340
    %v1970 = vadd.f32 %v1964, %v1347
    %v1971 = vadd.f32 %v1965, %v1351
    %v1972 = vadd.f32 %v1964, %v1358
    %v1973 = vadd.f32 %v1965, %v1362
    %v1974 = vadd.f32 %v1964, %v1369
    %v1975 = vadd.f32 %v1965, %v1373
    %v1976 = vadd.f32 %v1964, %v1380
    %v1977 = vadd.f32 %v1965, %v1384
    %v1978 = vadd.f32 %v1964, %v1391
    %v1979 = vadd.f32 %v1965, %v1395
    %v1980 = vadd.f32 %v1964, %v1402
    %v1981 = vadd.f32 %v1965, %v1406
    %v1982 = vadd.f32 %v1964, %v1413
    %v1983 = vadd.f32 %v1965, %v1417
    %v1984 = vadd.f32 %v1964, %v1424
    %v1985 = vadd.f32 %v1965, %v1428
    %2006 = vset.pattern.permute.xlu0 0
    %2007 = vperm.xlu0 %2006, %v1966
    %v2008 = vpop.permute.xlu0 %2007
    %2009 = vset.pattern.permute.xlu0 0
    %2010 = vperm.xlu0 %2009, %v1967
    %v2011 = vpop.permute.xlu0 %2010
    %2012 = vset.pattern.permute.xlu0 0
    %2013 = vperm.xlu0 %2012, %v1968
    %v2014 = vpop.permute.xlu0 %2013
    %2015 = vset.pattern.permute.xlu0 0
    %2016 = vperm.xlu0 %2015, %v1969
    %v2017 = vpop.permute.xlu0 %2016
    %2018 = vset.pattern.permute.xlu0 0
    %2019 = vperm.xlu0 %2018, %v1970
    %v2020 = vpop.permute.xlu0 %2019
    %2021 = vset.pattern.permute.xlu0 0
    %2022 = vperm.xlu0 %2021, %v1971
    %v2023 = vpop.permute.xlu0 %2022
    %2024 = vset.pattern.permute.xlu0 0
    %2025 = vperm.xlu0 %2024, %v1972
    %v2026 = vpop.permute.xlu0 %2025
    %2027 = vset.pattern.permute.xlu0 0
    %2028 = vperm.xlu0 %2027, %v1973
    %v2029 = vpop.permute.xlu0 %2028
    %2030 = vset.pattern.permute.xlu0 0
    %2031 = vperm.xlu0 %2030, %v1974
    %v2032 = vpop.permute.xlu0 %2031
    %2033 = vset.pattern.permute.xlu0 0
    %2034 = vperm.xlu0 %2033, %v1975
    %v2035 = vpop.permute.xlu0 %2034
    %2036 = vset.pattern.permute.xlu0 0
    %2037 = vperm.xlu0 %2036, %v1976
    %v2038 = vpop.permute.xlu0 %2037
    %2039 = vset.pattern.permute.xlu0 0
    %2040 = vperm.xlu0 %2039, %v1977
    %v2041 = vpop.permute.xlu0 %2040
    %2042 = vset.pattern.permute.xlu0 0
    %2043 = vperm.xlu0 %2042, %v1978
    %v2044 = vpop.permute.xlu0 %2043
    %2045 = vset.pattern.permute.xlu0 0
    %2046 = vperm.xlu0 %2045, %v1979
    %v2047 = vpop.permute.xlu0 %2046
    %2048 = vset.pattern.permute.xlu0 0
    %2049 = vperm.xlu0 %2048, %v1980
    %v2050 = vpop.permute.xlu0 %2049
    %2051 = vset.pattern.permute.xlu0 0
    %2052 = vperm.xlu0 %2051, %v1981
    %v2053 = vpop.permute.xlu0 %2052
    %2054 = vset.pattern.permute.xlu0 0
    %2055 = vperm.xlu0 %2054, %v1982
    %v2056 = vpop.permute.xlu0 %2055
    %2057 = vset.pattern.permute.xlu0 0
    %2058 = vperm.xlu0 %2057, %v1983
    %v2059 = vpop.permute.xlu0 %2058
    %2060 = vset.pattern.permute.xlu0 0
    %2061 = vperm.xlu0 %2060, %v1984
    %v2062 = vpop.permute.xlu0 %2061
    %2063 = vset.pattern.permute.xlu0 0
    %2064 = vperm.xlu0 %2063, %v1985
    %v2065 = vpop.permute.xlu0 %2064
    %v2066 = vlaneseq
    %v2067 = vshrl.u32 %v2066, 7
    %v2068 = vsub.s32 %v33, %v2067
    %v2069 = vrot.slane %v2008, %v2068
    %v2070 = vlaneseq
    %v2071 = vshrl.u32 %v2070, 7
    %v2072 = vsub.s32 %v1553, %v2071
    %v2073 = vrot.slane %v2011, %v2072
    %v2074 = vsel %vm1558, %v2073, %v2069
    %v2075 = vlaneseq
    %v2076 = vshrl.u32 %v2075, 7
    %v2077 = vsub.s32 %v33, %v2076
    %v2078 = vrot.slane %v2014, %v2077
    %v2079 = vlaneseq
    %v2080 = vshrl.u32 %v2079, 7
    %v2081 = vsub.s32 %v1553, %v2080
    %v2082 = vrot.slane %v2017, %v2081
    %v2083 = vsel %vm1558, %v2082, %v2078
    %v2084 = vlaneseq
    %v2085 = vshrl.u32 %v2084, 7
    %v2086 = vsub.s32 %v33, %v2085
    %v2087 = vrot.slane %v2020, %v2086
    %v2088 = vlaneseq
    %v2089 = vshrl.u32 %v2088, 7
    %v2090 = vsub.s32 %v1553, %v2089
    %v2091 = vrot.slane %v2023, %v2090
    %v2092 = vsel %vm1558, %v2091, %v2087
    %v2093 = vlaneseq
    %v2094 = vshrl.u32 %v2093, 7
    %v2095 = vsub.s32 %v33, %v2094
    %v2096 = vrot.slane %v2026, %v2095
    %v2097 = vlaneseq
    %v2098 = vshrl.u32 %v2097, 7
    %v2099 = vsub.s32 %v1553, %v2098
    %v2100 = vrot.slane %v2029, %v2099
    %v2101 = vsel %vm1558, %v2100, %v2096
    %v2102 = vlaneseq
    %v2103 = vshrl.u32 %v2102, 7
    %v2104 = vsub.s32 %v33, %v2103
    %v2105 = vrot.slane %v2032, %v2104
    %v2106 = vlaneseq
    %v2107 = vshrl.u32 %v2106, 7
    %v2108 = vsub.s32 %v1553, %v2107
    %v2109 = vrot.slane %v2035, %v2108
    %v2110 = vsel %vm1558, %v2109, %v2105
    %v2111 = vlaneseq
    %v2112 = vshrl.u32 %v2111, 7
    %v2113 = vsub.s32 %v33, %v2112
    %v2114 = vrot.slane %v2038, %v2113
    %v2115 = vlaneseq
    %v2116 = vshrl.u32 %v2115, 7
    %v2117 = vsub.s32 %v1553, %v2116
    %v2118 = vrot.slane %v2041, %v2117
    %v2119 = vsel %vm1558, %v2118, %v2114
    %v2120 = vlaneseq
    %v2121 = vshrl.u32 %v2120, 7
    %v2122 = vsub.s32 %v33, %v2121
    %v2123 = vrot.slane %v2044, %v2122
    %v2124 = vlaneseq
    %v2125 = vshrl.u32 %v2124, 7
    %v2126 = vsub.s32 %v1553, %v2125
    %v2127 = vrot.slane %v2047, %v2126
    %v2128 = vsel %vm1558, %v2127, %v2123
    %v2129 = vlaneseq
    %v2130 = vshrl.u32 %v2129, 7
    %v2131 = vsub.s32 %v33, %v2130
    %v2132 = vrot.slane %v2050, %v2131
    %v2133 = vlaneseq
    %v2134 = vshrl.u32 %v2133, 7
    %v2135 = vsub.s32 %v1553, %v2134
    %v2136 = vrot.slane %v2053, %v2135
    %v2137 = vsel %vm1558, %v2136, %v2132
    %v2138 = vlaneseq
    %v2139 = vshrl.u32 %v2138, 7
    %v2140 = vsub.s32 %v33, %v2139
    %v2141 = vrot.slane %v2056, %v2140
    %v2142 = vlaneseq
    %v2143 = vshrl.u32 %v2142, 7
    %v2144 = vsub.s32 %v1553, %v2143
    %v2145 = vrot.slane %v2059, %v2144
    %v2146 = vsel %vm1558, %v2145, %v2141
    %v2147 = vlaneseq
    %v2148 = vshrl.u32 %v2147, 7
    %v2149 = vsub.s32 %v33, %v2148
    %v2150 = vrot.slane %v2062, %v2149
    %v2151 = vlaneseq
    %v2152 = vshrl.u32 %v2151, 7
    %v2153 = vsub.s32 %v1553, %v2152
    %v2154 = vrot.slane %v2065, %v2153
    %v2155 = vsel %vm1558, %v2154, %v2150
    %v2156 = vsel %vm1641, %v2083, %v2074
    %v2157 = vsel %vm1643, %v2092, %v2156
    %v2158 = vsel %vm1645, %v2101, %v2157
    %v2159 = vsel %vm1647, %v2110, %v2158
    %v2160 = vsel %vm1649, %v2119, %v2159
    %v2161 = vsel %vm1651, %v2128, %v2160
    %v2162 = vsel %vm1653, %v2137, %v2161
    %v2163 = vsel %vm1641, %v2155, %v2146
    %v2166 = vsel %vm1293, %v2162, -inf
    %2167 = vmax.xlane.f32.xlu0 %v2166
    %v2168 = vpop.xlane.xlu0 %2167
    %v2169 = vsel %vm1297, %v2163, -inf
    %2170 = vmax.xlane.f32.xlu0 %v2169
    %v2171 = vpop.xlane.xlu0 %2170
    %v2174 = vlaneseq
    %v2175 = vshrl.u32 %v2174, 7
    %v2176 = vsub.s32 0, %v2175
    %v2177 = vrot.slane %v2168, %v2176
    %v2178 = vlaneseq
    %v2179 = vshrl.u32 %v2178, 7
    %v2180 = vsub.s32 1, %v2179
    %v2181 = vrot.slane %v2168, %v2180
    %v2182 = vlaneseq
    %v2183 = vshrl.u32 %v2182, 7
    %v2184 = vsub.s32 2, %v2183
    %v2185 = vrot.slane %v2168, %v2184
    %v2186 = vlaneseq
    %v2187 = vshrl.u32 %v2186, 7
    %v2188 = vsub.s32 3, %v2187
    %v2189 = vrot.slane %v2168, %v2188
    %v2190 = vlaneseq
    %v2191 = vshrl.u32 %v2190, 7
    %v2192 = vsub.s32 4, %v2191
    %v2193 = vrot.slane %v2168, %v2192
    %v2194 = vlaneseq
    %v2195 = vshrl.u32 %v2194, 7
    %v2196 = vsub.s32 5, %v2195
    %v2197 = vrot.slane %v2168, %v2196
    %v2198 = vlaneseq
    %v2199 = vshrl.u32 %v2198, 7
    %v2200 = vsub.s32 6, %v2199
    %v2201 = vrot.slane %v2168, %v2200
    %v2202 = vlaneseq
    %v2203 = vshrl.u32 %v2202, 7
    %v2204 = vsub.s32 7, %v2203
    %v2205 = vrot.slane %v2168, %v2204
    %v2206 = vlaneseq
    %v2207 = vshrl.u32 %v2206, 7
    %v2208 = vsub.s32 0, %v2207
    %v2209 = vrot.slane %v2171, %v2208
    %v2210 = vlaneseq
    %v2211 = vshrl.u32 %v2210, 7
    %v2212 = vsub.s32 1, %v2211
    %v2213 = vrot.slane %v2171, %v2212
    %vm2224 = vcmp.eq.f32.partialorder %v1966, %v2177
    %vm2225 = vcmp.eq.f32.partialorder %v1967, %v2177
    %vm2226 = vcmp.eq.f32.partialorder %v1968, %v2181
    %vm2227 = vcmp.eq.f32.partialorder %v1969, %v2181
    %vm2228 = vcmp.eq.f32.partialorder %v1970, %v2185
    %vm2229 = vcmp.eq.f32.partialorder %v1971, %v2185
    %vm2230 = vcmp.eq.f32.partialorder %v1972, %v2189
    %vm2231 = vcmp.eq.f32.partialorder %v1973, %v2189
    %vm2232 = vcmp.eq.f32.partialorder %v1974, %v2193
    %vm2233 = vcmp.eq.f32.partialorder %v1975, %v2193
    %vm2234 = vcmp.eq.f32.partialorder %v1976, %v2197
    %vm2235 = vcmp.eq.f32.partialorder %v1977, %v2197
    %vm2236 = vcmp.eq.f32.partialorder %v1978, %v2201
    %vm2237 = vcmp.eq.f32.partialorder %v1979, %v2201
    %vm2238 = vcmp.eq.f32.partialorder %v1980, %v2205
    %vm2239 = vcmp.eq.f32.partialorder %v1981, %v2205
    %vm2240 = vcmp.eq.f32.partialorder %v1982, %v2209
    %vm2241 = vcmp.eq.f32.partialorder %v1983, %v2209
    %vm2242 = vcmp.eq.f32.partialorder %v1984, %v2213
    %vm2243 = vcmp.eq.f32.partialorder %v1985, %v2213
    %v2244 = vsel %vm2224, %v1738, 10
    %v2245 = vsel %vm2225, %v1742, 10
    %v2246 = vsel %vm2226, %v1738, 10
    %v2247 = vsel %vm2227, %v1742, 10
    %v2248 = vsel %vm2228, %v1738, 10
    %v2249 = vsel %vm2229, %v1742, 10
    %v2250 = vsel %vm2230, %v1738, 10
    %v2251 = vsel %vm2231, %v1742, 10
    %v2252 = vsel %vm2232, %v1738, 10
    %v2253 = vsel %vm2233, %v1742, 10
    %v2254 = vsel %vm2234, %v1738, 10
    %v2255 = vsel %vm2235, %v1742, 10
    %v2256 = vsel %vm2236, %v1738, 10
    %v2257 = vsel %vm2237, %v1742, 10
    %v2258 = vsel %vm2238, %v1738, 10
    %v2259 = vsel %vm2239, %v1742, 10
    %v2260 = vsel %vm2240, %v1738, 10
    %v2261 = vsel %vm2241, %v1742, 10
    %v2262 = vsel %vm2242, %v1738, 10
    %v2263 = vsel %vm2243, %v1742, 10
    %2264 = vset.pattern.permute.xlu0 0
    %2265 = vperm.xlu0 %2264, %v2244
    %v2266 = vpop.permute.xlu0 %2265
    %2267 = vset.pattern.permute.xlu0 0
    %2268 = vperm.xlu0 %2267, %v2245
    %v2269 = vpop.permute.xlu0 %2268
    %2270 = vset.pattern.permute.xlu0 0
    %2271 = vperm.xlu0 %2270, %v2246
    %v2272 = vpop.permute.xlu0 %2271
    %2273 = vset.pattern.permute.xlu0 0
    %2274 = vperm.xlu0 %2273, %v2247
    %v2275 = vpop.permute.xlu0 %2274
    %2276 = vset.pattern.permute.xlu0 0
    %2277 = vperm.xlu0 %2276, %v2248
    %v2278 = vpop.permute.xlu0 %2277
    %2279 = vset.pattern.permute.xlu0 0
    %2280 = vperm.xlu0 %2279, %v2249
    %v2281 = vpop.permute.xlu0 %2280
    %2282 = vset.pattern.permute.xlu0 0
    %2283 = vperm.xlu0 %2282, %v2250
    %v2284 = vpop.permute.xlu0 %2283
    %2285 = vset.pattern.permute.xlu0 0
    %2286 = vperm.xlu0 %2285, %v2251
    %v2287 = vpop.permute.xlu0 %2286
    %2288 = vset.pattern.permute.xlu0 0
    %2289 = vperm.xlu0 %2288, %v2252
    %v2290 = vpop.permute.xlu0 %2289
    %2291 = vset.pattern.permute.xlu0 0
    %2292 = vperm.xlu0 %2291, %v2253
    %v2293 = vpop.permute.xlu0 %2292
    %2294 = vset.pattern.permute.xlu0 0
    %2295 = vperm.xlu0 %2294, %v2254
    %v2296 = vpop.permute.xlu0 %2295
    %2297 = vset.pattern.permute.xlu0 0
    %2298 = vperm.xlu0 %2297, %v2255
    %v2299 = vpop.permute.xlu0 %2298
    %2300 = vset.pattern.permute.xlu0 0
    %2301 = vperm.xlu0 %2300, %v2256
    %v2302 = vpop.permute.xlu0 %2301
    %2303 = vset.pattern.permute.xlu0 0
    %2304 = vperm.xlu0 %2303, %v2257
    %v2305 = vpop.permute.xlu0 %2304
    %2306 = vset.pattern.permute.xlu0 0
    %2307 = vperm.xlu0 %2306, %v2258
    %v2308 = vpop.permute.xlu0 %2307
    %2309 = vset.pattern.permute.xlu0 0
    %2310 = vperm.xlu0 %2309, %v2259
    %v2311 = vpop.permute.xlu0 %2310
    %2312 = vset.pattern.permute.xlu0 0
    %2313 = vperm.xlu0 %2312, %v2260
    %v2314 = vpop.permute.xlu0 %2313
    %2315 = vset.pattern.permute.xlu0 0
    %2316 = vperm.xlu0 %2315, %v2261
    %v2317 = vpop.permute.xlu0 %2316
    %2318 = vset.pattern.permute.xlu0 0
    %2319 = vperm.xlu0 %2318, %v2262
    %v2320 = vpop.permute.xlu0 %2319
    %2321 = vset.pattern.permute.xlu0 0
    %2322 = vperm.xlu0 %2321, %v2263
    %v2323 = vpop.permute.xlu0 %2322
    %v2324 = vlaneseq
    %v2325 = vshrl.u32 %v2324, 7
    %v2326 = vsub.s32 %v33, %v2325
    %v2327 = vrot.slane %v2266, %v2326
    %v2328 = vlaneseq
    %v2329 = vshrl.u32 %v2328, 7
    %v2330 = vsub.s32 %v1553, %v2329
    %v2331 = vrot.slane %v2269, %v2330
    %v2332 = vsel %vm1558, %v2331, %v2327
    %v2333 = vlaneseq
    %v2334 = vshrl.u32 %v2333, 7
    %v2335 = vsub.s32 %v33, %v2334
    %v2336 = vrot.slane %v2272, %v2335
    %v2337 = vlaneseq
    %v2338 = vshrl.u32 %v2337, 7
    %v2339 = vsub.s32 %v1553, %v2338
    %v2340 = vrot.slane %v2275, %v2339
    %v2341 = vsel %vm1558, %v2340, %v2336
    %v2342 = vlaneseq
    %v2343 = vshrl.u32 %v2342, 7
    %v2344 = vsub.s32 %v33, %v2343
    %v2345 = vrot.slane %v2278, %v2344
    %v2346 = vlaneseq
    %v2347 = vshrl.u32 %v2346, 7
    %v2348 = vsub.s32 %v1553, %v2347
    %v2349 = vrot.slane %v2281, %v2348
    %v2350 = vsel %vm1558, %v2349, %v2345
    %v2351 = vlaneseq
    %v2352 = vshrl.u32 %v2351, 7
    %v2353 = vsub.s32 %v33, %v2352
    %v2354 = vrot.slane %v2284, %v2353
    %v2355 = vlaneseq
    %v2356 = vshrl.u32 %v2355, 7
    %v2357 = vsub.s32 %v1553, %v2356
    %v2358 = vrot.slane %v2287, %v2357
    %v2359 = vsel %vm1558, %v2358, %v2354
    %v2360 = vlaneseq
    %v2361 = vshrl.u32 %v2360, 7
    %v2362 = vsub.s32 %v33, %v2361
    %v2363 = vrot.slane %v2290, %v2362
    %v2364 = vlaneseq
    %v2365 = vshrl.u32 %v2364, 7
    %v2366 = vsub.s32 %v1553, %v2365
    %v2367 = vrot.slane %v2293, %v2366
    %v2368 = vsel %vm1558, %v2367, %v2363
    %v2369 = vlaneseq
    %v2370 = vshrl.u32 %v2369, 7
    %v2371 = vsub.s32 %v33, %v2370
    %v2372 = vrot.slane %v2296, %v2371
    %v2373 = vlaneseq
    %v2374 = vshrl.u32 %v2373, 7
    %v2375 = vsub.s32 %v1553, %v2374
    %v2376 = vrot.slane %v2299, %v2375
    %v2377 = vsel %vm1558, %v2376, %v2372
    %v2378 = vlaneseq
    %v2379 = vshrl.u32 %v2378, 7
    %v2380 = vsub.s32 %v33, %v2379
    %v2381 = vrot.slane %v2302, %v2380
    %v2382 = vlaneseq
    %v2383 = vshrl.u32 %v2382, 7
    %v2384 = vsub.s32 %v1553, %v2383
    %v2385 = vrot.slane %v2305, %v2384
    %v2386 = vsel %vm1558, %v2385, %v2381
    %v2387 = vlaneseq
    %v2388 = vshrl.u32 %v2387, 7
    %v2389 = vsub.s32 %v33, %v2388
    %v2390 = vrot.slane %v2308, %v2389
    %v2391 = vlaneseq
    %v2392 = vshrl.u32 %v2391, 7
    %v2393 = vsub.s32 %v1553, %v2392
    %v2394 = vrot.slane %v2311, %v2393
    %v2395 = vsel %vm1558, %v2394, %v2390
    %v2396 = vlaneseq
    %v2397 = vshrl.u32 %v2396, 7
    %v2398 = vsub.s32 %v33, %v2397
    %v2399 = vrot.slane %v2314, %v2398
    %v2400 = vlaneseq
    %v2401 = vshrl.u32 %v2400, 7
    %v2402 = vsub.s32 %v1553, %v2401
    %v2403 = vrot.slane %v2317, %v2402
    %v2404 = vsel %vm1558, %v2403, %v2399
    %v2405 = vlaneseq
    %v2406 = vshrl.u32 %v2405, 7
    %v2407 = vsub.s32 %v33, %v2406
    %v2408 = vrot.slane %v2320, %v2407
    %v2409 = vlaneseq
    %v2410 = vshrl.u32 %v2409, 7
    %v2411 = vsub.s32 %v1553, %v2410
    %v2412 = vrot.slane %v2323, %v2411
    %v2413 = vsel %vm1558, %v2412, %v2408
    %v2414 = vsel %vm1641, %v2341, %v2332
    %v2415 = vsel %vm1643, %v2350, %v2414
    %v2416 = vsel %vm1645, %v2359, %v2415
    %v2417 = vsel %vm1647, %v2368, %v2416
    %v2418 = vsel %vm1649, %v2377, %v2417
    %v2419 = vsel %vm1651, %v2386, %v2418
    %v2420 = vsel %vm1653, %v2395, %v2419
    %v2421 = vsel %vm1641, %v2413, %v2404
    %v2422 = vsel %vm1293, %v2420, 2147483647
    %v2423 = vand.u32 %v2422, 65535
    %v2424 = vshra.s32 %v2422, 16
    %v2425 = vcvt.s32.f32 %v2423
    %v2426 = vcvt.s32.f32 %v2424
    %2427 = vmin.xlane.f32.xlu0 %v2426
    %v2428 = vpop.xlane.xlu0 %2427
    %vm2429 = vcmp.eq.f32.partialorder %v2426, %v2428
    %v2430 = vsel %vm2429, %v2425, inf
    %2431 = vmin.xlane.f32.xlu0 %v2430
    %v2432 = vpop.xlane.xlu0 %2431
    %v2433 = vcvt.f32.s32 %v2432
    %v2434 = vcvt.f32.s32 %v2428
    %v2435 = vshll.u32 %v2434, 16
    %v2436 = vadd.s32 %v2435, %v2433
    %v2437 = vsel %vm1297, %v2421, 2147483647
    %v2438 = vand.u32 %v2437, 65535
    %v2439 = vshra.s32 %v2437, 16
    %v2440 = vcvt.s32.f32 %v2438
    %v2441 = vcvt.s32.f32 %v2439
    %2442 = vmin.xlane.f32.xlu0 %v2441
    %v2443 = vpop.xlane.xlu0 %2442
    %vm2444 = vcmp.eq.f32.partialorder %v2441, %v2443
    %v2445 = vsel %vm2444, %v2440, inf
    %2446 = vmin.xlane.f32.xlu0 %v2445
    %v2447 = vpop.xlane.xlu0 %2446
    %v2448 = vcvt.f32.s32 %v2447
    %v2449 = vcvt.f32.s32 %v2443
    %v2450 = vshll.u32 %v2449, 16
    %v2451 = vadd.s32 %v2450, %v2448
    %v2452 = vlaneseq
    %v2453 = vshrl.u32 %v2452, 7
    %v2454 = vsub.s32 2, %v2453
    %v2455 = vrot.slane %v1285, %v2454
    %2457 = vbcast.lane.b32.xlu0 %v2455, 256
    %v2458 = vpop.permute.xlu0 %2457
    %s2460 = sor.u32 256, 8
    %2461 = vbcast.lane.b32.xlu0 %v2455, %s2460
    %v2462 = vpop.permute.xlu0 %2461
    %v2465 = vadd.f32 %v2168, %v2458
    %v2466 = vadd.f32 %v2171, %v2462
    %v2467 = vadd.f32 %v2465, %v1325
    %v2468 = vadd.f32 %v2466, %v1329
    %v2469 = vadd.f32 %v2465, %v1336
    %v2470 = vadd.f32 %v2466, %v1340
    %v2471 = vadd.f32 %v2465, %v1347
    %v2472 = vadd.f32 %v2466, %v1351
    %v2473 = vadd.f32 %v2465, %v1358
    %v2474 = vadd.f32 %v2466, %v1362
    %v2475 = vadd.f32 %v2465, %v1369
    %v2476 = vadd.f32 %v2466, %v1373
    %v2477 = vadd.f32 %v2465, %v1380
    %v2478 = vadd.f32 %v2466, %v1384
    %v2479 = vadd.f32 %v2465, %v1391
    %v2480 = vadd.f32 %v2466, %v1395
    %v2481 = vadd.f32 %v2465, %v1402
    %v2482 = vadd.f32 %v2466, %v1406
    %v2483 = vadd.f32 %v2465, %v1413
    %v2484 = vadd.f32 %v2466, %v1417
    %v2485 = vadd.f32 %v2465, %v1424
    %v2486 = vadd.f32 %v2466, %v1428
    %2507 = vset.pattern.permute.xlu0 0
    %2508 = vperm.xlu0 %2507, %v2467
    %v2509 = vpop.permute.xlu0 %2508
    %2510 = vset.pattern.permute.xlu0 0
    %2511 = vperm.xlu0 %2510, %v2468
    %v2512 = vpop.permute.xlu0 %2511
    %2513 = vset.pattern.permute.xlu0 0
    %2514 = vperm.xlu0 %2513, %v2469
    %v2515 = vpop.permute.xlu0 %2514
    %2516 = vset.pattern.permute.xlu0 0
    %2517 = vperm.xlu0 %2516, %v2470
    %v2518 = vpop.permute.xlu0 %2517
    %2519 = vset.pattern.permute.xlu0 0
    %2520 = vperm.xlu0 %2519, %v2471
    %v2521 = vpop.permute.xlu0 %2520
    %2522 = vset.pattern.permute.xlu0 0
    %2523 = vperm.xlu0 %2522, %v2472
    %v2524 = vpop.permute.xlu0 %2523
    %2525 = vset.pattern.permute.xlu0 0
    %2526 = vperm.xlu0 %2525, %v2473
    %v2527 = vpop.permute.xlu0 %2526
    %2528 = vset.pattern.permute.xlu0 0
    %2529 = vperm.xlu0 %2528, %v2474
    %v2530 = vpop.permute.xlu0 %2529
    %2531 = vset.pattern.permute.xlu0 0
    %2532 = vperm.xlu0 %2531, %v2475
    %v2533 = vpop.permute.xlu0 %2532
    %2534 = vset.pattern.permute.xlu0 0
    %2535 = vperm.xlu0 %2534, %v2476
    %v2536 = vpop.permute.xlu0 %2535
    %2537 = vset.pattern.permute.xlu0 0
    %2538 = vperm.xlu0 %2537, %v2477
    %v2539 = vpop.permute.xlu0 %2538
    %2540 = vset.pattern.permute.xlu0 0
    %2541 = vperm.xlu0 %2540, %v2478
    %v2542 = vpop.permute.xlu0 %2541
    %2543 = vset.pattern.permute.xlu0 0
    %2544 = vperm.xlu0 %2543, %v2479
    %v2545 = vpop.permute.xlu0 %2544
    %2546 = vset.pattern.permute.xlu0 0
    %2547 = vperm.xlu0 %2546, %v2480
    %v2548 = vpop.permute.xlu0 %2547
    %2549 = vset.pattern.permute.xlu0 0
    %2550 = vperm.xlu0 %2549, %v2481
    %v2551 = vpop.permute.xlu0 %2550
    %2552 = vset.pattern.permute.xlu0 0
    %2553 = vperm.xlu0 %2552, %v2482
    %v2554 = vpop.permute.xlu0 %2553
    %2555 = vset.pattern.permute.xlu0 0
    %2556 = vperm.xlu0 %2555, %v2483
    %v2557 = vpop.permute.xlu0 %2556
    %2558 = vset.pattern.permute.xlu0 0
    %2559 = vperm.xlu0 %2558, %v2484
    %v2560 = vpop.permute.xlu0 %2559
    %2561 = vset.pattern.permute.xlu0 0
    %2562 = vperm.xlu0 %2561, %v2485
    %v2563 = vpop.permute.xlu0 %2562
    %2564 = vset.pattern.permute.xlu0 0
    %2565 = vperm.xlu0 %2564, %v2486
    %v2566 = vpop.permute.xlu0 %2565
    %v2567 = vlaneseq
    %v2568 = vshrl.u32 %v2567, 7
    %v2569 = vsub.s32 %v33, %v2568
    %v2570 = vrot.slane %v2509, %v2569
    %v2571 = vlaneseq
    %v2572 = vshrl.u32 %v2571, 7
    %v2573 = vsub.s32 %v1553, %v2572
    %v2574 = vrot.slane %v2512, %v2573
    %v2575 = vsel %vm1558, %v2574, %v2570
    %v2576 = vlaneseq
    %v2577 = vshrl.u32 %v2576, 7
    %v2578 = vsub.s32 %v33, %v2577
    %v2579 = vrot.slane %v2515, %v2578
    %v2580 = vlaneseq
    %v2581 = vshrl.u32 %v2580, 7
    %v2582 = vsub.s32 %v1553, %v2581
    %v2583 = vrot.slane %v2518, %v2582
    %v2584 = vsel %vm1558, %v2583, %v2579
    %v2585 = vlaneseq
    %v2586 = vshrl.u32 %v2585, 7
    %v2587 = vsub.s32 %v33, %v2586
    %v2588 = vrot.slane %v2521, %v2587
    %v2589 = vlaneseq
    %v2590 = vshrl.u32 %v2589, 7
    %v2591 = vsub.s32 %v1553, %v2590
    %v2592 = vrot.slane %v2524, %v2591
    %v2593 = vsel %vm1558, %v2592, %v2588
    %v2594 = vlaneseq
    %v2595 = vshrl.u32 %v2594, 7
    %v2596 = vsub.s32 %v33, %v2595
    %v2597 = vrot.slane %v2527, %v2596
    %v2598 = vlaneseq
    %v2599 = vshrl.u32 %v2598, 7
    %v2600 = vsub.s32 %v1553, %v2599
    %v2601 = vrot.slane %v2530, %v2600
    %v2602 = vsel %vm1558, %v2601, %v2597
    %v2603 = vlaneseq
    %v2604 = vshrl.u32 %v2603, 7
    %v2605 = vsub.s32 %v33, %v2604
    %v2606 = vrot.slane %v2533, %v2605
    %v2607 = vlaneseq
    %v2608 = vshrl.u32 %v2607, 7
    %v2609 = vsub.s32 %v1553, %v2608
    %v2610 = vrot.slane %v2536, %v2609
    %v2611 = vsel %vm1558, %v2610, %v2606
    %v2612 = vlaneseq
    %v2613 = vshrl.u32 %v2612, 7
    %v2614 = vsub.s32 %v33, %v2613
    %v2615 = vrot.slane %v2539, %v2614
    %v2616 = vlaneseq
    %v2617 = vshrl.u32 %v2616, 7
    %v2618 = vsub.s32 %v1553, %v2617
    %v2619 = vrot.slane %v2542, %v2618
    %v2620 = vsel %vm1558, %v2619, %v2615
    %v2621 = vlaneseq
    %v2622 = vshrl.u32 %v2621, 7
    %v2623 = vsub.s32 %v33, %v2622
    %v2624 = vrot.slane %v2545, %v2623
    %v2625 = vlaneseq
    %v2626 = vshrl.u32 %v2625, 7
    %v2627 = vsub.s32 %v1553, %v2626
    %v2628 = vrot.slane %v2548, %v2627
    %v2629 = vsel %vm1558, %v2628, %v2624
    %v2630 = vlaneseq
    %v2631 = vshrl.u32 %v2630, 7
    %v2632 = vsub.s32 %v33, %v2631
    %v2633 = vrot.slane %v2551, %v2632
    %v2634 = vlaneseq
    %v2635 = vshrl.u32 %v2634, 7
    %v2636 = vsub.s32 %v1553, %v2635
    %v2637 = vrot.slane %v2554, %v2636
    %v2638 = vsel %vm1558, %v2637, %v2633
    %v2639 = vlaneseq
    %v2640 = vshrl.u32 %v2639, 7
    %v2641 = vsub.s32 %v33, %v2640
    %v2642 = vrot.slane %v2557, %v2641
    %v2643 = vlaneseq
    %v2644 = vshrl.u32 %v2643, 7
    %v2645 = vsub.s32 %v1553, %v2644
    %v2646 = vrot.slane %v2560, %v2645
    %v2647 = vsel %vm1558, %v2646, %v2642
    %v2648 = vlaneseq
    %v2649 = vshrl.u32 %v2648, 7
    %v2650 = vsub.s32 %v33, %v2649
    %v2651 = vrot.slane %v2563, %v2650
    %v2652 = vlaneseq
    %v2653 = vshrl.u32 %v2652, 7
    %v2654 = vsub.s32 %v1553, %v2653
    %v2655 = vrot.slane %v2566, %v2654
    %v2656 = vsel %vm1558, %v2655, %v2651
    %v2657 = vsel %vm1641, %v2584, %v2575
    %v2658 = vsel %vm1643, %v2593, %v2657
    %v2659 = vsel %vm1645, %v2602, %v2658
    %v2660 = vsel %vm1647, %v2611, %v2659
    %v2661 = vsel %vm1649, %v2620, %v2660
    %v2662 = vsel %vm1651, %v2629, %v2661
    %v2663 = vsel %vm1653, %v2638, %v2662
    %v2664 = vsel %vm1641, %v2656, %v2647
    %v2667 = vsel %vm1293, %v2663, -inf
    %2668 = vmax.xlane.f32.xlu0 %v2667
    %v2669 = vpop.xlane.xlu0 %2668
    %v2670 = vsel %vm1297, %v2664, -inf
    %2671 = vmax.xlane.f32.xlu0 %v2670
    %v2672 = vpop.xlane.xlu0 %2671
    %v2675 = vlaneseq
    %v2676 = vshrl.u32 %v2675, 7
    %v2677 = vsub.s32 0, %v2676
    %v2678 = vrot.slane %v2669, %v2677
    %v2679 = vlaneseq
    %v2680 = vshrl.u32 %v2679, 7
    %v2681 = vsub.s32 1, %v2680
    %v2682 = vrot.slane %v2669, %v2681
    %v2683 = vlaneseq
    %v2684 = vshrl.u32 %v2683, 7
    %v2685 = vsub.s32 2, %v2684
    %v2686 = vrot.slane %v2669, %v2685
    %v2687 = vlaneseq
    %v2688 = vshrl.u32 %v2687, 7
    %v2689 = vsub.s32 3, %v2688
    %v2690 = vrot.slane %v2669, %v2689
    %v2691 = vlaneseq
    %v2692 = vshrl.u32 %v2691, 7
    %v2693 = vsub.s32 4, %v2692
    %v2694 = vrot.slane %v2669, %v2693
    %v2695 = vlaneseq
    %v2696 = vshrl.u32 %v2695, 7
    %v2697 = vsub.s32 5, %v2696
    %v2698 = vrot.slane %v2669, %v2697
    %v2699 = vlaneseq
    %v2700 = vshrl.u32 %v2699, 7
    %v2701 = vsub.s32 6, %v2700
    %v2702 = vrot.slane %v2669, %v2701
    %v2703 = vlaneseq
    %v2704 = vshrl.u32 %v2703, 7
    %v2705 = vsub.s32 7, %v2704
    %v2706 = vrot.slane %v2669, %v2705
    %v2707 = vlaneseq
    %v2708 = vshrl.u32 %v2707, 7
    %v2709 = vsub.s32 0, %v2708
    %v2710 = vrot.slane %v2672, %v2709
    %v2711 = vlaneseq
    %v2712 = vshrl.u32 %v2711, 7
    %v2713 = vsub.s32 1, %v2712
    %v2714 = vrot.slane %v2672, %v2713
    %vm2725 = vcmp.eq.f32.partialorder %v2467, %v2678
    %vm2726 = vcmp.eq.f32.partialorder %v2468, %v2678
    %vm2727 = vcmp.eq.f32.partialorder %v2469, %v2682
    %vm2728 = vcmp.eq.f32.partialorder %v2470, %v2682
    %vm2729 = vcmp.eq.f32.partialorder %v2471, %v2686
    %vm2730 = vcmp.eq.f32.partialorder %v2472, %v2686
    %vm2731 = vcmp.eq.f32.partialorder %v2473, %v2690
    %vm2732 = vcmp.eq.f32.partialorder %v2474, %v2690
    %vm2733 = vcmp.eq.f32.partialorder %v2475, %v2694
    %vm2734 = vcmp.eq.f32.partialorder %v2476, %v2694
    %vm2735 = vcmp.eq.f32.partialorder %v2477, %v2698
    %vm2736 = vcmp.eq.f32.partialorder %v2478, %v2698
    %vm2737 = vcmp.eq.f32.partialorder %v2479, %v2702
    %vm2738 = vcmp.eq.f32.partialorder %v2480, %v2702
    %vm2739 = vcmp.eq.f32.partialorder %v2481, %v2706
    %vm2740 = vcmp.eq.f32.partialorder %v2482, %v2706
    %vm2741 = vcmp.eq.f32.partialorder %v2483, %v2710
    %vm2742 = vcmp.eq.f32.partialorder %v2484, %v2710
    %vm2743 = vcmp.eq.f32.partialorder %v2485, %v2714
    %vm2744 = vcmp.eq.f32.partialorder %v2486, %v2714
    %v2745 = vsel %vm2725, %v1738, 10
    %v2746 = vsel %vm2726, %v1742, 10
    %v2747 = vsel %vm2727, %v1738, 10
    %v2748 = vsel %vm2728, %v1742, 10
    %v2749 = vsel %vm2729, %v1738, 10
    %v2750 = vsel %vm2730, %v1742, 10
    %v2751 = vsel %vm2731, %v1738, 10
    %v2752 = vsel %vm2732, %v1742, 10
    %v2753 = vsel %vm2733, %v1738, 10
    %v2754 = vsel %vm2734, %v1742, 10
    %v2755 = vsel %vm2735, %v1738, 10
    %v2756 = vsel %vm2736, %v1742, 10
    %v2757 = vsel %vm2737, %v1738, 10
    %v2758 = vsel %vm2738, %v1742, 10
    %v2759 = vsel %vm2739, %v1738, 10
    %v2760 = vsel %vm2740, %v1742, 10
    %v2761 = vsel %vm2741, %v1738, 10
    %v2762 = vsel %vm2742, %v1742, 10
    %v2763 = vsel %vm2743, %v1738, 10
    %v2764 = vsel %vm2744, %v1742, 10
    %2765 = vset.pattern.permute.xlu0 0
    %2766 = vperm.xlu0 %2765, %v2745
    %v2767 = vpop.permute.xlu0 %2766
    %2768 = vset.pattern.permute.xlu0 0
    %2769 = vperm.xlu0 %2768, %v2746
    %v2770 = vpop.permute.xlu0 %2769
    %2771 = vset.pattern.permute.xlu0 0
    %2772 = vperm.xlu0 %2771, %v2747
    %v2773 = vpop.permute.xlu0 %2772
    %2774 = vset.pattern.permute.xlu0 0
    %2775 = vperm.xlu0 %2774, %v2748
    %v2776 = vpop.permute.xlu0 %2775
    %2777 = vset.pattern.permute.xlu0 0
    %2778 = vperm.xlu0 %2777, %v2749
    %v2779 = vpop.permute.xlu0 %2778
    %2780 = vset.pattern.permute.xlu0 0
    %2781 = vperm.xlu0 %2780, %v2750
    %v2782 = vpop.permute.xlu0 %2781
    %2783 = vset.pattern.permute.xlu0 0
    %2784 = vperm.xlu0 %2783, %v2751
    %v2785 = vpop.permute.xlu0 %2784
    %2786 = vset.pattern.permute.xlu0 0
    %2787 = vperm.xlu0 %2786, %v2752
    %v2788 = vpop.permute.xlu0 %2787
    %2789 = vset.pattern.permute.xlu0 0
    %2790 = vperm.xlu0 %2789, %v2753
    %v2791 = vpop.permute.xlu0 %2790
    %2792 = vset.pattern.permute.xlu0 0
    %2793 = vperm.xlu0 %2792, %v2754
    %v2794 = vpop.permute.xlu0 %2793
    %2795 = vset.pattern.permute.xlu0 0
    %2796 = vperm.xlu0 %2795, %v2755
    %v2797 = vpop.permute.xlu0 %2796
    %2798 = vset.pattern.permute.xlu0 0
    %2799 = vperm.xlu0 %2798, %v2756
    %v2800 = vpop.permute.xlu0 %2799
    %2801 = vset.pattern.permute.xlu0 0
    %2802 = vperm.xlu0 %2801, %v2757
    %v2803 = vpop.permute.xlu0 %2802
    %2804 = vset.pattern.permute.xlu0 0
    %2805 = vperm.xlu0 %2804, %v2758
    %v2806 = vpop.permute.xlu0 %2805
    %2807 = vset.pattern.permute.xlu0 0
    %2808 = vperm.xlu0 %2807, %v2759
    %v2809 = vpop.permute.xlu0 %2808
    %2810 = vset.pattern.permute.xlu0 0
    %2811 = vperm.xlu0 %2810, %v2760
    %v2812 = vpop.permute.xlu0 %2811
    %2813 = vset.pattern.permute.xlu0 0
    %2814 = vperm.xlu0 %2813, %v2761
    %v2815 = vpop.permute.xlu0 %2814
    %2816 = vset.pattern.permute.xlu0 0
    %2817 = vperm.xlu0 %2816, %v2762
    %v2818 = vpop.permute.xlu0 %2817
    %2819 = vset.pattern.permute.xlu0 0
    %2820 = vperm.xlu0 %2819, %v2763
    %v2821 = vpop.permute.xlu0 %2820
    %2822 = vset.pattern.permute.xlu0 0
    %2823 = vperm.xlu0 %2822, %v2764
    %v2824 = vpop.permute.xlu0 %2823
    %v2825 = vlaneseq
    %v2826 = vshrl.u32 %v2825, 7
    %v2827 = vsub.s32 %v33, %v2826
    %v2828 = vrot.slane %v2767, %v2827
    %v2829 = vlaneseq
    %v2830 = vshrl.u32 %v2829, 7
    %v2831 = vsub.s32 %v1553, %v2830
    %v2832 = vrot.slane %v2770, %v2831
    %v2833 = vsel %vm1558, %v2832, %v2828
    %v2834 = vlaneseq
    %v2835 = vshrl.u32 %v2834, 7
    %v2836 = vsub.s32 %v33, %v2835
    %v2837 = vrot.slane %v2773, %v2836
    %v2838 = vlaneseq
    %v2839 = vshrl.u32 %v2838, 7
    %v2840 = vsub.s32 %v1553, %v2839
    %v2841 = vrot.slane %v2776, %v2840
    %v2842 = vsel %vm1558, %v2841, %v2837
    %v2843 = vlaneseq
    %v2844 = vshrl.u32 %v2843, 7
    %v2845 = vsub.s32 %v33, %v2844
    %v2846 = vrot.slane %v2779, %v2845
    %v2847 = vlaneseq
    %v2848 = vshrl.u32 %v2847, 7
    %v2849 = vsub.s32 %v1553, %v2848
    %v2850 = vrot.slane %v2782, %v2849
    %v2851 = vsel %vm1558, %v2850, %v2846
    %v2852 = vlaneseq
    %v2853 = vshrl.u32 %v2852, 7
    %v2854 = vsub.s32 %v33, %v2853
    %v2855 = vrot.slane %v2785, %v2854
    %v2856 = vlaneseq
    %v2857 = vshrl.u32 %v2856, 7
    %v2858 = vsub.s32 %v1553, %v2857
    %v2859 = vrot.slane %v2788, %v2858
    %v2860 = vsel %vm1558, %v2859, %v2855
    %v2861 = vlaneseq
    %v2862 = vshrl.u32 %v2861, 7
    %v2863 = vsub.s32 %v33, %v2862
    %v2864 = vrot.slane %v2791, %v2863
    %v2865 = vlaneseq
    %v2866 = vshrl.u32 %v2865, 7
    %v2867 = vsub.s32 %v1553, %v2866
    %v2868 = vrot.slane %v2794, %v2867
    %v2869 = vsel %vm1558, %v2868, %v2864
    %v2870 = vlaneseq
    %v2871 = vshrl.u32 %v2870, 7
    %v2872 = vsub.s32 %v33, %v2871
    %v2873 = vrot.slane %v2797, %v2872
    %v2874 = vlaneseq
    %v2875 = vshrl.u32 %v2874, 7
    %v2876 = vsub.s32 %v1553, %v2875
    %v2877 = vrot.slane %v2800, %v2876
    %v2878 = vsel %vm1558, %v2877, %v2873
    %v2879 = vlaneseq
    %v2880 = vshrl.u32 %v2879, 7
    %v2881 = vsub.s32 %v33, %v2880
    %v2882 = vrot.slane %v2803, %v2881
    %v2883 = vlaneseq
    %v2884 = vshrl.u32 %v2883, 7
    %v2885 = vsub.s32 %v1553, %v2884
    %v2886 = vrot.slane %v2806, %v2885
    %v2887 = vsel %vm1558, %v2886, %v2882
    %v2888 = vlaneseq
    %v2889 = vshrl.u32 %v2888, 7
    %v2890 = vsub.s32 %v33, %v2889
    %v2891 = vrot.slane %v2809, %v2890
    %v2892 = vlaneseq
    %v2893 = vshrl.u32 %v2892, 7
    %v2894 = vsub.s32 %v1553, %v2893
    %v2895 = vrot.slane %v2812, %v2894
    %v2896 = vsel %vm1558, %v2895, %v2891
    %v2897 = vlaneseq
    %v2898 = vshrl.u32 %v2897, 7
    %v2899 = vsub.s32 %v33, %v2898
    %v2900 = vrot.slane %v2815, %v2899
    %v2901 = vlaneseq
    %v2902 = vshrl.u32 %v2901, 7
    %v2903 = vsub.s32 %v1553, %v2902
    %v2904 = vrot.slane %v2818, %v2903
    %v2905 = vsel %vm1558, %v2904, %v2900
    %v2906 = vlaneseq
    %v2907 = vshrl.u32 %v2906, 7
    %v2908 = vsub.s32 %v33, %v2907
    %v2909 = vrot.slane %v2821, %v2908
    %v2910 = vlaneseq
    %v2911 = vshrl.u32 %v2910, 7
    %v2912 = vsub.s32 %v1553, %v2911
    %v2913 = vrot.slane %v2824, %v2912
    %v2914 = vsel %vm1558, %v2913, %v2909
    %v2915 = vsel %vm1641, %v2842, %v2833
    %v2916 = vsel %vm1643, %v2851, %v2915
    %v2917 = vsel %vm1645, %v2860, %v2916
    %v2918 = vsel %vm1647, %v2869, %v2917
    %v2919 = vsel %vm1649, %v2878, %v2918
    %v2920 = vsel %vm1651, %v2887, %v2919
    %v2921 = vsel %vm1653, %v2896, %v2920
    %v2922 = vsel %vm1641, %v2914, %v2905
    %v2923 = vsel %vm1293, %v2921, 2147483647
    %v2924 = vand.u32 %v2923, 65535
    %v2925 = vshra.s32 %v2923, 16
    %v2926 = vcvt.s32.f32 %v2924
    %v2927 = vcvt.s32.f32 %v2925
    %2928 = vmin.xlane.f32.xlu0 %v2927
    %v2929 = vpop.xlane.xlu0 %2928
    %vm2930 = vcmp.eq.f32.partialorder %v2927, %v2929
    %v2931 = vsel %vm2930, %v2926, inf
    %2932 = vmin.xlane.f32.xlu0 %v2931
    %v2933 = vpop.xlane.xlu0 %2932
    %v2934 = vcvt.f32.s32 %v2933
    %v2935 = vcvt.f32.s32 %v2929
    %v2936 = vshll.u32 %v2935, 16
    %v2937 = vadd.s32 %v2936, %v2934
    %v2938 = vsel %vm1297, %v2922, 2147483647
    %v2939 = vand.u32 %v2938, 65535
    %v2940 = vshra.s32 %v2938, 16
    %v2941 = vcvt.s32.f32 %v2939
    %v2942 = vcvt.s32.f32 %v2940
    %2943 = vmin.xlane.f32.xlu0 %v2942
    %v2944 = vpop.xlane.xlu0 %2943
    %vm2945 = vcmp.eq.f32.partialorder %v2942, %v2944
    %v2946 = vsel %vm2945, %v2941, inf
    %2947 = vmin.xlane.f32.xlu0 %v2946
    %v2948 = vpop.xlane.xlu0 %2947
    %v2949 = vcvt.f32.s32 %v2948
    %v2950 = vcvt.f32.s32 %v2944
    %v2951 = vshll.u32 %v2950, 16
    %v2952 = vadd.s32 %v2951, %v2949
    %v2953 = vlaneseq
    %v2954 = vshrl.u32 %v2953, 7
    %v2955 = vsub.s32 3, %v2954
    %v2956 = vrot.slane %v1285, %v2955
    %2958 = vbcast.lane.b32.xlu0 %v2956, 256
    %v2959 = vpop.permute.xlu0 %2958
    %s2961 = sor.u32 256, 8
    %2962 = vbcast.lane.b32.xlu0 %v2956, %s2961
    %v2963 = vpop.permute.xlu0 %2962
    %v2966 = vadd.f32 %v2669, %v2959
    %v2967 = vadd.f32 %v2672, %v2963
    %v2968 = vadd.f32 %v2966, %v1325
    %v2969 = vadd.f32 %v2967, %v1329
    %v2970 = vadd.f32 %v2966, %v1336
    %v2971 = vadd.f32 %v2967, %v1340
    %v2972 = vadd.f32 %v2966, %v1347
    %v2973 = vadd.f32 %v2967, %v1351
    %v2974 = vadd.f32 %v2966, %v1358
    %v2975 = vadd.f32 %v2967, %v1362
    %v2976 = vadd.f32 %v2966, %v1369
    %v2977 = vadd.f32 %v2967, %v1373
    %v2978 = vadd.f32 %v2966, %v1380
    %v2979 = vadd.f32 %v2967, %v1384
    %v2980 = vadd.f32 %v2966, %v1391
    %v2981 = vadd.f32 %v2967, %v1395
    %v2982 = vadd.f32 %v2966, %v1402
    %v2983 = vadd.f32 %v2967, %v1406
    %v2984 = vadd.f32 %v2966, %v1413
    %v2985 = vadd.f32 %v2967, %v1417
    %v2986 = vadd.f32 %v2966, %v1424
    %v2987 = vadd.f32 %v2967, %v1428
    %3008 = vset.pattern.permute.xlu0 0
    %3009 = vperm.xlu0 %3008, %v2968
    %v3010 = vpop.permute.xlu0 %3009
    %3011 = vset.pattern.permute.xlu0 0
    %3012 = vperm.xlu0 %3011, %v2969
    %v3013 = vpop.permute.xlu0 %3012
    %3014 = vset.pattern.permute.xlu0 0
    %3015 = vperm.xlu0 %3014, %v2970
    %v3016 = vpop.permute.xlu0 %3015
    %3017 = vset.pattern.permute.xlu0 0
    %3018 = vperm.xlu0 %3017, %v2971
    %v3019 = vpop.permute.xlu0 %3018
    %3020 = vset.pattern.permute.xlu0 0
    %3021 = vperm.xlu0 %3020, %v2972
    %v3022 = vpop.permute.xlu0 %3021
    %3023 = vset.pattern.permute.xlu0 0
    %3024 = vperm.xlu0 %3023, %v2973
    %v3025 = vpop.permute.xlu0 %3024
    %3026 = vset.pattern.permute.xlu0 0
    %3027 = vperm.xlu0 %3026, %v2974
    %v3028 = vpop.permute.xlu0 %3027
    %3029 = vset.pattern.permute.xlu0 0
    %3030 = vperm.xlu0 %3029, %v2975
    %v3031 = vpop.permute.xlu0 %3030
    %3032 = vset.pattern.permute.xlu0 0
    %3033 = vperm.xlu0 %3032, %v2976
    %v3034 = vpop.permute.xlu0 %3033
    %3035 = vset.pattern.permute.xlu0 0
    %3036 = vperm.xlu0 %3035, %v2977
    %v3037 = vpop.permute.xlu0 %3036
    %3038 = vset.pattern.permute.xlu0 0
    %3039 = vperm.xlu0 %3038, %v2978
    %v3040 = vpop.permute.xlu0 %3039
    %3041 = vset.pattern.permute.xlu0 0
    %3042 = vperm.xlu0 %3041, %v2979
    %v3043 = vpop.permute.xlu0 %3042
    %3044 = vset.pattern.permute.xlu0 0
    %3045 = vperm.xlu0 %3044, %v2980
    %v3046 = vpop.permute.xlu0 %3045
    %3047 = vset.pattern.permute.xlu0 0
    %3048 = vperm.xlu0 %3047, %v2981
    %v3049 = vpop.permute.xlu0 %3048
    %3050 = vset.pattern.permute.xlu0 0
    %3051 = vperm.xlu0 %3050, %v2982
    %v3052 = vpop.permute.xlu0 %3051
    %3053 = vset.pattern.permute.xlu0 0
    %3054 = vperm.xlu0 %3053, %v2983
    %v3055 = vpop.permute.xlu0 %3054
    %3056 = vset.pattern.permute.xlu0 0
    %3057 = vperm.xlu0 %3056, %v2984
    %v3058 = vpop.permute.xlu0 %3057
    %3059 = vset.pattern.permute.xlu0 0
    %3060 = vperm.xlu0 %3059, %v2985
    %v3061 = vpop.permute.xlu0 %3060
    %3062 = vset.pattern.permute.xlu0 0
    %3063 = vperm.xlu0 %3062, %v2986
    %v3064 = vpop.permute.xlu0 %3063
    %3065 = vset.pattern.permute.xlu0 0
    %3066 = vperm.xlu0 %3065, %v2987
    %v3067 = vpop.permute.xlu0 %3066
    %v3068 = vlaneseq
    %v3069 = vshrl.u32 %v3068, 7
    %v3070 = vsub.s32 %v33, %v3069
    %v3071 = vrot.slane %v3010, %v3070
    %v3072 = vlaneseq
    %v3073 = vshrl.u32 %v3072, 7
    %v3074 = vsub.s32 %v1553, %v3073
    %v3075 = vrot.slane %v3013, %v3074
    %v3076 = vsel %vm1558, %v3075, %v3071
    %v3077 = vlaneseq
    %v3078 = vshrl.u32 %v3077, 7
    %v3079 = vsub.s32 %v33, %v3078
    %v3080 = vrot.slane %v3016, %v3079
    %v3081 = vlaneseq
    %v3082 = vshrl.u32 %v3081, 7
    %v3083 = vsub.s32 %v1553, %v3082
    %v3084 = vrot.slane %v3019, %v3083
    %v3085 = vsel %vm1558, %v3084, %v3080
    %v3086 = vlaneseq
    %v3087 = vshrl.u32 %v3086, 7
    %v3088 = vsub.s32 %v33, %v3087
    %v3089 = vrot.slane %v3022, %v3088
    %v3090 = vlaneseq
    %v3091 = vshrl.u32 %v3090, 7
    %v3092 = vsub.s32 %v1553, %v3091
    %v3093 = vrot.slane %v3025, %v3092
    %v3094 = vsel %vm1558, %v3093, %v3089
    %v3095 = vlaneseq
    %v3096 = vshrl.u32 %v3095, 7
    %v3097 = vsub.s32 %v33, %v3096
    %v3098 = vrot.slane %v3028, %v3097
    %v3099 = vlaneseq
    %v3100 = vshrl.u32 %v3099, 7
    %v3101 = vsub.s32 %v1553, %v3100
    %v3102 = vrot.slane %v3031, %v3101
    %v3103 = vsel %vm1558, %v3102, %v3098
    %v3104 = vlaneseq
    %v3105 = vshrl.u32 %v3104, 7
    %v3106 = vsub.s32 %v33, %v3105
    %v3107 = vrot.slane %v3034, %v3106
    %v3108 = vlaneseq
    %v3109 = vshrl.u32 %v3108, 7
    %v3110 = vsub.s32 %v1553, %v3109
    %v3111 = vrot.slane %v3037, %v3110
    %v3112 = vsel %vm1558, %v3111, %v3107
    %v3113 = vlaneseq
    %v3114 = vshrl.u32 %v3113, 7
    %v3115 = vsub.s32 %v33, %v3114
    %v3116 = vrot.slane %v3040, %v3115
    %v3117 = vlaneseq
    %v3118 = vshrl.u32 %v3117, 7
    %v3119 = vsub.s32 %v1553, %v3118
    %v3120 = vrot.slane %v3043, %v3119
    %v3121 = vsel %vm1558, %v3120, %v3116
    %v3122 = vlaneseq
    %v3123 = vshrl.u32 %v3122, 7
    %v3124 = vsub.s32 %v33, %v3123
    %v3125 = vrot.slane %v3046, %v3124
    %v3126 = vlaneseq
    %v3127 = vshrl.u32 %v3126, 7
    %v3128 = vsub.s32 %v1553, %v3127
    %v3129 = vrot.slane %v3049, %v3128
    %v3130 = vsel %vm1558, %v3129, %v3125
    %v3131 = vlaneseq
    %v3132 = vshrl.u32 %v3131, 7
    %v3133 = vsub.s32 %v33, %v3132
    %v3134 = vrot.slane %v3052, %v3133
    %v3135 = vlaneseq
    %v3136 = vshrl.u32 %v3135, 7
    %v3137 = vsub.s32 %v1553, %v3136
    %v3138 = vrot.slane %v3055, %v3137
    %v3139 = vsel %vm1558, %v3138, %v3134
    %v3140 = vlaneseq
    %v3141 = vshrl.u32 %v3140, 7
    %v3142 = vsub.s32 %v33, %v3141
    %v3143 = vrot.slane %v3058, %v3142
    %v3144 = vlaneseq
    %v3145 = vshrl.u32 %v3144, 7
    %v3146 = vsub.s32 %v1553, %v3145
    %v3147 = vrot.slane %v3061, %v3146
    %v3148 = vsel %vm1558, %v3147, %v3143
    %v3149 = vlaneseq
    %v3150 = vshrl.u32 %v3149, 7
    %v3151 = vsub.s32 %v33, %v3150
    %v3152 = vrot.slane %v3064, %v3151
    %v3153 = vlaneseq
    %v3154 = vshrl.u32 %v3153, 7
    %v3155 = vsub.s32 %v1553, %v3154
    %v3156 = vrot.slane %v3067, %v3155
    %v3157 = vsel %vm1558, %v3156, %v3152
    %v3158 = vsel %vm1641, %v3085, %v3076
    %v3159 = vsel %vm1643, %v3094, %v3158
    %v3160 = vsel %vm1645, %v3103, %v3159
    %v3161 = vsel %vm1647, %v3112, %v3160
    %v3162 = vsel %vm1649, %v3121, %v3161
    %v3163 = vsel %vm1651, %v3130, %v3162
    %v3164 = vsel %vm1653, %v3139, %v3163
    %v3165 = vsel %vm1641, %v3157, %v3148
    %v3168 = vsel %vm1293, %v3164, -inf
    %3169 = vmax.xlane.f32.xlu0 %v3168
    %v3170 = vpop.xlane.xlu0 %3169
    %v3171 = vsel %vm1297, %v3165, -inf
    %3172 = vmax.xlane.f32.xlu0 %v3171
    %v3173 = vpop.xlane.xlu0 %3172
    %v3176 = vlaneseq
    %v3177 = vshrl.u32 %v3176, 7
    %v3178 = vsub.s32 0, %v3177
    %v3179 = vrot.slane %v3170, %v3178
    %v3180 = vlaneseq
    %v3181 = vshrl.u32 %v3180, 7
    %v3182 = vsub.s32 1, %v3181
    %v3183 = vrot.slane %v3170, %v3182
    %v3184 = vlaneseq
    %v3185 = vshrl.u32 %v3184, 7
    %v3186 = vsub.s32 2, %v3185
    %v3187 = vrot.slane %v3170, %v3186
    %v3188 = vlaneseq
    %v3189 = vshrl.u32 %v3188, 7
    %v3190 = vsub.s32 3, %v3189
    %v3191 = vrot.slane %v3170, %v3190
    %v3192 = vlaneseq
    %v3193 = vshrl.u32 %v3192, 7
    %v3194 = vsub.s32 4, %v3193
    %v3195 = vrot.slane %v3170, %v3194
    %v3196 = vlaneseq
    %v3197 = vshrl.u32 %v3196, 7
    %v3198 = vsub.s32 5, %v3197
    %v3199 = vrot.slane %v3170, %v3198
    %v3200 = vlaneseq
    %v3201 = vshrl.u32 %v3200, 7
    %v3202 = vsub.s32 6, %v3201
    %v3203 = vrot.slane %v3170, %v3202
    %v3204 = vlaneseq
    %v3205 = vshrl.u32 %v3204, 7
    %v3206 = vsub.s32 7, %v3205
    %v3207 = vrot.slane %v3170, %v3206
    %v3208 = vlaneseq
    %v3209 = vshrl.u32 %v3208, 7
    %v3210 = vsub.s32 0, %v3209
    %v3211 = vrot.slane %v3173, %v3210
    %v3212 = vlaneseq
    %v3213 = vshrl.u32 %v3212, 7
    %v3214 = vsub.s32 1, %v3213
    %v3215 = vrot.slane %v3173, %v3214
    %vm3226 = vcmp.eq.f32.partialorder %v2968, %v3179
    %vm3227 = vcmp.eq.f32.partialorder %v2969, %v3179
    %vm3228 = vcmp.eq.f32.partialorder %v2970, %v3183
    %vm3229 = vcmp.eq.f32.partialorder %v2971, %v3183
    %vm3230 = vcmp.eq.f32.partialorder %v2972, %v3187
    %vm3231 = vcmp.eq.f32.partialorder %v2973, %v3187
    %vm3232 = vcmp.eq.f32.partialorder %v2974, %v3191
    %vm3233 = vcmp.eq.f32.partialorder %v2975, %v3191
    %vm3234 = vcmp.eq.f32.partialorder %v2976, %v3195
    %vm3235 = vcmp.eq.f32.partialorder %v2977, %v3195
    %vm3236 = vcmp.eq.f32.partialorder %v2978, %v3199
    %vm3237 = vcmp.eq.f32.partialorder %v2979, %v3199
    %vm3238 = vcmp.eq.f32.partialorder %v2980, %v3203
    %vm3239 = vcmp.eq.f32.partialorder %v2981, %v3203
    %vm3240 = vcmp.eq.f32.partialorder %v2982, %v3207
    %vm3241 = vcmp.eq.f32.partialorder %v2983, %v3207
    %vm3242 = vcmp.eq.f32.partialorder %v2984, %v3211
    %vm3243 = vcmp.eq.f32.partialorder %v2985, %v3211
    %vm3244 = vcmp.eq.f32.partialorder %v2986, %v3215
    %vm3245 = vcmp.eq.f32.partialorder %v2987, %v3215
    %v3246 = vsel %vm3226, %v1738, 10
    %v3247 = vsel %vm3227, %v1742, 10
    %v3248 = vsel %vm3228, %v1738, 10
    %v3249 = vsel %vm3229, %v1742, 10
    %v3250 = vsel %vm3230, %v1738, 10
    %v3251 = vsel %vm3231, %v1742, 10
    %v3252 = vsel %vm3232, %v1738, 10
    %v3253 = vsel %vm3233, %v1742, 10
    %v3254 = vsel %vm3234, %v1738, 10
    %v3255 = vsel %vm3235, %v1742, 10
    %v3256 = vsel %vm3236, %v1738, 10
    %v3257 = vsel %vm3237, %v1742, 10
    %v3258 = vsel %vm3238, %v1738, 10
    %v3259 = vsel %vm3239, %v1742, 10
    %v3260 = vsel %vm3240, %v1738, 10
    %v3261 = vsel %vm3241, %v1742, 10
    %v3262 = vsel %vm3242, %v1738, 10
    %v3263 = vsel %vm3243, %v1742, 10
    %v3264 = vsel %vm3244, %v1738, 10
    %v3265 = vsel %vm3245, %v1742, 10
    %3266 = vset.pattern.permute.xlu0 0
    %3267 = vperm.xlu0 %3266, %v3246
    %v3268 = vpop.permute.xlu0 %3267
    %3269 = vset.pattern.permute.xlu0 0
    %3270 = vperm.xlu0 %3269, %v3247
    %v3271 = vpop.permute.xlu0 %3270
    %3272 = vset.pattern.permute.xlu0 0
    %3273 = vperm.xlu0 %3272, %v3248
    %v3274 = vpop.permute.xlu0 %3273
    %3275 = vset.pattern.permute.xlu0 0
    %3276 = vperm.xlu0 %3275, %v3249
    %v3277 = vpop.permute.xlu0 %3276
    %3278 = vset.pattern.permute.xlu0 0
    %3279 = vperm.xlu0 %3278, %v3250
    %v3280 = vpop.permute.xlu0 %3279
    %3281 = vset.pattern.permute.xlu0 0
    %3282 = vperm.xlu0 %3281, %v3251
    %v3283 = vpop.permute.xlu0 %3282
    %3284 = vset.pattern.permute.xlu0 0
    %3285 = vperm.xlu0 %3284, %v3252
    %v3286 = vpop.permute.xlu0 %3285
    %3287 = vset.pattern.permute.xlu0 0
    %3288 = vperm.xlu0 %3287, %v3253
    %v3289 = vpop.permute.xlu0 %3288
    %3290 = vset.pattern.permute.xlu0 0
    %3291 = vperm.xlu0 %3290, %v3254
    %v3292 = vpop.permute.xlu0 %3291
    %3293 = vset.pattern.permute.xlu0 0
    %3294 = vperm.xlu0 %3293, %v3255
    %v3295 = vpop.permute.xlu0 %3294
    %3296 = vset.pattern.permute.xlu0 0
    %3297 = vperm.xlu0 %3296, %v3256
    %v3298 = vpop.permute.xlu0 %3297
    %3299 = vset.pattern.permute.xlu0 0
    %3300 = vperm.xlu0 %3299, %v3257
    %v3301 = vpop.permute.xlu0 %3300
    %3302 = vset.pattern.permute.xlu0 0
    %3303 = vperm.xlu0 %3302, %v3258
    %v3304 = vpop.permute.xlu0 %3303
    %3305 = vset.pattern.permute.xlu0 0
    %3306 = vperm.xlu0 %3305, %v3259
    %v3307 = vpop.permute.xlu0 %3306
    %3308 = vset.pattern.permute.xlu0 0
    %3309 = vperm.xlu0 %3308, %v3260
    %v3310 = vpop.permute.xlu0 %3309
    %3311 = vset.pattern.permute.xlu0 0
    %3312 = vperm.xlu0 %3311, %v3261
    %v3313 = vpop.permute.xlu0 %3312
    %3314 = vset.pattern.permute.xlu0 0
    %3315 = vperm.xlu0 %3314, %v3262
    %v3316 = vpop.permute.xlu0 %3315
    %3317 = vset.pattern.permute.xlu0 0
    %3318 = vperm.xlu0 %3317, %v3263
    %v3319 = vpop.permute.xlu0 %3318
    %3320 = vset.pattern.permute.xlu0 0
    %3321 = vperm.xlu0 %3320, %v3264
    %v3322 = vpop.permute.xlu0 %3321
    %3323 = vset.pattern.permute.xlu0 0
    %3324 = vperm.xlu0 %3323, %v3265
    %v3325 = vpop.permute.xlu0 %3324
    %v3326 = vlaneseq
    %v3327 = vshrl.u32 %v3326, 7
    %v3328 = vsub.s32 %v33, %v3327
    %v3329 = vrot.slane %v3268, %v3328
    %v3330 = vlaneseq
    %v3331 = vshrl.u32 %v3330, 7
    %v3332 = vsub.s32 %v1553, %v3331
    %v3333 = vrot.slane %v3271, %v3332
    %v3334 = vsel %vm1558, %v3333, %v3329
    %v3335 = vlaneseq
    %v3336 = vshrl.u32 %v3335, 7
    %v3337 = vsub.s32 %v33, %v3336
    %v3338 = vrot.slane %v3274, %v3337
    %v3339 = vlaneseq
    %v3340 = vshrl.u32 %v3339, 7
    %v3341 = vsub.s32 %v1553, %v3340
    %v3342 = vrot.slane %v3277, %v3341
    %v3343 = vsel %vm1558, %v3342, %v3338
    %v3344 = vlaneseq
    %v3345 = vshrl.u32 %v3344, 7
    %v3346 = vsub.s32 %v33, %v3345
    %v3347 = vrot.slane %v3280, %v3346
    %v3348 = vlaneseq
    %v3349 = vshrl.u32 %v3348, 7
    %v3350 = vsub.s32 %v1553, %v3349
    %v3351 = vrot.slane %v3283, %v3350
    %v3352 = vsel %vm1558, %v3351, %v3347
    %v3353 = vlaneseq
    %v3354 = vshrl.u32 %v3353, 7
    %v3355 = vsub.s32 %v33, %v3354
    %v3356 = vrot.slane %v3286, %v3355
    %v3357 = vlaneseq
    %v3358 = vshrl.u32 %v3357, 7
    %v3359 = vsub.s32 %v1553, %v3358
    %v3360 = vrot.slane %v3289, %v3359
    %v3361 = vsel %vm1558, %v3360, %v3356
    %v3362 = vlaneseq
    %v3363 = vshrl.u32 %v3362, 7
    %v3364 = vsub.s32 %v33, %v3363
    %v3365 = vrot.slane %v3292, %v3364
    %v3366 = vlaneseq
    %v3367 = vshrl.u32 %v3366, 7
    %v3368 = vsub.s32 %v1553, %v3367
    %v3369 = vrot.slane %v3295, %v3368
    %v3370 = vsel %vm1558, %v3369, %v3365
    %v3371 = vlaneseq
    %v3372 = vshrl.u32 %v3371, 7
    %v3373 = vsub.s32 %v33, %v3372
    %v3374 = vrot.slane %v3298, %v3373
    %v3375 = vlaneseq
    %v3376 = vshrl.u32 %v3375, 7
    %v3377 = vsub.s32 %v1553, %v3376
    %v3378 = vrot.slane %v3301, %v3377
    %v3379 = vsel %vm1558, %v3378, %v3374
    %v3380 = vlaneseq
    %v3381 = vshrl.u32 %v3380, 7
    %v3382 = vsub.s32 %v33, %v3381
    %v3383 = vrot.slane %v3304, %v3382
    %v3384 = vlaneseq
    %v3385 = vshrl.u32 %v3384, 7
    %v3386 = vsub.s32 %v1553, %v3385
    %v3387 = vrot.slane %v3307, %v3386
    %v3388 = vsel %vm1558, %v3387, %v3383
    %v3389 = vlaneseq
    %v3390 = vshrl.u32 %v3389, 7
    %v3391 = vsub.s32 %v33, %v3390
    %v3392 = vrot.slane %v3310, %v3391
    %v3393 = vlaneseq
    %v3394 = vshrl.u32 %v3393, 7
    %v3395 = vsub.s32 %v1553, %v3394
    %v3396 = vrot.slane %v3313, %v3395
    %v3397 = vsel %vm1558, %v3396, %v3392
    %v3398 = vlaneseq
    %v3399 = vshrl.u32 %v3398, 7
    %v3400 = vsub.s32 %v33, %v3399
    %v3401 = vrot.slane %v3316, %v3400
    %v3402 = vlaneseq
    %v3403 = vshrl.u32 %v3402, 7
    %v3404 = vsub.s32 %v1553, %v3403
    %v3405 = vrot.slane %v3319, %v3404
    %v3406 = vsel %vm1558, %v3405, %v3401
    %v3407 = vlaneseq
    %v3408 = vshrl.u32 %v3407, 7
    %v3409 = vsub.s32 %v33, %v3408
    %v3410 = vrot.slane %v3322, %v3409
    %v3411 = vlaneseq
    %v3412 = vshrl.u32 %v3411, 7
    %v3413 = vsub.s32 %v1553, %v3412
    %v3414 = vrot.slane %v3325, %v3413
    %v3415 = vsel %vm1558, %v3414, %v3410
    %v3416 = vsel %vm1641, %v3343, %v3334
    %v3417 = vsel %vm1643, %v3352, %v3416
    %v3418 = vsel %vm1645, %v3361, %v3417
    %v3419 = vsel %vm1647, %v3370, %v3418
    %v3420 = vsel %vm1649, %v3379, %v3419
    %v3421 = vsel %vm1651, %v3388, %v3420
    %v3422 = vsel %vm1653, %v3397, %v3421
    %v3423 = vsel %vm1641, %v3415, %v3406
    %v3424 = vsel %vm1293, %v3422, 2147483647
    %v3425 = vand.u32 %v3424, 65535
    %v3426 = vshra.s32 %v3424, 16
    %v3427 = vcvt.s32.f32 %v3425
    %v3428 = vcvt.s32.f32 %v3426
    %3429 = vmin.xlane.f32.xlu0 %v3428
    %v3430 = vpop.xlane.xlu0 %3429
    %vm3431 = vcmp.eq.f32.partialorder %v3428, %v3430
    %v3432 = vsel %vm3431, %v3427, inf
    %3433 = vmin.xlane.f32.xlu0 %v3432
    %v3434 = vpop.xlane.xlu0 %3433
    %v3435 = vcvt.f32.s32 %v3434
    %v3436 = vcvt.f32.s32 %v3430
    %v3437 = vshll.u32 %v3436, 16
    %v3438 = vadd.s32 %v3437, %v3435
    %v3439 = vsel %vm1297, %v3423, 2147483647
    %v3440 = vand.u32 %v3439, 65535
    %v3441 = vshra.s32 %v3439, 16
    %v3442 = vcvt.s32.f32 %v3440
    %v3443 = vcvt.s32.f32 %v3441
    %3444 = vmin.xlane.f32.xlu0 %v3443
    %v3445 = vpop.xlane.xlu0 %3444
    %vm3446 = vcmp.eq.f32.partialorder %v3443, %v3445
    %v3447 = vsel %vm3446, %v3442, inf
    %3448 = vmin.xlane.f32.xlu0 %v3447
    %v3449 = vpop.xlane.xlu0 %3448
    %v3450 = vcvt.f32.s32 %v3449
    %v3451 = vcvt.f32.s32 %v3445
    %v3452 = vshll.u32 %v3451, 16
    %v3453 = vadd.s32 %v3452, %v3450
    %v3454 = vlaneseq
    %v3455 = vshrl.u32 %v3454, 7
    %v3456 = vsub.s32 4, %v3455
    %v3457 = vrot.slane %v1285, %v3456
    %3459 = vbcast.lane.b32.xlu0 %v3457, 256
    %v3460 = vpop.permute.xlu0 %3459
    %s3462 = sor.u32 256, 8
    %3463 = vbcast.lane.b32.xlu0 %v3457, %s3462
    %v3464 = vpop.permute.xlu0 %3463
    %v3467 = vadd.f32 %v3170, %v3460
    %v3468 = vadd.f32 %v3173, %v3464
    %v3469 = vadd.f32 %v3467, %v1325
    %v3470 = vadd.f32 %v3468, %v1329
    %v3471 = vadd.f32 %v3467, %v1336
    %v3472 = vadd.f32 %v3468, %v1340
    %v3473 = vadd.f32 %v3467, %v1347
    %v3474 = vadd.f32 %v3468, %v1351
    %v3475 = vadd.f32 %v3467, %v1358
    %v3476 = vadd.f32 %v3468, %v1362
    %v3477 = vadd.f32 %v3467, %v1369
    %v3478 = vadd.f32 %v3468, %v1373
    %v3479 = vadd.f32 %v3467, %v1380
    %v3480 = vadd.f32 %v3468, %v1384
    %v3481 = vadd.f32 %v3467, %v1391
    %v3482 = vadd.f32 %v3468, %v1395
    %v3483 = vadd.f32 %v3467, %v1402
    %v3484 = vadd.f32 %v3468, %v1406
    %v3485 = vadd.f32 %v3467, %v1413
    %v3486 = vadd.f32 %v3468, %v1417
    %v3487 = vadd.f32 %v3467, %v1424
    %v3488 = vadd.f32 %v3468, %v1428
    %3509 = vset.pattern.permute.xlu0 0
    %3510 = vperm.xlu0 %3509, %v3469
    %v3511 = vpop.permute.xlu0 %3510
    %3512 = vset.pattern.permute.xlu0 0
    %3513 = vperm.xlu0 %3512, %v3470
    %v3514 = vpop.permute.xlu0 %3513
    %3515 = vset.pattern.permute.xlu0 0
    %3516 = vperm.xlu0 %3515, %v3471
    %v3517 = vpop.permute.xlu0 %3516
    %3518 = vset.pattern.permute.xlu0 0
    %3519 = vperm.xlu0 %3518, %v3472
    %v3520 = vpop.permute.xlu0 %3519
    %3521 = vset.pattern.permute.xlu0 0
    %3522 = vperm.xlu0 %3521, %v3473
    %v3523 = vpop.permute.xlu0 %3522
    %3524 = vset.pattern.permute.xlu0 0
    %3525 = vperm.xlu0 %3524, %v3474
    %v3526 = vpop.permute.xlu0 %3525
    %3527 = vset.pattern.permute.xlu0 0
    %3528 = vperm.xlu0 %3527, %v3475
    %v3529 = vpop.permute.xlu0 %3528
    %3530 = vset.pattern.permute.xlu0 0
    %3531 = vperm.xlu0 %3530, %v3476
    %v3532 = vpop.permute.xlu0 %3531
    %3533 = vset.pattern.permute.xlu0 0
    %3534 = vperm.xlu0 %3533, %v3477
    %v3535 = vpop.permute.xlu0 %3534
    %3536 = vset.pattern.permute.xlu0 0
    %3537 = vperm.xlu0 %3536, %v3478
    %v3538 = vpop.permute.xlu0 %3537
    %3539 = vset.pattern.permute.xlu0 0
    %3540 = vperm.xlu0 %3539, %v3479
    %v3541 = vpop.permute.xlu0 %3540
    %3542 = vset.pattern.permute.xlu0 0
    %3543 = vperm.xlu0 %3542, %v3480
    %v3544 = vpop.permute.xlu0 %3543
    %3545 = vset.pattern.permute.xlu0 0
    %3546 = vperm.xlu0 %3545, %v3481
    %v3547 = vpop.permute.xlu0 %3546
    %3548 = vset.pattern.permute.xlu0 0
    %3549 = vperm.xlu0 %3548, %v3482
    %v3550 = vpop.permute.xlu0 %3549
    %3551 = vset.pattern.permute.xlu0 0
    %3552 = vperm.xlu0 %3551, %v3483
    %v3553 = vpop.permute.xlu0 %3552
    %3554 = vset.pattern.permute.xlu0 0
    %3555 = vperm.xlu0 %3554, %v3484
    %v3556 = vpop.permute.xlu0 %3555
    %3557 = vset.pattern.permute.xlu0 0
    %3558 = vperm.xlu0 %3557, %v3485
    %v3559 = vpop.permute.xlu0 %3558
    %3560 = vset.pattern.permute.xlu0 0
    %3561 = vperm.xlu0 %3560, %v3486
    %v3562 = vpop.permute.xlu0 %3561
    %3563 = vset.pattern.permute.xlu0 0
    %3564 = vperm.xlu0 %3563, %v3487
    %v3565 = vpop.permute.xlu0 %3564
    %3566 = vset.pattern.permute.xlu0 0
    %3567 = vperm.xlu0 %3566, %v3488
    %v3568 = vpop.permute.xlu0 %3567
    %v3569 = vlaneseq
    %v3570 = vshrl.u32 %v3569, 7
    %v3571 = vsub.s32 %v33, %v3570
    %v3572 = vrot.slane %v3511, %v3571
    %v3573 = vlaneseq
    %v3574 = vshrl.u32 %v3573, 7
    %v3575 = vsub.s32 %v1553, %v3574
    %v3576 = vrot.slane %v3514, %v3575
    %v3577 = vsel %vm1558, %v3576, %v3572
    %v3578 = vlaneseq
    %v3579 = vshrl.u32 %v3578, 7
    %v3580 = vsub.s32 %v33, %v3579
    %v3581 = vrot.slane %v3517, %v3580
    %v3582 = vlaneseq
    %v3583 = vshrl.u32 %v3582, 7
    %v3584 = vsub.s32 %v1553, %v3583
    %v3585 = vrot.slane %v3520, %v3584
    %v3586 = vsel %vm1558, %v3585, %v3581
    %v3587 = vlaneseq
    %v3588 = vshrl.u32 %v3587, 7
    %v3589 = vsub.s32 %v33, %v3588
    %v3590 = vrot.slane %v3523, %v3589
    %v3591 = vlaneseq
    %v3592 = vshrl.u32 %v3591, 7
    %v3593 = vsub.s32 %v1553, %v3592
    %v3594 = vrot.slane %v3526, %v3593
    %v3595 = vsel %vm1558, %v3594, %v3590
    %v3596 = vlaneseq
    %v3597 = vshrl.u32 %v3596, 7
    %v3598 = vsub.s32 %v33, %v3597
    %v3599 = vrot.slane %v3529, %v3598
    %v3600 = vlaneseq
    %v3601 = vshrl.u32 %v3600, 7
    %v3602 = vsub.s32 %v1553, %v3601
    %v3603 = vrot.slane %v3532, %v3602
    %v3604 = vsel %vm1558, %v3603, %v3599
    %v3605 = vlaneseq
    %v3606 = vshrl.u32 %v3605, 7
    %v3607 = vsub.s32 %v33, %v3606
    %v3608 = vrot.slane %v3535, %v3607
    %v3609 = vlaneseq
    %v3610 = vshrl.u32 %v3609, 7
    %v3611 = vsub.s32 %v1553, %v3610
    %v3612 = vrot.slane %v3538, %v3611
    %v3613 = vsel %vm1558, %v3612, %v3608
    %v3614 = vlaneseq
    %v3615 = vshrl.u32 %v3614, 7
    %v3616 = vsub.s32 %v33, %v3615
    %v3617 = vrot.slane %v3541, %v3616
    %v3618 = vlaneseq
    %v3619 = vshrl.u32 %v3618, 7
    %v3620 = vsub.s32 %v1553, %v3619
    %v3621 = vrot.slane %v3544, %v3620
    %v3622 = vsel %vm1558, %v3621, %v3617
    %v3623 = vlaneseq
    %v3624 = vshrl.u32 %v3623, 7
    %v3625 = vsub.s32 %v33, %v3624
    %v3626 = vrot.slane %v3547, %v3625
    %v3627 = vlaneseq
    %v3628 = vshrl.u32 %v3627, 7
    %v3629 = vsub.s32 %v1553, %v3628
    %v3630 = vrot.slane %v3550, %v3629
    %v3631 = vsel %vm1558, %v3630, %v3626
    %v3632 = vlaneseq
    %v3633 = vshrl.u32 %v3632, 7
    %v3634 = vsub.s32 %v33, %v3633
    %v3635 = vrot.slane %v3553, %v3634
    %v3636 = vlaneseq
    %v3637 = vshrl.u32 %v3636, 7
    %v3638 = vsub.s32 %v1553, %v3637
    %v3639 = vrot.slane %v3556, %v3638
    %v3640 = vsel %vm1558, %v3639, %v3635
    %v3641 = vlaneseq
    %v3642 = vshrl.u32 %v3641, 7
    %v3643 = vsub.s32 %v33, %v3642
    %v3644 = vrot.slane %v3559, %v3643
    %v3645 = vlaneseq
    %v3646 = vshrl.u32 %v3645, 7
    %v3647 = vsub.s32 %v1553, %v3646
    %v3648 = vrot.slane %v3562, %v3647
    %v3649 = vsel %vm1558, %v3648, %v3644
    %v3650 = vlaneseq
    %v3651 = vshrl.u32 %v3650, 7
    %v3652 = vsub.s32 %v33, %v3651
    %v3653 = vrot.slane %v3565, %v3652
    %v3654 = vlaneseq
    %v3655 = vshrl.u32 %v3654, 7
    %v3656 = vsub.s32 %v1553, %v3655
    %v3657 = vrot.slane %v3568, %v3656
    %v3658 = vsel %vm1558, %v3657, %v3653
    %v3659 = vsel %vm1641, %v3586, %v3577
    %v3660 = vsel %vm1643, %v3595, %v3659
    %v3661 = vsel %vm1645, %v3604, %v3660
    %v3662 = vsel %vm1647, %v3613, %v3661
    %v3663 = vsel %vm1649, %v3622, %v3662
    %v3664 = vsel %vm1651, %v3631, %v3663
    %v3665 = vsel %vm1653, %v3640, %v3664
    %v3666 = vsel %vm1641, %v3658, %v3649
    %v3669 = vsel %vm1293, %v3665, -inf
    %3670 = vmax.xlane.f32.xlu0 %v3669
    %v3671 = vpop.xlane.xlu0 %3670
    %v3672 = vsel %vm1297, %v3666, -inf
    %3673 = vmax.xlane.f32.xlu0 %v3672
    %v3674 = vpop.xlane.xlu0 %3673
    %v3677 = vlaneseq
    %v3678 = vshrl.u32 %v3677, 7
    %v3679 = vsub.s32 0, %v3678
    %v3680 = vrot.slane %v3671, %v3679
    %v3681 = vlaneseq
    %v3682 = vshrl.u32 %v3681, 7
    %v3683 = vsub.s32 1, %v3682
    %v3684 = vrot.slane %v3671, %v3683
    %v3685 = vlaneseq
    %v3686 = vshrl.u32 %v3685, 7
    %v3687 = vsub.s32 2, %v3686
    %v3688 = vrot.slane %v3671, %v3687
    %v3689 = vlaneseq
    %v3690 = vshrl.u32 %v3689, 7
    %v3691 = vsub.s32 3, %v3690
    %v3692 = vrot.slane %v3671, %v3691
    %v3693 = vlaneseq
    %v3694 = vshrl.u32 %v3693, 7
    %v3695 = vsub.s32 4, %v3694
    %v3696 = vrot.slane %v3671, %v3695
    %v3697 = vlaneseq
    %v3698 = vshrl.u32 %v3697, 7
    %v3699 = vsub.s32 5, %v3698
    %v3700 = vrot.slane %v3671, %v3699
    %v3701 = vlaneseq
    %v3702 = vshrl.u32 %v3701, 7
    %v3703 = vsub.s32 6, %v3702
    %v3704 = vrot.slane %v3671, %v3703
    %v3705 = vlaneseq
    %v3706 = vshrl.u32 %v3705, 7
    %v3707 = vsub.s32 7, %v3706
    %v3708 = vrot.slane %v3671, %v3707
    %v3709 = vlaneseq
    %v3710 = vshrl.u32 %v3709, 7
    %v3711 = vsub.s32 0, %v3710
    %v3712 = vrot.slane %v3674, %v3711
    %v3713 = vlaneseq
    %v3714 = vshrl.u32 %v3713, 7
    %v3715 = vsub.s32 1, %v3714
    %v3716 = vrot.slane %v3674, %v3715
    %vm3727 = vcmp.eq.f32.partialorder %v3469, %v3680
    %vm3728 = vcmp.eq.f32.partialorder %v3470, %v3680
    %vm3729 = vcmp.eq.f32.partialorder %v3471, %v3684
    %vm3730 = vcmp.eq.f32.partialorder %v3472, %v3684
    %vm3731 = vcmp.eq.f32.partialorder %v3473, %v3688
    %vm3732 = vcmp.eq.f32.partialorder %v3474, %v3688
    %vm3733 = vcmp.eq.f32.partialorder %v3475, %v3692
    %vm3734 = vcmp.eq.f32.partialorder %v3476, %v3692
    %vm3735 = vcmp.eq.f32.partialorder %v3477, %v3696
    %vm3736 = vcmp.eq.f32.partialorder %v3478, %v3696
    %vm3737 = vcmp.eq.f32.partialorder %v3479, %v3700
    %vm3738 = vcmp.eq.f32.partialorder %v3480, %v3700
    %vm3739 = vcmp.eq.f32.partialorder %v3481, %v3704
    %vm3740 = vcmp.eq.f32.partialorder %v3482, %v3704
    %vm3741 = vcmp.eq.f32.partialorder %v3483, %v3708
    %vm3742 = vcmp.eq.f32.partialorder %v3484, %v3708
    %vm3743 = vcmp.eq.f32.partialorder %v3485, %v3712
    %vm3744 = vcmp.eq.f32.partialorder %v3486, %v3712
    %vm3745 = vcmp.eq.f32.partialorder %v3487, %v3716
    %vm3746 = vcmp.eq.f32.partialorder %v3488, %v3716
    %v3747 = vsel %vm3727, %v1738, 10
    %v3748 = vsel %vm3728, %v1742, 10
    %v3749 = vsel %vm3729, %v1738, 10
    %v3750 = vsel %vm3730, %v1742, 10
    %v3751 = vsel %vm3731, %v1738, 10
    %v3752 = vsel %vm3732, %v1742, 10
    %v3753 = vsel %vm3733, %v1738, 10
    %v3754 = vsel %vm3734, %v1742, 10
    %v3755 = vsel %vm3735, %v1738, 10
    %v3756 = vsel %vm3736, %v1742, 10
    %v3757 = vsel %vm3737, %v1738, 10
    %v3758 = vsel %vm3738, %v1742, 10
    %v3759 = vsel %vm3739, %v1738, 10
    %v3760 = vsel %vm3740, %v1742, 10
    %v3761 = vsel %vm3741, %v1738, 10
    %v3762 = vsel %vm3742, %v1742, 10
    %v3763 = vsel %vm3743, %v1738, 10
    %v3764 = vsel %vm3744, %v1742, 10
    %v3765 = vsel %vm3745, %v1738, 10
    %v3766 = vsel %vm3746, %v1742, 10
    %3767 = vset.pattern.permute.xlu0 0
    %3768 = vperm.xlu0 %3767, %v3747
    %v3769 = vpop.permute.xlu0 %3768
    %3770 = vset.pattern.permute.xlu0 0
    %3771 = vperm.xlu0 %3770, %v3748
    %v3772 = vpop.permute.xlu0 %3771
    %3773 = vset.pattern.permute.xlu0 0
    %3774 = vperm.xlu0 %3773, %v3749
    %v3775 = vpop.permute.xlu0 %3774
    %3776 = vset.pattern.permute.xlu0 0
    %3777 = vperm.xlu0 %3776, %v3750
    %v3778 = vpop.permute.xlu0 %3777
    %3779 = vset.pattern.permute.xlu0 0
    %3780 = vperm.xlu0 %3779, %v3751
    %v3781 = vpop.permute.xlu0 %3780
    %3782 = vset.pattern.permute.xlu0 0
    %3783 = vperm.xlu0 %3782, %v3752
    %v3784 = vpop.permute.xlu0 %3783
    %3785 = vset.pattern.permute.xlu0 0
    %3786 = vperm.xlu0 %3785, %v3753
    %v3787 = vpop.permute.xlu0 %3786
    %3788 = vset.pattern.permute.xlu0 0
    %3789 = vperm.xlu0 %3788, %v3754
    %v3790 = vpop.permute.xlu0 %3789
    %3791 = vset.pattern.permute.xlu0 0
    %3792 = vperm.xlu0 %3791, %v3755
    %v3793 = vpop.permute.xlu0 %3792
    %3794 = vset.pattern.permute.xlu0 0
    %3795 = vperm.xlu0 %3794, %v3756
    %v3796 = vpop.permute.xlu0 %3795
    %3797 = vset.pattern.permute.xlu0 0
    %3798 = vperm.xlu0 %3797, %v3757
    %v3799 = vpop.permute.xlu0 %3798
    %3800 = vset.pattern.permute.xlu0 0
    %3801 = vperm.xlu0 %3800, %v3758
    %v3802 = vpop.permute.xlu0 %3801
    %3803 = vset.pattern.permute.xlu0 0
    %3804 = vperm.xlu0 %3803, %v3759
    %v3805 = vpop.permute.xlu0 %3804
    %3806 = vset.pattern.permute.xlu0 0
    %3807 = vperm.xlu0 %3806, %v3760
    %v3808 = vpop.permute.xlu0 %3807
    %3809 = vset.pattern.permute.xlu0 0
    %3810 = vperm.xlu0 %3809, %v3761
    %v3811 = vpop.permute.xlu0 %3810
    %3812 = vset.pattern.permute.xlu0 0
    %3813 = vperm.xlu0 %3812, %v3762
    %v3814 = vpop.permute.xlu0 %3813
    %3815 = vset.pattern.permute.xlu0 0
    %3816 = vperm.xlu0 %3815, %v3763
    %v3817 = vpop.permute.xlu0 %3816
    %3818 = vset.pattern.permute.xlu0 0
    %3819 = vperm.xlu0 %3818, %v3764
    %v3820 = vpop.permute.xlu0 %3819
    %3821 = vset.pattern.permute.xlu0 0
    %3822 = vperm.xlu0 %3821, %v3765
    %v3823 = vpop.permute.xlu0 %3822
    %3824 = vset.pattern.permute.xlu0 0
    %3825 = vperm.xlu0 %3824, %v3766
    %v3826 = vpop.permute.xlu0 %3825
    %v3827 = vlaneseq
    %v3828 = vshrl.u32 %v3827, 7
    %v3829 = vsub.s32 %v33, %v3828
    %v3830 = vrot.slane %v3769, %v3829
    %v3831 = vlaneseq
    %v3832 = vshrl.u32 %v3831, 7
    %v3833 = vsub.s32 %v1553, %v3832
    %v3834 = vrot.slane %v3772, %v3833
    %v3835 = vsel %vm1558, %v3834, %v3830
    %v3836 = vlaneseq
    %v3837 = vshrl.u32 %v3836, 7
    %v3838 = vsub.s32 %v33, %v3837
    %v3839 = vrot.slane %v3775, %v3838
    %v3840 = vlaneseq
    %v3841 = vshrl.u32 %v3840, 7
    %v3842 = vsub.s32 %v1553, %v3841
    %v3843 = vrot.slane %v3778, %v3842
    %v3844 = vsel %vm1558, %v3843, %v3839
    %v3845 = vlaneseq
    %v3846 = vshrl.u32 %v3845, 7
    %v3847 = vsub.s32 %v33, %v3846
    %v3848 = vrot.slane %v3781, %v3847
    %v3849 = vlaneseq
    %v3850 = vshrl.u32 %v3849, 7
    %v3851 = vsub.s32 %v1553, %v3850
    %v3852 = vrot.slane %v3784, %v3851
    %v3853 = vsel %vm1558, %v3852, %v3848
    %v3854 = vlaneseq
    %v3855 = vshrl.u32 %v3854, 7
    %v3856 = vsub.s32 %v33, %v3855
    %v3857 = vrot.slane %v3787, %v3856
    %v3858 = vlaneseq
    %v3859 = vshrl.u32 %v3858, 7
    %v3860 = vsub.s32 %v1553, %v3859
    %v3861 = vrot.slane %v3790, %v3860
    %v3862 = vsel %vm1558, %v3861, %v3857
    %v3863 = vlaneseq
    %v3864 = vshrl.u32 %v3863, 7
    %v3865 = vsub.s32 %v33, %v3864
    %v3866 = vrot.slane %v3793, %v3865
    %v3867 = vlaneseq
    %v3868 = vshrl.u32 %v3867, 7
    %v3869 = vsub.s32 %v1553, %v3868
    %v3870 = vrot.slane %v3796, %v3869
    %v3871 = vsel %vm1558, %v3870, %v3866
    %v3872 = vlaneseq
    %v3873 = vshrl.u32 %v3872, 7
    %v3874 = vsub.s32 %v33, %v3873
    %v3875 = vrot.slane %v3799, %v3874
    %v3876 = vlaneseq
    %v3877 = vshrl.u32 %v3876, 7
    %v3878 = vsub.s32 %v1553, %v3877
    %v3879 = vrot.slane %v3802, %v3878
    %v3880 = vsel %vm1558, %v3879, %v3875
    %v3881 = vlaneseq
    %v3882 = vshrl.u32 %v3881, 7
    %v3883 = vsub.s32 %v33, %v3882
    %v3884 = vrot.slane %v3805, %v3883
    %v3885 = vlaneseq
    %v3886 = vshrl.u32 %v3885, 7
    %v3887 = vsub.s32 %v1553, %v3886
    %v3888 = vrot.slane %v3808, %v3887
    %v3889 = vsel %vm1558, %v3888, %v3884
    %v3890 = vlaneseq
    %v3891 = vshrl.u32 %v3890, 7
    %v3892 = vsub.s32 %v33, %v3891
    %v3893 = vrot.slane %v3811, %v3892
    %v3894 = vlaneseq
    %v3895 = vshrl.u32 %v3894, 7
    %v3896 = vsub.s32 %v1553, %v3895
    %v3897 = vrot.slane %v3814, %v3896
    %v3898 = vsel %vm1558, %v3897, %v3893
    %v3899 = vlaneseq
    %v3900 = vshrl.u32 %v3899, 7
    %v3901 = vsub.s32 %v33, %v3900
    %v3902 = vrot.slane %v3817, %v3901
    %v3903 = vlaneseq
    %v3904 = vshrl.u32 %v3903, 7
    %v3905 = vsub.s32 %v1553, %v3904
    %v3906 = vrot.slane %v3820, %v3905
    %v3907 = vsel %vm1558, %v3906, %v3902
    %v3908 = vlaneseq
    %v3909 = vshrl.u32 %v3908, 7
    %v3910 = vsub.s32 %v33, %v3909
    %v3911 = vrot.slane %v3823, %v3910
    %v3912 = vlaneseq
    %v3913 = vshrl.u32 %v3912, 7
    %v3914 = vsub.s32 %v1553, %v3913
    %v3915 = vrot.slane %v3826, %v3914
    %v3916 = vsel %vm1558, %v3915, %v3911
    %v3917 = vsel %vm1641, %v3844, %v3835
    %v3918 = vsel %vm1643, %v3853, %v3917
    %v3919 = vsel %vm1645, %v3862, %v3918
    %v3920 = vsel %vm1647, %v3871, %v3919
    %v3921 = vsel %vm1649, %v3880, %v3920
    %v3922 = vsel %vm1651, %v3889, %v3921
    %v3923 = vsel %vm1653, %v3898, %v3922
    %v3924 = vsel %vm1641, %v3916, %v3907
    %v3925 = vsel %vm1293, %v3923, 2147483647
    %v3926 = vand.u32 %v3925, 65535
    %v3927 = vshra.s32 %v3925, 16
    %v3928 = vcvt.s32.f32 %v3926
    %v3929 = vcvt.s32.f32 %v3927
    %3930 = vmin.xlane.f32.xlu0 %v3929
    %v3931 = vpop.xlane.xlu0 %3930
    %vm3932 = vcmp.eq.f32.partialorder %v3929, %v3931
    %v3933 = vsel %vm3932, %v3928, inf
    %3934 = vmin.xlane.f32.xlu0 %v3933
    %v3935 = vpop.xlane.xlu0 %3934
    %v3936 = vcvt.f32.s32 %v3935
    %v3937 = vcvt.f32.s32 %v3931
    %v3938 = vshll.u32 %v3937, 16
    %v3939 = vadd.s32 %v3938, %v3936
    %v3940 = vsel %vm1297, %v3924, 2147483647
    %v3941 = vand.u32 %v3940, 65535
    %v3942 = vshra.s32 %v3940, 16
    %v3943 = vcvt.s32.f32 %v3941
    %v3944 = vcvt.s32.f32 %v3942
    %3945 = vmin.xlane.f32.xlu0 %v3944
    %v3946 = vpop.xlane.xlu0 %3945
    %vm3947 = vcmp.eq.f32.partialorder %v3944, %v3946
    %v3948 = vsel %vm3947, %v3943, inf
    %3949 = vmin.xlane.f32.xlu0 %v3948
    %v3950 = vpop.xlane.xlu0 %3949
    %v3951 = vcvt.f32.s32 %v3950
    %v3952 = vcvt.f32.s32 %v3946
    %v3953 = vshll.u32 %v3952, 16
    %v3954 = vadd.s32 %v3953, %v3951
    %v3955 = vlaneseq
    %v3956 = vshrl.u32 %v3955, 7
    %v3957 = vsub.s32 5, %v3956
    %v3958 = vrot.slane %v1285, %v3957
    %3960 = vbcast.lane.b32.xlu0 %v3958, 256
    %v3961 = vpop.permute.xlu0 %3960
    %s3963 = sor.u32 256, 8
    %3964 = vbcast.lane.b32.xlu0 %v3958, %s3963
    %v3965 = vpop.permute.xlu0 %3964
    %v3968 = vadd.f32 %v3671, %v3961
    %v3969 = vadd.f32 %v3674, %v3965
    %v3970 = vadd.f32 %v3968, %v1325
    %v3971 = vadd.f32 %v3969, %v1329
    %v3972 = vadd.f32 %v3968, %v1336
    %v3973 = vadd.f32 %v3969, %v1340
    %v3974 = vadd.f32 %v3968, %v1347
    %v3975 = vadd.f32 %v3969, %v1351
    %v3976 = vadd.f32 %v3968, %v1358
    %v3977 = vadd.f32 %v3969, %v1362
    %v3978 = vadd.f32 %v3968, %v1369
    %v3979 = vadd.f32 %v3969, %v1373
    %v3980 = vadd.f32 %v3968, %v1380
    %v3981 = vadd.f32 %v3969, %v1384
    %v3982 = vadd.f32 %v3968, %v1391
    %v3983 = vadd.f32 %v3969, %v1395
    %v3984 = vadd.f32 %v3968, %v1402
    %v3985 = vadd.f32 %v3969, %v1406
    %v3986 = vadd.f32 %v3968, %v1413
    %v3987 = vadd.f32 %v3969, %v1417
    %v3988 = vadd.f32 %v3968, %v1424
    %v3989 = vadd.f32 %v3969, %v1428
    %4010 = vset.pattern.permute.xlu0 0
    %4011 = vperm.xlu0 %4010, %v3970
    %v4012 = vpop.permute.xlu0 %4011
    %4013 = vset.pattern.permute.xlu0 0
    %4014 = vperm.xlu0 %4013, %v3971
    %v4015 = vpop.permute.xlu0 %4014
    %4016 = vset.pattern.permute.xlu0 0
    %4017 = vperm.xlu0 %4016, %v3972
    %v4018 = vpop.permute.xlu0 %4017
    %4019 = vset.pattern.permute.xlu0 0
    %4020 = vperm.xlu0 %4019, %v3973
    %v4021 = vpop.permute.xlu0 %4020
    %4022 = vset.pattern.permute.xlu0 0
    %4023 = vperm.xlu0 %4022, %v3974
    %v4024 = vpop.permute.xlu0 %4023
    %4025 = vset.pattern.permute.xlu0 0
    %4026 = vperm.xlu0 %4025, %v3975
    %v4027 = vpop.permute.xlu0 %4026
    %4028 = vset.pattern.permute.xlu0 0
    %4029 = vperm.xlu0 %4028, %v3976
    %v4030 = vpop.permute.xlu0 %4029
    %4031 = vset.pattern.permute.xlu0 0
    %4032 = vperm.xlu0 %4031, %v3977
    %v4033 = vpop.permute.xlu0 %4032
    %4034 = vset.pattern.permute.xlu0 0
    %4035 = vperm.xlu0 %4034, %v3978
    %v4036 = vpop.permute.xlu0 %4035
    %4037 = vset.pattern.permute.xlu0 0
    %4038 = vperm.xlu0 %4037, %v3979
    %v4039 = vpop.permute.xlu0 %4038
    %4040 = vset.pattern.permute.xlu0 0
    %4041 = vperm.xlu0 %4040, %v3980
    %v4042 = vpop.permute.xlu0 %4041
    %4043 = vset.pattern.permute.xlu0 0
    %4044 = vperm.xlu0 %4043, %v3981
    %v4045 = vpop.permute.xlu0 %4044
    %4046 = vset.pattern.permute.xlu0 0
    %4047 = vperm.xlu0 %4046, %v3982
    %v4048 = vpop.permute.xlu0 %4047
    %4049 = vset.pattern.permute.xlu0 0
    %4050 = vperm.xlu0 %4049, %v3983
    %v4051 = vpop.permute.xlu0 %4050
    %4052 = vset.pattern.permute.xlu0 0
    %4053 = vperm.xlu0 %4052, %v3984
    %v4054 = vpop.permute.xlu0 %4053
    %4055 = vset.pattern.permute.xlu0 0
    %4056 = vperm.xlu0 %4055, %v3985
    %v4057 = vpop.permute.xlu0 %4056
    %4058 = vset.pattern.permute.xlu0 0
    %4059 = vperm.xlu0 %4058, %v3986
    %v4060 = vpop.permute.xlu0 %4059
    %4061 = vset.pattern.permute.xlu0 0
    %4062 = vperm.xlu0 %4061, %v3987
    %v4063 = vpop.permute.xlu0 %4062
    %4064 = vset.pattern.permute.xlu0 0
    %4065 = vperm.xlu0 %4064, %v3988
    %v4066 = vpop.permute.xlu0 %4065
    %4067 = vset.pattern.permute.xlu0 0
    %4068 = vperm.xlu0 %4067, %v3989
    %v4069 = vpop.permute.xlu0 %4068
    %v4070 = vlaneseq
    %v4071 = vshrl.u32 %v4070, 7
    %v4072 = vsub.s32 %v33, %v4071
    %v4073 = vrot.slane %v4012, %v4072
    %v4074 = vlaneseq
    %v4075 = vshrl.u32 %v4074, 7
    %v4076 = vsub.s32 %v1553, %v4075
    %v4077 = vrot.slane %v4015, %v4076
    %v4078 = vsel %vm1558, %v4077, %v4073
    %v4079 = vlaneseq
    %v4080 = vshrl.u32 %v4079, 7
    %v4081 = vsub.s32 %v33, %v4080
    %v4082 = vrot.slane %v4018, %v4081
    %v4083 = vlaneseq
    %v4084 = vshrl.u32 %v4083, 7
    %v4085 = vsub.s32 %v1553, %v4084
    %v4086 = vrot.slane %v4021, %v4085
    %v4087 = vsel %vm1558, %v4086, %v4082
    %v4088 = vlaneseq
    %v4089 = vshrl.u32 %v4088, 7
    %v4090 = vsub.s32 %v33, %v4089
    %v4091 = vrot.slane %v4024, %v4090
    %v4092 = vlaneseq
    %v4093 = vshrl.u32 %v4092, 7
    %v4094 = vsub.s32 %v1553, %v4093
    %v4095 = vrot.slane %v4027, %v4094
    %v4096 = vsel %vm1558, %v4095, %v4091
    %v4097 = vlaneseq
    %v4098 = vshrl.u32 %v4097, 7
    %v4099 = vsub.s32 %v33, %v4098
    %v4100 = vrot.slane %v4030, %v4099
    %v4101 = vlaneseq
    %v4102 = vshrl.u32 %v4101, 7
    %v4103 = vsub.s32 %v1553, %v4102
    %v4104 = vrot.slane %v4033, %v4103
    %v4105 = vsel %vm1558, %v4104, %v4100
    %v4106 = vlaneseq
    %v4107 = vshrl.u32 %v4106, 7
    %v4108 = vsub.s32 %v33, %v4107
    %v4109 = vrot.slane %v4036, %v4108
    %v4110 = vlaneseq
    %v4111 = vshrl.u32 %v4110, 7
    %v4112 = vsub.s32 %v1553, %v4111
    %v4113 = vrot.slane %v4039, %v4112
    %v4114 = vsel %vm1558, %v4113, %v4109
    %v4115 = vlaneseq
    %v4116 = vshrl.u32 %v4115, 7
    %v4117 = vsub.s32 %v33, %v4116
    %v4118 = vrot.slane %v4042, %v4117
    %v4119 = vlaneseq
    %v4120 = vshrl.u32 %v4119, 7
    %v4121 = vsub.s32 %v1553, %v4120
    %v4122 = vrot.slane %v4045, %v4121
    %v4123 = vsel %vm1558, %v4122, %v4118
    %v4124 = vlaneseq
    %v4125 = vshrl.u32 %v4124, 7
    %v4126 = vsub.s32 %v33, %v4125
    %v4127 = vrot.slane %v4048, %v4126
    %v4128 = vlaneseq
    %v4129 = vshrl.u32 %v4128, 7
    %v4130 = vsub.s32 %v1553, %v4129
    %v4131 = vrot.slane %v4051, %v4130
    %v4132 = vsel %vm1558, %v4131, %v4127
    %v4133 = vlaneseq
    %v4134 = vshrl.u32 %v4133, 7
    %v4135 = vsub.s32 %v33, %v4134
    %v4136 = vrot.slane %v4054, %v4135
    %v4137 = vlaneseq
    %v4138 = vshrl.u32 %v4137, 7
    %v4139 = vsub.s32 %v1553, %v4138
    %v4140 = vrot.slane %v4057, %v4139
    %v4141 = vsel %vm1558, %v4140, %v4136
    %v4142 = vlaneseq
    %v4143 = vshrl.u32 %v4142, 7
    %v4144 = vsub.s32 %v33, %v4143
    %v4145 = vrot.slane %v4060, %v4144
    %v4146 = vlaneseq
    %v4147 = vshrl.u32 %v4146, 7
    %v4148 = vsub.s32 %v1553, %v4147
    %v4149 = vrot.slane %v4063, %v4148
    %v4150 = vsel %vm1558, %v4149, %v4145
    %v4151 = vlaneseq
    %v4152 = vshrl.u32 %v4151, 7
    %v4153 = vsub.s32 %v33, %v4152
    %v4154 = vrot.slane %v4066, %v4153
    %v4155 = vlaneseq
    %v4156 = vshrl.u32 %v4155, 7
    %v4157 = vsub.s32 %v1553, %v4156
    %v4158 = vrot.slane %v4069, %v4157
    %v4159 = vsel %vm1558, %v4158, %v4154
    %v4160 = vsel %vm1641, %v4087, %v4078
    %v4161 = vsel %vm1643, %v4096, %v4160
    %v4162 = vsel %vm1645, %v4105, %v4161
    %v4163 = vsel %vm1647, %v4114, %v4162
    %v4164 = vsel %vm1649, %v4123, %v4163
    %v4165 = vsel %vm1651, %v4132, %v4164
    %v4166 = vsel %vm1653, %v4141, %v4165
    %v4167 = vsel %vm1641, %v4159, %v4150
    %v4170 = vsel %vm1293, %v4166, -inf
    %4171 = vmax.xlane.f32.xlu0 %v4170
    %v4172 = vpop.xlane.xlu0 %4171
    %v4173 = vsel %vm1297, %v4167, -inf
    %4174 = vmax.xlane.f32.xlu0 %v4173
    %v4175 = vpop.xlane.xlu0 %4174
    %v4178 = vlaneseq
    %v4179 = vshrl.u32 %v4178, 7
    %v4180 = vsub.s32 0, %v4179
    %v4181 = vrot.slane %v4172, %v4180
    %v4182 = vlaneseq
    %v4183 = vshrl.u32 %v4182, 7
    %v4184 = vsub.s32 1, %v4183
    %v4185 = vrot.slane %v4172, %v4184
    %v4186 = vlaneseq
    %v4187 = vshrl.u32 %v4186, 7
    %v4188 = vsub.s32 2, %v4187
    %v4189 = vrot.slane %v4172, %v4188
    %v4190 = vlaneseq
    %v4191 = vshrl.u32 %v4190, 7
    %v4192 = vsub.s32 3, %v4191
    %v4193 = vrot.slane %v4172, %v4192
    %v4194 = vlaneseq
    %v4195 = vshrl.u32 %v4194, 7
    %v4196 = vsub.s32 4, %v4195
    %v4197 = vrot.slane %v4172, %v4196
    %v4198 = vlaneseq
    %v4199 = vshrl.u32 %v4198, 7
    %v4200 = vsub.s32 5, %v4199
    %v4201 = vrot.slane %v4172, %v4200
    %v4202 = vlaneseq
    %v4203 = vshrl.u32 %v4202, 7
    %v4204 = vsub.s32 6, %v4203
    %v4205 = vrot.slane %v4172, %v4204
    %v4206 = vlaneseq
    %v4207 = vshrl.u32 %v4206, 7
    %v4208 = vsub.s32 7, %v4207
    %v4209 = vrot.slane %v4172, %v4208
    %v4210 = vlaneseq
    %v4211 = vshrl.u32 %v4210, 7
    %v4212 = vsub.s32 0, %v4211
    %v4213 = vrot.slane %v4175, %v4212
    %v4214 = vlaneseq
    %v4215 = vshrl.u32 %v4214, 7
    %v4216 = vsub.s32 1, %v4215
    %v4217 = vrot.slane %v4175, %v4216
    %vm4228 = vcmp.eq.f32.partialorder %v3970, %v4181
    %vm4229 = vcmp.eq.f32.partialorder %v3971, %v4181
    %vm4230 = vcmp.eq.f32.partialorder %v3972, %v4185
    %vm4231 = vcmp.eq.f32.partialorder %v3973, %v4185
    %vm4232 = vcmp.eq.f32.partialorder %v3974, %v4189
    %vm4233 = vcmp.eq.f32.partialorder %v3975, %v4189
    %vm4234 = vcmp.eq.f32.partialorder %v3976, %v4193
    %vm4235 = vcmp.eq.f32.partialorder %v3977, %v4193
    %vm4236 = vcmp.eq.f32.partialorder %v3978, %v4197
    %vm4237 = vcmp.eq.f32.partialorder %v3979, %v4197
    %vm4238 = vcmp.eq.f32.partialorder %v3980, %v4201
    %vm4239 = vcmp.eq.f32.partialorder %v3981, %v4201
    %vm4240 = vcmp.eq.f32.partialorder %v3982, %v4205
    %vm4241 = vcmp.eq.f32.partialorder %v3983, %v4205
    %vm4242 = vcmp.eq.f32.partialorder %v3984, %v4209
    %vm4243 = vcmp.eq.f32.partialorder %v3985, %v4209
    %vm4244 = vcmp.eq.f32.partialorder %v3986, %v4213
    %vm4245 = vcmp.eq.f32.partialorder %v3987, %v4213
    %vm4246 = vcmp.eq.f32.partialorder %v3988, %v4217
    %vm4247 = vcmp.eq.f32.partialorder %v3989, %v4217
    %v4248 = vsel %vm4228, %v1738, 10
    %v4249 = vsel %vm4229, %v1742, 10
    %v4250 = vsel %vm4230, %v1738, 10
    %v4251 = vsel %vm4231, %v1742, 10
    %v4252 = vsel %vm4232, %v1738, 10
    %v4253 = vsel %vm4233, %v1742, 10
    %v4254 = vsel %vm4234, %v1738, 10
    %v4255 = vsel %vm4235, %v1742, 10
    %v4256 = vsel %vm4236, %v1738, 10
    %v4257 = vsel %vm4237, %v1742, 10
    %v4258 = vsel %vm4238, %v1738, 10
    %v4259 = vsel %vm4239, %v1742, 10
    %v4260 = vsel %vm4240, %v1738, 10
    %v4261 = vsel %vm4241, %v1742, 10
    %v4262 = vsel %vm4242, %v1738, 10
    %v4263 = vsel %vm4243, %v1742, 10
    %v4264 = vsel %vm4244, %v1738, 10
    %v4265 = vsel %vm4245, %v1742, 10
    %v4266 = vsel %vm4246, %v1738, 10
    %v4267 = vsel %vm4247, %v1742, 10
    %4268 = vset.pattern.permute.xlu0 0
    %4269 = vperm.xlu0 %4268, %v4248
    %v4270 = vpop.permute.xlu0 %4269
    %4271 = vset.pattern.permute.xlu0 0
    %4272 = vperm.xlu0 %4271, %v4249
    %v4273 = vpop.permute.xlu0 %4272
    %4274 = vset.pattern.permute.xlu0 0
    %4275 = vperm.xlu0 %4274, %v4250
    %v4276 = vpop.permute.xlu0 %4275
    %4277 = vset.pattern.permute.xlu0 0
    %4278 = vperm.xlu0 %4277, %v4251
    %v4279 = vpop.permute.xlu0 %4278
    %4280 = vset.pattern.permute.xlu0 0
    %4281 = vperm.xlu0 %4280, %v4252
    %v4282 = vpop.permute.xlu0 %4281
    %4283 = vset.pattern.permute.xlu0 0
    %4284 = vperm.xlu0 %4283, %v4253
    %v4285 = vpop.permute.xlu0 %4284
    %4286 = vset.pattern.permute.xlu0 0
    %4287 = vperm.xlu0 %4286, %v4254
    %v4288 = vpop.permute.xlu0 %4287
    %4289 = vset.pattern.permute.xlu0 0
    %4290 = vperm.xlu0 %4289, %v4255
    %v4291 = vpop.permute.xlu0 %4290
    %4292 = vset.pattern.permute.xlu0 0
    %4293 = vperm.xlu0 %4292, %v4256
    %v4294 = vpop.permute.xlu0 %4293
    %4295 = vset.pattern.permute.xlu0 0
    %4296 = vperm.xlu0 %4295, %v4257
    %v4297 = vpop.permute.xlu0 %4296
    %4298 = vset.pattern.permute.xlu0 0
    %4299 = vperm.xlu0 %4298, %v4258
    %v4300 = vpop.permute.xlu0 %4299
    %4301 = vset.pattern.permute.xlu0 0
    %4302 = vperm.xlu0 %4301, %v4259
    %v4303 = vpop.permute.xlu0 %4302
    %4304 = vset.pattern.permute.xlu0 0
    %4305 = vperm.xlu0 %4304, %v4260
    %v4306 = vpop.permute.xlu0 %4305
    %4307 = vset.pattern.permute.xlu0 0
    %4308 = vperm.xlu0 %4307, %v4261
    %v4309 = vpop.permute.xlu0 %4308
    %4310 = vset.pattern.permute.xlu0 0
    %4311 = vperm.xlu0 %4310, %v4262
    %v4312 = vpop.permute.xlu0 %4311
    %4313 = vset.pattern.permute.xlu0 0
    %4314 = vperm.xlu0 %4313, %v4263
    %v4315 = vpop.permute.xlu0 %4314
    %4316 = vset.pattern.permute.xlu0 0
    %4317 = vperm.xlu0 %4316, %v4264
    %v4318 = vpop.permute.xlu0 %4317
    %4319 = vset.pattern.permute.xlu0 0
    %4320 = vperm.xlu0 %4319, %v4265
    %v4321 = vpop.permute.xlu0 %4320
    %4322 = vset.pattern.permute.xlu0 0
    %4323 = vperm.xlu0 %4322, %v4266
    %v4324 = vpop.permute.xlu0 %4323
    %4325 = vset.pattern.permute.xlu0 0
    %4326 = vperm.xlu0 %4325, %v4267
    %v4327 = vpop.permute.xlu0 %4326
    %v4328 = vlaneseq
    %v4329 = vshrl.u32 %v4328, 7
    %v4330 = vsub.s32 %v33, %v4329
    %v4331 = vrot.slane %v4270, %v4330
    %v4332 = vlaneseq
    %v4333 = vshrl.u32 %v4332, 7
    %v4334 = vsub.s32 %v1553, %v4333
    %v4335 = vrot.slane %v4273, %v4334
    %v4336 = vsel %vm1558, %v4335, %v4331
    %v4337 = vlaneseq
    %v4338 = vshrl.u32 %v4337, 7
    %v4339 = vsub.s32 %v33, %v4338
    %v4340 = vrot.slane %v4276, %v4339
    %v4341 = vlaneseq
    %v4342 = vshrl.u32 %v4341, 7
    %v4343 = vsub.s32 %v1553, %v4342
    %v4344 = vrot.slane %v4279, %v4343
    %v4345 = vsel %vm1558, %v4344, %v4340
    %v4346 = vlaneseq
    %v4347 = vshrl.u32 %v4346, 7
    %v4348 = vsub.s32 %v33, %v4347
    %v4349 = vrot.slane %v4282, %v4348
    %v4350 = vlaneseq
    %v4351 = vshrl.u32 %v4350, 7
    %v4352 = vsub.s32 %v1553, %v4351
    %v4353 = vrot.slane %v4285, %v4352
    %v4354 = vsel %vm1558, %v4353, %v4349
    %v4355 = vlaneseq
    %v4356 = vshrl.u32 %v4355, 7
    %v4357 = vsub.s32 %v33, %v4356
    %v4358 = vrot.slane %v4288, %v4357
    %v4359 = vlaneseq
    %v4360 = vshrl.u32 %v4359, 7
    %v4361 = vsub.s32 %v1553, %v4360
    %v4362 = vrot.slane %v4291, %v4361
    %v4363 = vsel %vm1558, %v4362, %v4358
    %v4364 = vlaneseq
    %v4365 = vshrl.u32 %v4364, 7
    %v4366 = vsub.s32 %v33, %v4365
    %v4367 = vrot.slane %v4294, %v4366
    %v4368 = vlaneseq
    %v4369 = vshrl.u32 %v4368, 7
    %v4370 = vsub.s32 %v1553, %v4369
    %v4371 = vrot.slane %v4297, %v4370
    %v4372 = vsel %vm1558, %v4371, %v4367
    %v4373 = vlaneseq
    %v4374 = vshrl.u32 %v4373, 7
    %v4375 = vsub.s32 %v33, %v4374
    %v4376 = vrot.slane %v4300, %v4375
    %v4377 = vlaneseq
    %v4378 = vshrl.u32 %v4377, 7
    %v4379 = vsub.s32 %v1553, %v4378
    %v4380 = vrot.slane %v4303, %v4379
    %v4381 = vsel %vm1558, %v4380, %v4376
    %v4382 = vlaneseq
    %v4383 = vshrl.u32 %v4382, 7
    %v4384 = vsub.s32 %v33, %v4383
    %v4385 = vrot.slane %v4306, %v4384
    %v4386 = vlaneseq
    %v4387 = vshrl.u32 %v4386, 7
    %v4388 = vsub.s32 %v1553, %v4387
    %v4389 = vrot.slane %v4309, %v4388
    %v4390 = vsel %vm1558, %v4389, %v4385
    %v4391 = vlaneseq
    %v4392 = vshrl.u32 %v4391, 7
    %v4393 = vsub.s32 %v33, %v4392
    %v4394 = vrot.slane %v4312, %v4393
    %v4395 = vlaneseq
    %v4396 = vshrl.u32 %v4395, 7
    %v4397 = vsub.s32 %v1553, %v4396
    %v4398 = vrot.slane %v4315, %v4397
    %v4399 = vsel %vm1558, %v4398, %v4394
    %v4400 = vlaneseq
    %v4401 = vshrl.u32 %v4400, 7
    %v4402 = vsub.s32 %v33, %v4401
    %v4403 = vrot.slane %v4318, %v4402
    %v4404 = vlaneseq
    %v4405 = vshrl.u32 %v4404, 7
    %v4406 = vsub.s32 %v1553, %v4405
    %v4407 = vrot.slane %v4321, %v4406
    %v4408 = vsel %vm1558, %v4407, %v4403
    %v4409 = vlaneseq
    %v4410 = vshrl.u32 %v4409, 7
    %v4411 = vsub.s32 %v33, %v4410
    %v4412 = vrot.slane %v4324, %v4411
    %v4413 = vlaneseq
    %v4414 = vshrl.u32 %v4413, 7
    %v4415 = vsub.s32 %v1553, %v4414
    %v4416 = vrot.slane %v4327, %v4415
    %v4417 = vsel %vm1558, %v4416, %v4412
    %v4418 = vsel %vm1641, %v4345, %v4336
    %v4419 = vsel %vm1643, %v4354, %v4418
    %v4420 = vsel %vm1645, %v4363, %v4419
    %v4421 = vsel %vm1647, %v4372, %v4420
    %v4422 = vsel %vm1649, %v4381, %v4421
    %v4423 = vsel %vm1651, %v4390, %v4422
    %v4424 = vsel %vm1653, %v4399, %v4423
    %v4425 = vsel %vm1641, %v4417, %v4408
    %v4426 = vsel %vm1293, %v4424, 2147483647
    %v4427 = vand.u32 %v4426, 65535
    %v4428 = vshra.s32 %v4426, 16
    %v4429 = vcvt.s32.f32 %v4427
    %v4430 = vcvt.s32.f32 %v4428
    %4431 = vmin.xlane.f32.xlu0 %v4430
    %v4432 = vpop.xlane.xlu0 %4431
    %vm4433 = vcmp.eq.f32.partialorder %v4430, %v4432
    %v4434 = vsel %vm4433, %v4429, inf
    %4435 = vmin.xlane.f32.xlu0 %v4434
    %v4436 = vpop.xlane.xlu0 %4435
    %v4437 = vcvt.f32.s32 %v4436
    %v4438 = vcvt.f32.s32 %v4432
    %v4439 = vshll.u32 %v4438, 16
    %v4440 = vadd.s32 %v4439, %v4437
    %v4441 = vsel %vm1297, %v4425, 2147483647
    %v4442 = vand.u32 %v4441, 65535
    %v4443 = vshra.s32 %v4441, 16
    %v4444 = vcvt.s32.f32 %v4442
    %v4445 = vcvt.s32.f32 %v4443
    %4446 = vmin.xlane.f32.xlu0 %v4445
    %v4447 = vpop.xlane.xlu0 %4446
    %vm4448 = vcmp.eq.f32.partialorder %v4445, %v4447
    %v4449 = vsel %vm4448, %v4444, inf
    %4450 = vmin.xlane.f32.xlu0 %v4449
    %v4451 = vpop.xlane.xlu0 %4450
    %v4452 = vcvt.f32.s32 %v4451
    %v4453 = vcvt.f32.s32 %v4447
    %v4454 = vshll.u32 %v4453, 16
    %v4455 = vadd.s32 %v4454, %v4452
    %v4456 = vlaneseq
    %v4457 = vshrl.u32 %v4456, 7
    %v4458 = vsub.s32 6, %v4457
    %v4459 = vrot.slane %v1285, %v4458
    %4461 = vbcast.lane.b32.xlu0 %v4459, 256
    %v4462 = vpop.permute.xlu0 %4461
    %s4464 = sor.u32 256, 8
    %4465 = vbcast.lane.b32.xlu0 %v4459, %s4464
    %v4466 = vpop.permute.xlu0 %4465
    %v4469 = vadd.f32 %v4172, %v4462
    %v4470 = vadd.f32 %v4175, %v4466
    %v4471 = vadd.f32 %v4469, %v1325
    %v4472 = vadd.f32 %v4470, %v1329
    %v4473 = vadd.f32 %v4469, %v1336
    %v4474 = vadd.f32 %v4470, %v1340
    %v4475 = vadd.f32 %v4469, %v1347
    %v4476 = vadd.f32 %v4470, %v1351
    %v4477 = vadd.f32 %v4469, %v1358
    %v4478 = vadd.f32 %v4470, %v1362
    %v4479 = vadd.f32 %v4469, %v1369
    %v4480 = vadd.f32 %v4470, %v1373
    %v4481 = vadd.f32 %v4469, %v1380
    %v4482 = vadd.f32 %v4470, %v1384
    %v4483 = vadd.f32 %v4469, %v1391
    %v4484 = vadd.f32 %v4470, %v1395
    %v4485 = vadd.f32 %v4469, %v1402
    %v4486 = vadd.f32 %v4470, %v1406
    %v4487 = vadd.f32 %v4469, %v1413
    %v4488 = vadd.f32 %v4470, %v1417
    %v4489 = vadd.f32 %v4469, %v1424
    %v4490 = vadd.f32 %v4470, %v1428
    %4511 = vset.pattern.permute.xlu0 0
    %4512 = vperm.xlu0 %4511, %v4471
    %v4513 = vpop.permute.xlu0 %4512
    %4514 = vset.pattern.permute.xlu0 0
    %4515 = vperm.xlu0 %4514, %v4472
    %v4516 = vpop.permute.xlu0 %4515
    %4517 = vset.pattern.permute.xlu0 0
    %4518 = vperm.xlu0 %4517, %v4473
    %v4519 = vpop.permute.xlu0 %4518
    %4520 = vset.pattern.permute.xlu0 0
    %4521 = vperm.xlu0 %4520, %v4474
    %v4522 = vpop.permute.xlu0 %4521
    %4523 = vset.pattern.permute.xlu0 0
    %4524 = vperm.xlu0 %4523, %v4475
    %v4525 = vpop.permute.xlu0 %4524
    %4526 = vset.pattern.permute.xlu0 0
    %4527 = vperm.xlu0 %4526, %v4476
    %v4528 = vpop.permute.xlu0 %4527
    %4529 = vset.pattern.permute.xlu0 0
    %4530 = vperm.xlu0 %4529, %v4477
    %v4531 = vpop.permute.xlu0 %4530
    %4532 = vset.pattern.permute.xlu0 0
    %4533 = vperm.xlu0 %4532, %v4478
    %v4534 = vpop.permute.xlu0 %4533
    %4535 = vset.pattern.permute.xlu0 0
    %4536 = vperm.xlu0 %4535, %v4479
    %v4537 = vpop.permute.xlu0 %4536
    %4538 = vset.pattern.permute.xlu0 0
    %4539 = vperm.xlu0 %4538, %v4480
    %v4540 = vpop.permute.xlu0 %4539
    %4541 = vset.pattern.permute.xlu0 0
    %4542 = vperm.xlu0 %4541, %v4481
    %v4543 = vpop.permute.xlu0 %4542
    %4544 = vset.pattern.permute.xlu0 0
    %4545 = vperm.xlu0 %4544, %v4482
    %v4546 = vpop.permute.xlu0 %4545
    %4547 = vset.pattern.permute.xlu0 0
    %4548 = vperm.xlu0 %4547, %v4483
    %v4549 = vpop.permute.xlu0 %4548
    %4550 = vset.pattern.permute.xlu0 0
    %4551 = vperm.xlu0 %4550, %v4484
    %v4552 = vpop.permute.xlu0 %4551
    %4553 = vset.pattern.permute.xlu0 0
    %4554 = vperm.xlu0 %4553, %v4485
    %v4555 = vpop.permute.xlu0 %4554
    %4556 = vset.pattern.permute.xlu0 0
    %4557 = vperm.xlu0 %4556, %v4486
    %v4558 = vpop.permute.xlu0 %4557
    %4559 = vset.pattern.permute.xlu0 0
    %4560 = vperm.xlu0 %4559, %v4487
    %v4561 = vpop.permute.xlu0 %4560
    %4562 = vset.pattern.permute.xlu0 0
    %4563 = vperm.xlu0 %4562, %v4488
    %v4564 = vpop.permute.xlu0 %4563
    %4565 = vset.pattern.permute.xlu0 0
    %4566 = vperm.xlu0 %4565, %v4489
    %v4567 = vpop.permute.xlu0 %4566
    %4568 = vset.pattern.permute.xlu0 0
    %4569 = vperm.xlu0 %4568, %v4490
    %v4570 = vpop.permute.xlu0 %4569
    %v4571 = vlaneseq
    %v4572 = vshrl.u32 %v4571, 7
    %v4573 = vsub.s32 %v33, %v4572
    %v4574 = vrot.slane %v4513, %v4573
    %v4575 = vlaneseq
    %v4576 = vshrl.u32 %v4575, 7
    %v4577 = vsub.s32 %v1553, %v4576
    %v4578 = vrot.slane %v4516, %v4577
    %v4579 = vsel %vm1558, %v4578, %v4574
    %v4580 = vlaneseq
    %v4581 = vshrl.u32 %v4580, 7
    %v4582 = vsub.s32 %v33, %v4581
    %v4583 = vrot.slane %v4519, %v4582
    %v4584 = vlaneseq
    %v4585 = vshrl.u32 %v4584, 7
    %v4586 = vsub.s32 %v1553, %v4585
    %v4587 = vrot.slane %v4522, %v4586
    %v4588 = vsel %vm1558, %v4587, %v4583
    %v4589 = vlaneseq
    %v4590 = vshrl.u32 %v4589, 7
    %v4591 = vsub.s32 %v33, %v4590
    %v4592 = vrot.slane %v4525, %v4591
    %v4593 = vlaneseq
    %v4594 = vshrl.u32 %v4593, 7
    %v4595 = vsub.s32 %v1553, %v4594
    %v4596 = vrot.slane %v4528, %v4595
    %v4597 = vsel %vm1558, %v4596, %v4592
    %v4598 = vlaneseq
    %v4599 = vshrl.u32 %v4598, 7
    %v4600 = vsub.s32 %v33, %v4599
    %v4601 = vrot.slane %v4531, %v4600
    %v4602 = vlaneseq
    %v4603 = vshrl.u32 %v4602, 7
    %v4604 = vsub.s32 %v1553, %v4603
    %v4605 = vrot.slane %v4534, %v4604
    %v4606 = vsel %vm1558, %v4605, %v4601
    %v4607 = vlaneseq
    %v4608 = vshrl.u32 %v4607, 7
    %v4609 = vsub.s32 %v33, %v4608
    %v4610 = vrot.slane %v4537, %v4609
    %v4611 = vlaneseq
    %v4612 = vshrl.u32 %v4611, 7
    %v4613 = vsub.s32 %v1553, %v4612
    %v4614 = vrot.slane %v4540, %v4613
    %v4615 = vsel %vm1558, %v4614, %v4610
    %v4616 = vlaneseq
    %v4617 = vshrl.u32 %v4616, 7
    %v4618 = vsub.s32 %v33, %v4617
    %v4619 = vrot.slane %v4543, %v4618
    %v4620 = vlaneseq
    %v4621 = vshrl.u32 %v4620, 7
    %v4622 = vsub.s32 %v1553, %v4621
    %v4623 = vrot.slane %v4546, %v4622
    %v4624 = vsel %vm1558, %v4623, %v4619
    %v4625 = vlaneseq
    %v4626 = vshrl.u32 %v4625, 7
    %v4627 = vsub.s32 %v33, %v4626
    %v4628 = vrot.slane %v4549, %v4627
    %v4629 = vlaneseq
    %v4630 = vshrl.u32 %v4629, 7
    %v4631 = vsub.s32 %v1553, %v4630
    %v4632 = vrot.slane %v4552, %v4631
    %v4633 = vsel %vm1558, %v4632, %v4628
    %v4634 = vlaneseq
    %v4635 = vshrl.u32 %v4634, 7
    %v4636 = vsub.s32 %v33, %v4635
    %v4637 = vrot.slane %v4555, %v4636
    %v4638 = vlaneseq
    %v4639 = vshrl.u32 %v4638, 7
    %v4640 = vsub.s32 %v1553, %v4639
    %v4641 = vrot.slane %v4558, %v4640
    %v4642 = vsel %vm1558, %v4641, %v4637
    %v4643 = vlaneseq
    %v4644 = vshrl.u32 %v4643, 7
    %v4645 = vsub.s32 %v33, %v4644
    %v4646 = vrot.slane %v4561, %v4645
    %v4647 = vlaneseq
    %v4648 = vshrl.u32 %v4647, 7
    %v4649 = vsub.s32 %v1553, %v4648
    %v4650 = vrot.slane %v4564, %v4649
    %v4651 = vsel %vm1558, %v4650, %v4646
    %v4652 = vlaneseq
    %v4653 = vshrl.u32 %v4652, 7
    %v4654 = vsub.s32 %v33, %v4653
    %v4655 = vrot.slane %v4567, %v4654
    %v4656 = vlaneseq
    %v4657 = vshrl.u32 %v4656, 7
    %v4658 = vsub.s32 %v1553, %v4657
    %v4659 = vrot.slane %v4570, %v4658
    %v4660 = vsel %vm1558, %v4659, %v4655
    %v4661 = vsel %vm1641, %v4588, %v4579
    %v4662 = vsel %vm1643, %v4597, %v4661
    %v4663 = vsel %vm1645, %v4606, %v4662
    %v4664 = vsel %vm1647, %v4615, %v4663
    %v4665 = vsel %vm1649, %v4624, %v4664
    %v4666 = vsel %vm1651, %v4633, %v4665
    %v4667 = vsel %vm1653, %v4642, %v4666
    %v4668 = vsel %vm1641, %v4660, %v4651
    %v4671 = vsel %vm1293, %v4667, -inf
    %4672 = vmax.xlane.f32.xlu0 %v4671
    %v4673 = vpop.xlane.xlu0 %4672
    %v4674 = vsel %vm1297, %v4668, -inf
    %4675 = vmax.xlane.f32.xlu0 %v4674
    %v4676 = vpop.xlane.xlu0 %4675
    %v4679 = vlaneseq
    %v4680 = vshrl.u32 %v4679, 7
    %v4681 = vsub.s32 0, %v4680
    %v4682 = vrot.slane %v4673, %v4681
    %v4683 = vlaneseq
    %v4684 = vshrl.u32 %v4683, 7
    %v4685 = vsub.s32 1, %v4684
    %v4686 = vrot.slane %v4673, %v4685
    %v4687 = vlaneseq
    %v4688 = vshrl.u32 %v4687, 7
    %v4689 = vsub.s32 2, %v4688
    %v4690 = vrot.slane %v4673, %v4689
    %v4691 = vlaneseq
    %v4692 = vshrl.u32 %v4691, 7
    %v4693 = vsub.s32 3, %v4692
    %v4694 = vrot.slane %v4673, %v4693
    %v4695 = vlaneseq
    %v4696 = vshrl.u32 %v4695, 7
    %v4697 = vsub.s32 4, %v4696
    %v4698 = vrot.slane %v4673, %v4697
    %v4699 = vlaneseq
    %v4700 = vshrl.u32 %v4699, 7
    %v4701 = vsub.s32 5, %v4700
    %v4702 = vrot.slane %v4673, %v4701
    %v4703 = vlaneseq
    %v4704 = vshrl.u32 %v4703, 7
    %v4705 = vsub.s32 6, %v4704
    %v4706 = vrot.slane %v4673, %v4705
    %v4707 = vlaneseq
    %v4708 = vshrl.u32 %v4707, 7
    %v4709 = vsub.s32 7, %v4708
    %v4710 = vrot.slane %v4673, %v4709
    %v4711 = vlaneseq
    %v4712 = vshrl.u32 %v4711, 7
    %v4713 = vsub.s32 0, %v4712
    %v4714 = vrot.slane %v4676, %v4713
    %v4715 = vlaneseq
    %v4716 = vshrl.u32 %v4715, 7
    %v4717 = vsub.s32 1, %v4716
    %v4718 = vrot.slane %v4676, %v4717
    %vm4729 = vcmp.eq.f32.partialorder %v4471, %v4682
    %vm4730 = vcmp.eq.f32.partialorder %v4472, %v4682
    %vm4731 = vcmp.eq.f32.partialorder %v4473, %v4686
    %vm4732 = vcmp.eq.f32.partialorder %v4474, %v4686
    %vm4733 = vcmp.eq.f32.partialorder %v4475, %v4690
    %vm4734 = vcmp.eq.f32.partialorder %v4476, %v4690
    %vm4735 = vcmp.eq.f32.partialorder %v4477, %v4694
    %vm4736 = vcmp.eq.f32.partialorder %v4478, %v4694
    %vm4737 = vcmp.eq.f32.partialorder %v4479, %v4698
    %vm4738 = vcmp.eq.f32.partialorder %v4480, %v4698
    %vm4739 = vcmp.eq.f32.partialorder %v4481, %v4702
    %vm4740 = vcmp.eq.f32.partialorder %v4482, %v4702
    %vm4741 = vcmp.eq.f32.partialorder %v4483, %v4706
    %vm4742 = vcmp.eq.f32.partialorder %v4484, %v4706
    %vm4743 = vcmp.eq.f32.partialorder %v4485, %v4710
    %vm4744 = vcmp.eq.f32.partialorder %v4486, %v4710
    %vm4745 = vcmp.eq.f32.partialorder %v4487, %v4714
    %vm4746 = vcmp.eq.f32.partialorder %v4488, %v4714
    %vm4747 = vcmp.eq.f32.partialorder %v4489, %v4718
    %vm4748 = vcmp.eq.f32.partialorder %v4490, %v4718
    %v4749 = vsel %vm4729, %v1738, 10
    %v4750 = vsel %vm4730, %v1742, 10
    %v4751 = vsel %vm4731, %v1738, 10
    %v4752 = vsel %vm4732, %v1742, 10
    %v4753 = vsel %vm4733, %v1738, 10
    %v4754 = vsel %vm4734, %v1742, 10
    %v4755 = vsel %vm4735, %v1738, 10
    %v4756 = vsel %vm4736, %v1742, 10
    %v4757 = vsel %vm4737, %v1738, 10
    %v4758 = vsel %vm4738, %v1742, 10
    %v4759 = vsel %vm4739, %v1738, 10
    %v4760 = vsel %vm4740, %v1742, 10
    %v4761 = vsel %vm4741, %v1738, 10
    %v4762 = vsel %vm4742, %v1742, 10
    %v4763 = vsel %vm4743, %v1738, 10
    %v4764 = vsel %vm4744, %v1742, 10
    %v4765 = vsel %vm4745, %v1738, 10
    %v4766 = vsel %vm4746, %v1742, 10
    %v4767 = vsel %vm4747, %v1738, 10
    %v4768 = vsel %vm4748, %v1742, 10
    %4769 = vset.pattern.permute.xlu0 0
    %4770 = vperm.xlu0 %4769, %v4749
    %v4771 = vpop.permute.xlu0 %4770
    %4772 = vset.pattern.permute.xlu0 0
    %4773 = vperm.xlu0 %4772, %v4750
    %v4774 = vpop.permute.xlu0 %4773
    %4775 = vset.pattern.permute.xlu0 0
    %4776 = vperm.xlu0 %4775, %v4751
    %v4777 = vpop.permute.xlu0 %4776
    %4778 = vset.pattern.permute.xlu0 0
    %4779 = vperm.xlu0 %4778, %v4752
    %v4780 = vpop.permute.xlu0 %4779
    %4781 = vset.pattern.permute.xlu0 0
    %4782 = vperm.xlu0 %4781, %v4753
    %v4783 = vpop.permute.xlu0 %4782
    %4784 = vset.pattern.permute.xlu0 0
    %4785 = vperm.xlu0 %4784, %v4754
    %v4786 = vpop.permute.xlu0 %4785
    %4787 = vset.pattern.permute.xlu0 0
    %4788 = vperm.xlu0 %4787, %v4755
    %v4789 = vpop.permute.xlu0 %4788
    %4790 = vset.pattern.permute.xlu0 0
    %4791 = vperm.xlu0 %4790, %v4756
    %v4792 = vpop.permute.xlu0 %4791
    %4793 = vset.pattern.permute.xlu0 0
    %4794 = vperm.xlu0 %4793, %v4757
    %v4795 = vpop.permute.xlu0 %4794
    %4796 = vset.pattern.permute.xlu0 0
    %4797 = vperm.xlu0 %4796, %v4758
    %v4798 = vpop.permute.xlu0 %4797
    %4799 = vset.pattern.permute.xlu0 0
    %4800 = vperm.xlu0 %4799, %v4759
    %v4801 = vpop.permute.xlu0 %4800
    %4802 = vset.pattern.permute.xlu0 0
    %4803 = vperm.xlu0 %4802, %v4760
    %v4804 = vpop.permute.xlu0 %4803
    %4805 = vset.pattern.permute.xlu0 0
    %4806 = vperm.xlu0 %4805, %v4761
    %v4807 = vpop.permute.xlu0 %4806
    %4808 = vset.pattern.permute.xlu0 0
    %4809 = vperm.xlu0 %4808, %v4762
    %v4810 = vpop.permute.xlu0 %4809
    %4811 = vset.pattern.permute.xlu0 0
    %4812 = vperm.xlu0 %4811, %v4763
    %v4813 = vpop.permute.xlu0 %4812
    %4814 = vset.pattern.permute.xlu0 0
    %4815 = vperm.xlu0 %4814, %v4764
    %v4816 = vpop.permute.xlu0 %4815
    %4817 = vset.pattern.permute.xlu0 0
    %4818 = vperm.xlu0 %4817, %v4765
    %v4819 = vpop.permute.xlu0 %4818
    %4820 = vset.pattern.permute.xlu0 0
    %4821 = vperm.xlu0 %4820, %v4766
    %v4822 = vpop.permute.xlu0 %4821
    %4823 = vset.pattern.permute.xlu0 0
    %4824 = vperm.xlu0 %4823, %v4767
    %v4825 = vpop.permute.xlu0 %4824
    %4826 = vset.pattern.permute.xlu0 0
    %4827 = vperm.xlu0 %4826, %v4768
    %v4828 = vpop.permute.xlu0 %4827
    %v4829 = vlaneseq
    %v4830 = vshrl.u32 %v4829, 7
    %v4831 = vsub.s32 %v33, %v4830
    %v4832 = vrot.slane %v4771, %v4831
    %v4833 = vlaneseq
    %v4834 = vshrl.u32 %v4833, 7
    %v4835 = vsub.s32 %v1553, %v4834
    %v4836 = vrot.slane %v4774, %v4835
    %v4837 = vsel %vm1558, %v4836, %v4832
    %v4838 = vlaneseq
    %v4839 = vshrl.u32 %v4838, 7
    %v4840 = vsub.s32 %v33, %v4839
    %v4841 = vrot.slane %v4777, %v4840
    %v4842 = vlaneseq
    %v4843 = vshrl.u32 %v4842, 7
    %v4844 = vsub.s32 %v1553, %v4843
    %v4845 = vrot.slane %v4780, %v4844
    %v4846 = vsel %vm1558, %v4845, %v4841
    %v4847 = vlaneseq
    %v4848 = vshrl.u32 %v4847, 7
    %v4849 = vsub.s32 %v33, %v4848
    %v4850 = vrot.slane %v4783, %v4849
    %v4851 = vlaneseq
    %v4852 = vshrl.u32 %v4851, 7
    %v4853 = vsub.s32 %v1553, %v4852
    %v4854 = vrot.slane %v4786, %v4853
    %v4855 = vsel %vm1558, %v4854, %v4850
    %v4856 = vlaneseq
    %v4857 = vshrl.u32 %v4856, 7
    %v4858 = vsub.s32 %v33, %v4857
    %v4859 = vrot.slane %v4789, %v4858
    %v4860 = vlaneseq
    %v4861 = vshrl.u32 %v4860, 7
    %v4862 = vsub.s32 %v1553, %v4861
    %v4863 = vrot.slane %v4792, %v4862
    %v4864 = vsel %vm1558, %v4863, %v4859
    %v4865 = vlaneseq
    %v4866 = vshrl.u32 %v4865, 7
    %v4867 = vsub.s32 %v33, %v4866
    %v4868 = vrot.slane %v4795, %v4867
    %v4869 = vlaneseq
    %v4870 = vshrl.u32 %v4869, 7
    %v4871 = vsub.s32 %v1553, %v4870
    %v4872 = vrot.slane %v4798, %v4871
    %v4873 = vsel %vm1558, %v4872, %v4868
    %v4874 = vlaneseq
    %v4875 = vshrl.u32 %v4874, 7
    %v4876 = vsub.s32 %v33, %v4875
    %v4877 = vrot.slane %v4801, %v4876
    %v4878 = vlaneseq
    %v4879 = vshrl.u32 %v4878, 7
    %v4880 = vsub.s32 %v1553, %v4879
    %v4881 = vrot.slane %v4804, %v4880
    %v4882 = vsel %vm1558, %v4881, %v4877
    %v4883 = vlaneseq
    %v4884 = vshrl.u32 %v4883, 7
    %v4885 = vsub.s32 %v33, %v4884
    %v4886 = vrot.slane %v4807, %v4885
    %v4887 = vlaneseq
    %v4888 = vshrl.u32 %v4887, 7
    %v4889 = vsub.s32 %v1553, %v4888
    %v4890 = vrot.slane %v4810, %v4889
    %v4891 = vsel %vm1558, %v4890, %v4886
    %v4892 = vlaneseq
    %v4893 = vshrl.u32 %v4892, 7
    %v4894 = vsub.s32 %v33, %v4893
    %v4895 = vrot.slane %v4813, %v4894
    %v4896 = vlaneseq
    %v4897 = vshrl.u32 %v4896, 7
    %v4898 = vsub.s32 %v1553, %v4897
    %v4899 = vrot.slane %v4816, %v4898
    %v4900 = vsel %vm1558, %v4899, %v4895
    %v4901 = vlaneseq
    %v4902 = vshrl.u32 %v4901, 7
    %v4903 = vsub.s32 %v33, %v4902
    %v4904 = vrot.slane %v4819, %v4903
    %v4905 = vlaneseq
    %v4906 = vshrl.u32 %v4905, 7
    %v4907 = vsub.s32 %v1553, %v4906
    %v4908 = vrot.slane %v4822, %v4907
    %v4909 = vsel %vm1558, %v4908, %v4904
    %v4910 = vlaneseq
    %v4911 = vshrl.u32 %v4910, 7
    %v4912 = vsub.s32 %v33, %v4911
    %v4913 = vrot.slane %v4825, %v4912
    %v4914 = vlaneseq
    %v4915 = vshrl.u32 %v4914, 7
    %v4916 = vsub.s32 %v1553, %v4915
    %v4917 = vrot.slane %v4828, %v4916
    %v4918 = vsel %vm1558, %v4917, %v4913
    %v4919 = vsel %vm1641, %v4846, %v4837
    %v4920 = vsel %vm1643, %v4855, %v4919
    %v4921 = vsel %vm1645, %v4864, %v4920
    %v4922 = vsel %vm1647, %v4873, %v4921
    %v4923 = vsel %vm1649, %v4882, %v4922
    %v4924 = vsel %vm1651, %v4891, %v4923
    %v4925 = vsel %vm1653, %v4900, %v4924
    %v4926 = vsel %vm1641, %v4918, %v4909
    %v4927 = vsel %vm1293, %v4925, 2147483647
    %v4928 = vand.u32 %v4927, 65535
    %v4929 = vshra.s32 %v4927, 16
    %v4930 = vcvt.s32.f32 %v4928
    %v4931 = vcvt.s32.f32 %v4929
    %4932 = vmin.xlane.f32.xlu0 %v4931
    %v4933 = vpop.xlane.xlu0 %4932
    %vm4934 = vcmp.eq.f32.partialorder %v4931, %v4933
    %v4935 = vsel %vm4934, %v4930, inf
    %4936 = vmin.xlane.f32.xlu0 %v4935
    %v4937 = vpop.xlane.xlu0 %4936
    %v4938 = vcvt.f32.s32 %v4937
    %v4939 = vcvt.f32.s32 %v4933
    %v4940 = vshll.u32 %v4939, 16
    %v4941 = vadd.s32 %v4940, %v4938
    %v4942 = vsel %vm1297, %v4926, 2147483647
    %v4943 = vand.u32 %v4942, 65535
    %v4944 = vshra.s32 %v4942, 16
    %v4945 = vcvt.s32.f32 %v4943
    %v4946 = vcvt.s32.f32 %v4944
    %4947 = vmin.xlane.f32.xlu0 %v4946
    %v4948 = vpop.xlane.xlu0 %4947
    %vm4949 = vcmp.eq.f32.partialorder %v4946, %v4948
    %v4950 = vsel %vm4949, %v4945, inf
    %4951 = vmin.xlane.f32.xlu0 %v4950
    %v4952 = vpop.xlane.xlu0 %4951
    %v4953 = vcvt.f32.s32 %v4952
    %v4954 = vcvt.f32.s32 %v4948
    %v4955 = vshll.u32 %v4954, 16
    %v4956 = vadd.s32 %v4955, %v4953
    %v4957 = vlaneseq
    %v4958 = vshrl.u32 %v4957, 7
    %v4959 = vsub.s32 7, %v4958
    %v4960 = vrot.slane %v1285, %v4959
    %4962 = vbcast.lane.b32.xlu0 %v4960, 256
    %v4963 = vpop.permute.xlu0 %4962
    %s4965 = sor.u32 256, 8
    %4966 = vbcast.lane.b32.xlu0 %v4960, %s4965
    %v4967 = vpop.permute.xlu0 %4966
    %v4970 = vadd.f32 %v4673, %v4963
    %v4971 = vadd.f32 %v4676, %v4967
    %v4972 = vadd.f32 %v4970, %v1413
    %v4973 = vadd.f32 %v4971, %v1417
    %vm4974 = vcmask 7168
    %v4975 = vsel %vm4974, %v4972, -inf
    %vm4976 = vcmask 1024
    %v4977 = vsel %vm4976, %v4973, -inf
    %v4978 = vmax.f32 %v4975, %v4977
    %v4979 = vrot.slane %v4978, 4
    %v4980 = vmax.f32 %v4978, %v4979
    %v4981 = vrot.slane %v4980, 2
    %v4982 = vmax.f32 %v4980, %v4981
    %v4983 = vrot.slane %v4982, 1
    %v4984 = vmax.f32 %v4982, %v4983
    %4986 = vset.pattern.permute.xlu0 0
    %4987 = vperm.xlu0 %4986, %v4984
    %v4988 = vpop.permute.xlu0 %4987
    %vm4990 = vcmp.eq.f32.partialorder %v4972, %v4988
    %vm4991 = vcmp.eq.f32.partialorder %v4973, %v4988
    %v4992 = vsel %vm4990, %v1738, 10
    %v4993 = vsel %vm4991, %v1742, 10
    %v4994 = vsel %vm4974, %v4992, 2147483647
    %v4995 = vsel %vm4976, %v4993, 2147483647
    %vm4996 = vcmp.lt.s32.totalorder %v4994, %v4995
    %v4997 = vsel %vm4996, %v4994, %v4995
    %v4998 = vrot.slane %v4997, 4
    %vm4999 = vcmp.lt.s32.totalorder %v4997, %v4998
    %v5000 = vsel %vm4999, %v4997, %v4998
    %v5001 = vrot.slane %v5000, 2
    %vm5002 = vcmp.lt.s32.totalorder %v5000, %v5001
    %v5003 = vsel %vm5002, %v5000, %v5001
    %v5004 = vrot.slane %v5003, 1
    %vm5005 = vcmp.lt.s32.totalorder %v5003, %v5004
    %v5006 = vsel %vm5005, %v5003, %v5004
    %vm5007 = vcmp.eq.s32.totalorder %v33, 0
    %v5008 = vsel %vm5007, %v4988, 0.0
    %vm5009 = vcmp.eq.s32.totalorder %v33, 8
    %v5010 = vcvt.s32.f32 %v5006
    %5012 = vset.pattern.permute.xlu0 0
    %5013 = vperm.xlu0 %5012, %v5010
    %v5014 = vpop.permute.xlu0 %5013
    %v5016 = vsel %vm5009, %v5014, %v5008
    %5017 = vset.pattern.permute.xlu0 0
    %5018 = vperm.xlu0 %5017, %v5006
    %v5019 = vpop.permute.xlu0 %5018
    %vm5020 = vcmp.eq.s32.totalorder %v33, %v5019
    %v5021 = vlaneseq
    %v5022 = vshrl.u32 %v5021, 7
    %v5023 = vsub.s32 %v33, %v5022
    %v5024 = vrot.slane %v4941, %v5023
    %v5025 = vlaneseq
    %v5026 = vshrl.u32 %v5025, 7
    %v5027 = vsub.s32 %v1553, %v5026
    %v5028 = vrot.slane %v4956, %v5027
    %v5029 = vsel %vm1558, %v5028, %v5024
    %v5030 = vsel %vm5020, %v5029, 0
    %vm5031 = vcmask 73728
    %v5032 = vsel %vm5031, %v5030, 0
    %v5033 = vand.u32 %v5032, 65535
    %v5034 = vshrl.u32 %v5032, 16
    %v5035 = vcvt.s32.f32 %v5033
    %v5036 = vcvt.s32.f32 %v5034
    %5037 = vadd.xlane.f32.xlu0 %v5035
    %v5038 = vpop.xlane.xlu0 %5037
    %5039 = vadd.xlane.f32.xlu0 %v5036
    %v5040 = vpop.xlane.xlu0 %5039
    %v5041 = vcvt.f32.s32 %v5038
    %v5042 = vcvt.f32.s32 %v5040
    %v5043 = vshll.u32 %v5042, 16
    %v5044 = vadd.s32 %v5043, %v5041
    %v5045 = vcvt.s32.f32 %v5044
    %v5046 = vsel %vm1289, %v5045, %v5016
    %vm5047 = vcmp.eq.s32.totalorder %v33, %v5044
    %v5048 = vlaneseq
    %v5049 = vshrl.u32 %v5048, 7
    %v5050 = vsub.s32 %v33, %v5049
    %v5051 = vrot.slane %v4440, %v5050
    %v5052 = vlaneseq
    %v5053 = vshrl.u32 %v5052, 7
    %v5054 = vsub.s32 %v1553, %v5053
    %v5055 = vrot.slane %v4455, %v5054
    %v5056 = vsel %vm1558, %v5055, %v5051
    %v5057 = vsel %vm5047, %v5056, 0
    %v5058 = vsel %vm5031, %v5057, 0
    %v5059 = vand.u32 %v5058, 65535
    %v5060 = vshrl.u32 %v5058, 16
    %v5061 = vcvt.s32.f32 %v5059
    %v5062 = vcvt.s32.f32 %v5060
    %5063 = vadd.xlane.f32.xlu0 %v5061
    %v5064 = vpop.xlane.xlu0 %5063
    %5065 = vadd.xlane.f32.xlu0 %v5062
    %v5066 = vpop.xlane.xlu0 %5065
    %v5067 = vcvt.f32.s32 %v5064
    %v5068 = vcvt.f32.s32 %v5066
    %v5069 = vshll.u32 %v5068, 16
    %v5070 = vadd.s32 %v5069, %v5067
    %vm5071 = vcmp.eq.s32.totalorder %v33, 6
    %v5072 = vcvt.s32.f32 %v5070
    %v5073 = vsel %vm5071, %v5072, %v5046
    %vm5074 = vcmp.eq.s32.totalorder %v33, %v5070
    %v5075 = vlaneseq
    %v5076 = vshrl.u32 %v5075, 7
    %v5077 = vsub.s32 %v33, %v5076
    %v5078 = vrot.slane %v3939, %v5077
    %v5079 = vlaneseq
    %v5080 = vshrl.u32 %v5079, 7
    %v5081 = vsub.s32 %v1553, %v5080
    %v5082 = vrot.slane %v3954, %v5081
    %v5083 = vsel %vm1558, %v5082, %v5078
    %v5084 = vsel %vm5074, %v5083, 0
    %v5085 = vsel %vm5031, %v5084, 0
    %v5086 = vand.u32 %v5085, 65535
    %v5087 = vshrl.u32 %v5085, 16
    %v5088 = vcvt.s32.f32 %v5086
    %v5089 = vcvt.s32.f32 %v5087
    %5090 = vadd.xlane.f32.xlu0 %v5088
    %v5091 = vpop.xlane.xlu0 %5090
    %5092 = vadd.xlane.f32.xlu0 %v5089
    %v5093 = vpop.xlane.xlu0 %5092
    %v5094 = vcvt.f32.s32 %v5091
    %v5095 = vcvt.f32.s32 %v5093
    %v5096 = vshll.u32 %v5095, 16
    %v5097 = vadd.s32 %v5096, %v5094
    %vm5098 = vcmp.eq.s32.totalorder %v33, 5
    %v5099 = vcvt.s32.f32 %v5097
    %v5100 = vsel %vm5098, %v5099, %v5073
    %vm5101 = vcmp.eq.s32.totalorder %v33, %v5097
    %v5102 = vlaneseq
    %v5103 = vshrl.u32 %v5102, 7
    %v5104 = vsub.s32 %v33, %v5103
    %v5105 = vrot.slane %v3438, %v5104
    %v5106 = vlaneseq
    %v5107 = vshrl.u32 %v5106, 7
    %v5108 = vsub.s32 %v1553, %v5107
    %v5109 = vrot.slane %v3453, %v5108
    %v5110 = vsel %vm1558, %v5109, %v5105
    %v5111 = vsel %vm5101, %v5110, 0
    %v5112 = vsel %vm5031, %v5111, 0
    %v5113 = vand.u32 %v5112, 65535
    %v5114 = vshrl.u32 %v5112, 16
    %v5115 = vcvt.s32.f32 %v5113
    %v5116 = vcvt.s32.f32 %v5114
    %5117 = vadd.xlane.f32.xlu0 %v5115
    %v5118 = vpop.xlane.xlu0 %5117
    %5119 = vadd.xlane.f32.xlu0 %v5116
    %v5120 = vpop.xlane.xlu0 %5119
    %v5121 = vcvt.f32.s32 %v5118
    %v5122 = vcvt.f32.s32 %v5120
    %v5123 = vshll.u32 %v5122, 16
    %v5124 = vadd.s32 %v5123, %v5121
    %vm5125 = vcmp.eq.s32.totalorder %v33, 4
    %v5126 = vcvt.s32.f32 %v5124
    %v5127 = vsel %vm5125, %v5126, %v5100
    %vm5128 = vcmp.eq.s32.totalorder %v33, %v5124
    %v5129 = vlaneseq
    %v5130 = vshrl.u32 %v5129, 7
    %v5131 = vsub.s32 %v33, %v5130
    %v5132 = vrot.slane %v2937, %v5131
    %v5133 = vlaneseq
    %v5134 = vshrl.u32 %v5133, 7
    %v5135 = vsub.s32 %v1553, %v5134
    %v5136 = vrot.slane %v2952, %v5135
    %v5137 = vsel %vm1558, %v5136, %v5132
    %v5138 = vsel %vm5128, %v5137, 0
    %v5139 = vsel %vm5031, %v5138, 0
    %v5140 = vand.u32 %v5139, 65535
    %v5141 = vshrl.u32 %v5139, 16
    %v5142 = vcvt.s32.f32 %v5140
    %v5143 = vcvt.s32.f32 %v5141
    %5144 = vadd.xlane.f32.xlu0 %v5142
    %v5145 = vpop.xlane.xlu0 %5144
    %5146 = vadd.xlane.f32.xlu0 %v5143
    %v5147 = vpop.xlane.xlu0 %5146
    %v5148 = vcvt.f32.s32 %v5145
    %v5149 = vcvt.f32.s32 %v5147
    %v5150 = vshll.u32 %v5149, 16
    %v5151 = vadd.s32 %v5150, %v5148
    %vm5152 = vcmp.eq.s32.totalorder %v33, 3
    %v5153 = vcvt.s32.f32 %v5151
    %v5154 = vsel %vm5152, %v5153, %v5127
    %vm5155 = vcmp.eq.s32.totalorder %v33, %v5151
    %v5156 = vlaneseq
    %v5157 = vshrl.u32 %v5156, 7
    %v5158 = vsub.s32 %v33, %v5157
    %v5159 = vrot.slane %v2436, %v5158
    %v5160 = vlaneseq
    %v5161 = vshrl.u32 %v5160, 7
    %v5162 = vsub.s32 %v1553, %v5161
    %v5163 = vrot.slane %v2451, %v5162
    %v5164 = vsel %vm1558, %v5163, %v5159
    %v5165 = vsel %vm5155, %v5164, 0
    %v5166 = vsel %vm5031, %v5165, 0
    %v5167 = vand.u32 %v5166, 65535
    %v5168 = vshrl.u32 %v5166, 16
    %v5169 = vcvt.s32.f32 %v5167
    %v5170 = vcvt.s32.f32 %v5168
    %5171 = vadd.xlane.f32.xlu0 %v5169
    %v5172 = vpop.xlane.xlu0 %5171
    %5173 = vadd.xlane.f32.xlu0 %v5170
    %v5174 = vpop.xlane.xlu0 %5173
    %v5175 = vcvt.f32.s32 %v5172
    %v5176 = vcvt.f32.s32 %v5174
    %v5177 = vshll.u32 %v5176, 16
    %v5178 = vadd.s32 %v5177, %v5175
    %vm5179 = vcmp.eq.s32.totalorder %v33, 2
    %v5180 = vcvt.s32.f32 %v5178
    %v5181 = vsel %vm5179, %v5180, %v5154
    %vm5182 = vcmp.eq.s32.totalorder %v33, %v5178
    %v5183 = vlaneseq
    %v5184 = vshrl.u32 %v5183, 7
    %v5185 = vsub.s32 %v33, %v5184
    %v5186 = vrot.slane %v1935, %v5185
    %v5187 = vlaneseq
    %v5188 = vshrl.u32 %v5187, 7
    %v5189 = vsub.s32 %v1553, %v5188
    %v5190 = vrot.slane %v1950, %v5189
    %v5191 = vsel %vm1558, %v5190, %v5186
    %v5192 = vsel %vm5182, %v5191, 0
    %v5193 = vsel %vm5031, %v5192, 0
    %v5194 = vand.u32 %v5193, 65535
    %v5195 = vshrl.u32 %v5193, 16
    %v5196 = vcvt.s32.f32 %v5194
    %v5197 = vcvt.s32.f32 %v5195
    %5198 = vadd.xlane.f32.xlu0 %v5196
    %v5199 = vpop.xlane.xlu0 %5198
    %5200 = vadd.xlane.f32.xlu0 %v5197
    %v5201 = vpop.xlane.xlu0 %5200
    %v5202 = vcvt.f32.s32 %v5199
    %v5203 = vcvt.f32.s32 %v5201
    %v5204 = vshll.u32 %v5203, 16
    %v5205 = vadd.s32 %v5204, %v5202
    %vm5206 = vcmp.eq.s32.totalorder %v33, 1
    %v5207 = vcvt.s32.f32 %v5205
    %v5208 = vsel %vm5206, %v5207, %v5181
    %5209 = vst [vmem:[%s4 + $0x8] sm:$0x1] %v5208
    // Predicated region
    $region22: #{bilstm_crf_forward.1} parent=1 // pred_check
      _
    $region23: #{bilstm_crf_forward.1} parent=1 // pred_check_branch
      %5211 = sbr.rel (0) target = $region25
    $region24: #{bilstm_crf_forward.1} parent=1 // pred_region
      _
    $region25: #{bilstm_crf_forward.1} parent=1 // pred_fallthru
      _
    // Predicated region
    $region26: #{bilstm_crf_forward.1} parent=1 // pred_check
      _
    $region27: #{bilstm_crf_forward.1} parent=1 // pred_check_branch
      %5213 = sbr.rel (0) target = $region29
    $region28: #{bilstm_crf_forward.1} parent=1 // pred_region
      _
    $region29: #{bilstm_crf_forward.1} parent=1 // pred_fallthru
      _
    %5214 = vsyncpa [#allocation3], 1

</llo_original>
